<compile_context>
chip_gen: v7x
topology: tpu7x:2x2x1
jax: 0.10.0
libtpu: 0.0.40
codegen_flags: <defaults>
</compile_context>

<pallas_src>
import functools

import jax
import jax.numpy as jnp
from jax.experimental import pallas as pl
from jax.experimental.pallas import tpu as pltpu

BN_EPS = 1e-5


# ----------------------------------------------------------------------------
# Small host-side helpers (run once, outside the kernels).
# ----------------------------------------------------------------------------
def _interp_matrix(n_in, n_out):
    """1-D bilinear (align_corners=True) interpolation matrix, (n_out, n_in)."""
    if n_out == 1:  # guard divide-by-zero when a single output row/col is produced
        src = jnp.zeros((1,), jnp.float32)
    else:
        src = jnp.arange(n_out, dtype=jnp.float32) * (n_in - 1) / (n_out - 1)
    i0 = jnp.clip(jnp.floor(src).astype(jnp.int32), 0, n_in - 1)
    i1 = jnp.clip(i0 + 1, 0, n_in - 1)
    frac = src - i0.astype(jnp.float32)
    rows = jnp.arange(n_out)
    a = jnp.zeros((n_out, n_in), jnp.float32)
    a = a.at[rows, i0].add(1.0 - frac)
    a = a.at[rows, i1].add(frac)
    return a


def _band3x3(w, ci, co, wout):
    """(3,3,ci,co) conv weights -> 3 banded (wout*ci, wout*co) matrices.

    Output column wo uses input column wi = wo + kx - 1 (padding=1); taps that
    fall outside [0, wout) are simply absent, which implements the W zero pad.
    Lane-dense layout tuned for small channel counts.
    TODO(synk): for C >= 128 switch back to per-tap (..., C) channel contraction.
    """
    mats = []
    for ky in range(3):
        m = jnp.zeros((wout * ci, wout * co), jnp.float32)
        for kx in range(3):
            sel = jnp.eye(wout, wout, k=1 - kx, dtype=jnp.float32)
            m = m + jnp.kron(sel, w[ky, kx].astype(jnp.float32))
        mats.append(m)
    return jnp.stack(mats)


def _bn_affine_flat(s_flat, ss_flat, count, gamma, beta, wout, cout):
    """Fold BatchNorm (batch stats, biased var) into a per-channel affine,
    tiled to the flat W*C lane layout."""
    s = s_flat.reshape(wout, cout).sum(axis=0)
    ss = ss_flat.reshape(wout, cout).sum(axis=0)
    mean = s / count
    var = jnp.maximum(ss / count - mean * mean, 0.0)
    scale = gamma.astype(jnp.float32) * jax.lax.rsqrt(var + BN_EPS)
    shift = beta.astype(jnp.float32) - mean * scale
    return jnp.tile(scale, wout)[None, :], jnp.tile(shift, wout)[None, :]


# ----------------------------------------------------------------------------
# Pallas kernels. All activations use a 2-D (rows, W*C) lane-dense layout.
# ----------------------------------------------------------------------------
def _k1_upsample_conv1_shortcut(ah_ref, x_ref, awbig_ref, w1big_ref, wsbig_ref,
                                b1_ref, bs_ref, y1_ref, s_ref, st_ref):
    th = s_ref.shape[0]
    cdt = awbig_ref.dtype  # MXU operand dtype (f32, or bf16 on v6e/v7x)

    # Bilinear upsample = two plain 2-D MXU matmuls (no batched broadcasts,
    # no NHWC reshapes). ah carries a 2-row halo; out-of-range rows are zero.
    xh = jnp.dot(ah_ref[...], x_ref[...], preferred_element_type=jnp.float32)
    xu = jnp.dot(xh.astype(cdt), awbig_ref[...],
                 preferred_element_type=jnp.float32)            # (TH+4, Wout*Cin)
    xu = xu.astype(cdt)

    # conv3x3 (pad=1) as 3 banded matmuls; W zero-pad lives inside the banded
    # weights, H zero-pad comes from the zero halo rows of ah -> no padded
    # staging buffer and no 9 unaligned-tap slices.
    y1 = (jnp.dot(xu[0:th + 2], w1big_ref[0], preferred_element_type=jnp.float32)
          + jnp.dot(xu[1:th + 3], w1big_ref[1], preferred_element_type=jnp.float32)
          + jnp.dot(xu[2:th + 4], w1big_ref[2], preferred_element_type=jnp.float32)
          + b1_ref[...])                                         # (TH+2, Wout*Cout)

    # Shortcut 1x1 conv on the owned rows only.
    s = (jnp.dot(xu[2:2 + th], wsbig_ref[...],
                 preferred_element_type=jnp.float32) + bs_ref[...])

    y1_ref[...] = y1          # stored with a 1-row halo for pass 2's conv
    s_ref[...] = s

    # Pass-1 BatchNorm partials (owned rows only -> no double counting).
    y1o = y1[1:th + 1]
    st_ref[...] = jnp.concatenate(
        [jnp.sum(y1o, axis=0, keepdims=True),
         jnp.sum(y1o * y1o, axis=0, keepdims=True),
         jnp.sum(s, axis=0, keepdims=True),
         jnp.sum(s * s, axis=0, keepdims=True)], axis=0)


def _k2_bn1_relu_conv2(y1_ref, aff1_ref, w2big_ref, b2_ref, y2_ref, st_ref):
    th = y2_ref.shape[0]
    t = pl.program_id(1)
    nt = pl.num_programs(1)
    cdt = w2big_ref.dtype

    # Folded BN1 (per-channel affine) + ReLU in a single multiply-add.
    aff = aff1_ref[...]
    a1 = jnp.maximum(y1_ref[...] * aff[0:1] + aff[1:2], 0.0)     # (TH+2, Wout*Cout)

    # Halo rows outside [0, Hout) are conv2's zero padding (must be zero
    # *after* BN+ReLU).
    rows = jax.lax.broadcasted_iota(jnp.int32, a1.shape, 0)
    pad = ((rows == 0) & (t == 0)) | ((rows == th + 1) & (t == nt - 1))
    a1 = jnp.where(pad, 0.0, a1).astype(cdt)

    y2 = (jnp.dot(a1[0:th], w2big_ref[0], preferred_element_type=jnp.float32)
          + jnp.dot(a1[1:th + 1], w2big_ref[1], preferred_element_type=jnp.float32)
          + jnp.dot(a1[2:th + 2], w2big_ref[2], preferred_element_type=jnp.float32)
          + b2_ref[...])

    y2_ref[...] = y2
    st_ref[...] = jnp.concatenate(
        [jnp.sum(y2, axis=0, keepdims=True),
         jnp.sum(y2 * y2, axis=0, keepdims=True)], axis=0)


def _k3_bn2_bns_add_relu(y2_ref, s_ref, aff_ref, o_ref):
    aff = aff_ref[...]    # rows: [scale2, shift2, scale_s, shift_s]
    o_ref[...] = jnp.maximum(
        y2_ref[...] * aff[0:1] + aff[1:2] + s_ref[...] * aff[2:3] + aff[3:4], 0.0)


# ----------------------------------------------------------------------------
# Wrapper: NCHW in / NCHW out, three tiled pallas_calls + tiny JAX glue.
# ----------------------------------------------------------------------------
def upblock_forward(x_nchw, params, scale, *, tile_h=8, mxu_dtype=jnp.float32):
    n, cin, hin, win = x_nchw.shape
    cout = params['w1'].shape[-1]
    hout, wout = hin * scale, win * scale
    wcin, wcout = wout * cin, wout * cout

    th = tile_h if hout % tile_h == 0 else hout      # row-tile height
    nt = hout // th
    grid = (n, nt)

    # NCHW -> (N, Hin, Win*Cin) lane-dense layout.
    # TODO(synk): the NCHW<->NHWC transposes at entry/exit are HBM round trips
    # kept only for PyTorch API parity; drop them if adjacent ops speak NHWC.
    x = jnp.transpose(x_nchw, (0, 2, 3, 1)).astype(jnp.float32)
    x = x.reshape(n, hin, win * cin).astype(mxu_dtype)

    # align_corners=True interpolation matrices.
    ah = _interp_matrix(hin, hout)                   # (Hout, Hin)
    aw = _interp_matrix(win, wout)                   # (Wout, Win)

    # Row-tiled H interp with a 2-row halo; halo rows outside [0,Hout) are zero
    # and double as conv1's H zero padding.
    ah_pad = jnp.zeros((hout + 4, hin), jnp.float32).at[2:hout + 2].set(ah)
    ah_tiles = jnp.stack([ah_pad[t * th: t * th + th + 4] for t in range(nt)])
    ah_tiles = ah_tiles.astype(mxu_dtype)

    # Lane-dense "kron" weights (lane axis = W*C).
    awbig = jnp.kron(aw.T, jnp.eye(cin, dtype=jnp.float32)).astype(mxu_dtype)
    w1big = _band3x3(params['w1'], cin, cout, wout).astype(mxu_dtype)
    w2big = _band3x3(params['w2'], cout, cout, wout).astype(mxu_dtype)
    wsbig = jnp.kron(jnp.eye(wout, dtype=jnp.float32),
                     params['ws'].astype(jnp.float32)).astype(mxu_dtype)

    b1f = jnp.tile(params['b1'].astype(jnp.float32), wout)[None, :]
    b2f = jnp.tile(params['b2'].astype(jnp.float32), wout)[None, :]
    bsf = jnp.tile(params['bs'].astype(jnp.float32), wout)[None, :]

    cparams = pltpu.CompilerParams(
        dimension_semantics=("parallel", "parallel"),   # megacore-splittable grid
        vmem_limit_bytes=32 * 1024 * 1024)              # per-tile footprint is ~2 MiB
    itemsize = jnp.dtype(mxu_dtype).itemsize

    # ---- pass 1: upsample + conv1 + shortcut conv + BN partial sums ---------
    fl1 = 2 * n * nt * ((th + 4) * (hin * win * cin + win * cin * wcin)
                        + (3 * (th + 2) + th) * wcin * wcout)
    by1 = ((x.size + ah_tiles.size + awbig.size + w1big.size + wsbig.size) * itemsize
           + 4 * (n * nt * (th + 2) * wcout + n * hout * wcout + n * nt * 4 * wcout))
    y1h, s_flat, st1 = pl.pallas_call(
        _k1_upsample_conv1_shortcut,
        grid=grid,
        in_specs=[
            pl.BlockSpec((None, th + 4, hin), lambda b, t: (t, 0, 0)),
            pl.BlockSpec((None, hin, win * cin), lambda b, t: (b, 0, 0)),
            pl.BlockSpec((win * cin, wcin), lambda b, t: (0, 0)),
            pl.BlockSpec((3, wcin, wcout), lambda b, t: (0, 0, 0)),
            pl.BlockSpec((wcin, wcout), lambda b, t: (0, 0)),
            pl.BlockSpec((1, wcout), lambda b, t: (0, 0)),
            pl.BlockSpec((1, wcout), lambda b, t: (0, 0)),
        ],
        out_specs=[
            pl.BlockSpec((None, None, th + 2, wcout), lambda b, t: (b, t, 0, 0)),
            pl.BlockSpec((None, th, wcout), lambda b, t: (b, t, 0)),
            pl.BlockSpec((None, None, 4, wcout), lambda b, t: (b, t, 0, 0)),
        ],
        out_shape=[
            jax.ShapeDtypeStruct((n, nt, th + 2, wcout), jnp.float32),
            jax.ShapeDtypeStruct((n, hout, wcout), jnp.float32),
            jax.ShapeDtypeStruct((n, nt, 4, wcout), jnp.float32),
        ],
        compiler_params=cparams,
        cost_estimate=pl.CostEstimate(flops=int(fl1), transcendentals=0,
                                      bytes_accessed=int(by1)),
    )(ah_tiles, x, awbig, w1big, wsbig, b1f, bsf)

    # Finalize BN1 / BN_shortcut stats -> folded per-channel affines (tiny).
    cnt = float(n * hout * wout)
    st1 = st1.sum(axis=(0, 1))                                   # (4, Wout*Cout)
    sc1, sh1 = _bn_affine_flat(st1[0], st1[1], cnt, params['g1'], params['be1'], wout, cout)
    scs, shs = _bn_affine_flat(st1[2], st1[3], cnt, params['gs'], params['bes'], wout, cout)
    aff1 = jnp.concatenate([sc1, sh1], axis=0)                   # (2, Wout*Cout)

    # ---- pass 2: BN1 + ReLU + conv2 + BN2 partial sums -----------------------
    fl2 = 2 * n * nt * 3 * th * wcout * wcout
    by2 = (w2big.size * itemsize
           + 4 * (y1h.size + n * hout * wcout + n * nt * 2 * wcout))
    y2, st2 = pl.pallas_call(
        _k2_bn1_relu_conv2,
        grid=grid,
        in_specs=[
            pl.BlockSpec((None, None, th + 2, wcout), lambda b, t: (b, t, 0, 0)),
            pl.BlockSpec((2, wcout), lambda b, t: (0, 0)),
            pl.BlockSpec((3, wcout, wcout), lambda b, t: (0, 0, 0)),
            pl.BlockSpec((1, wcout), lambda b, t: (0, 0)),
        ],
        out_specs=[
            pl.BlockSpec((None, th, wcout), lambda b, t: (b, t, 0)),
            pl.BlockSpec((None, None, 2, wcout), lambda b, t: (b, t, 0, 0)),
        ],
        out_shape=[
            jax.ShapeDtypeStruct((n, hout, wcout), jnp.float32),
            jax.ShapeDtypeStruct((n, nt, 2, wcout), jnp.float32),
        ],
        compiler_params=cparams,
        cost_estimate=pl.CostEstimate(flops=int(fl2), transcendentals=0,
                                      bytes_accessed=int(by2)),
    )(y1h, aff1, w2big, b2f)

    st2 = st2.sum(axis=(0, 1))
    sc2, sh2 = _bn_affine_flat(st2[0], st2[1], cnt, params['g2'], params['be2'], wout, cout)
    aff2 = jnp.concatenate([sc2, sh2, scs, shs], axis=0)         # (4, Wout*Cout)

    # ---- pass 3: BN2 + BN_shortcut + residual add + ReLU ---------------------
    by3 = 4 * (3 * n * hout * wcout + 4 * wcout)
    out_flat = pl.pallas_call(
        _k3_bn2_bns_add_relu,
        grid=grid,
        in_specs=[
            pl.BlockSpec((None, th, wcout), lambda b, t: (b, t, 0)),
            pl.BlockSpec((None, th, wcout), lambda b, t: (b, t, 0)),
            pl.BlockSpec((4, wcout), lambda b, t: (0, 0)),
        ],
        out_specs=pl.BlockSpec((None, th, wcout), lambda b, t: (b, t, 0)),
        out_shape=jax.ShapeDtypeStruct((n, hout, wcout), jnp.float32),
        compiler_params=cparams,
        cost_estimate=pl.CostEstimate(flops=int(4 * n * hout * wcout),
                                      transcendentals=0, bytes_accessed=int(by3)),
    )(y2, s_flat, aff2)

    out = out_flat.reshape(n, hout, wout, cout)
    return jnp.transpose(out, (0, 3, 1, 2))                      # NHWC -> NCHW


# ----------------------------------------------------------------------------
# Pure-JAX reference with identical semantics (for the correctness check).
# ----------------------------------------------------------------------------
def reference_forward(x_nchw, params, scale):
    x = jnp.transpose(x_nchw, (0, 2, 3, 1)).astype(jnp.float32)
    n, hin, win, cin = x.shape
    ah = _interp_matrix(hin, hin * scale)
    aw = _interp_matrix(win, win * scale)
    xu = jnp.einsum('oh,nhwc->nowc', ah, x)
    xu = jnp.einsum('pw,nowc->nopc', aw, xu)

    def conv3(inp, w, b):
        return jax.lax.conv_general_dilated(
            inp, w, window_strides=(1, 1), padding='SAME',
            dimension_numbers=('NHWC', 'HWIO', 'NHWC')) + b.reshape(1, 1, 1, -1)

    def bn(t, g, b):
        m = jnp.mean(t, axis=(0, 1, 2), keepdims=True)
        v = jnp.mean((t - m) ** 2, axis=(0, 1, 2), keepdims=True)
        return (t - m) / jnp.sqrt(v + BN_EPS) * g.reshape(1, 1, 1, -1) + b.reshape(1, 1, 1, -1)

    y = conv3(xu, params['w1'], params['b1'])
    y = jnp.maximum(bn(y, params['g1'], params['be1']), 0.0)
    y = conv3(y, params['w2'], params['b2'])
    y = bn(y, params['g2'], params['be2'])
    s = jnp.einsum('nhwc,co->nhwo', xu, params['ws']) + params['bs'].reshape(1, 1, 1, -1)
    s = bn(s, params['gs'], params['bes'])
    out = jnp.maximum(y + s, 0.0)
    return jnp.transpose(out, (0, 3, 1, 2))


if __name__ == "__main__":
    N, IN_C, OUT_C, H, W, SCALE = 2, 4, 8, 16, 16, 2

    key = jax.random.PRNGKey(0)
    ks = jax.random.split(key, 13)
    # Deterministic synthetic parameters (HWIO conv weights == PyTorch OIHW transposed).
    params = {
        'w1':  0.1 * jax.random.normal(ks[0],  (3, 3, IN_C, OUT_C), jnp.float32),
        'b1':  0.1 * jax.random.normal(ks[1],  (OUT_C,), jnp.float32),
        'g1':  1.0 + 0.1 * jax.random.normal(ks[2], (OUT_C,), jnp.float32),
        'be1': 0.1 * jax.random.normal(ks[3],  (OUT_C,), jnp.float32),
        'w2':  0.1 * jax.random.normal(ks[4],  (3, 3, OUT_C, OUT_C), jnp.float32),
        'b2':  0.1 * jax.random.normal(ks[5],  (OUT_C,), jnp.float32),
        'g2':  1.0 + 0.1 * jax.random.normal(ks[6], (OUT_C,), jnp.float32),
        'be2': 0.1 * jax.random.normal(ks[7],  (OUT_C,), jnp.float32),
        'ws':  0.1 * jax.random.normal(ks[8],  (IN_C, OUT_C), jnp.float32),
        'bs':  0.1 * jax.random.normal(ks[9],  (OUT_C,), jnp.float32),
        'gs':  1.0 + 0.1 * jax.random.normal(ks[10], (OUT_C,), jnp.float32),
        'bes': 0.1 * jax.random.normal(ks[11], (OUT_C,), jnp.float32),
    }
    x = jax.random.normal(ks[12], (N, IN_C, H, W), jnp.float32)   # NCHW, like PyTorch

    ref = jax.block_until_ready(reference_forward(x, params, SCALE))

    # Default f32 MXU path (v5e-friendly): strict check.
    fwd_f32 = jax.jit(functools.partial(upblock_forward, scale=SCALE))
    out = jax.block_until_ready(fwd_f32(x, params))
    assert out.shape == (N, OUT_C, H * SCALE, W * SCALE), out.shape
    assert bool(jnp.allclose(out, ref, rtol=2e-2, atol=2e-2)), \
        float(jnp.max(jnp.abs(out - ref)))

    # bf16 MXU operands (recommended on v6e/v7x: ~2x MXU rate, half the weight
    # DMA); f32 accumulation + f32 BN math, checked at a looser tolerance.
    fwd_bf16 = jax.jit(functools.partial(upblock_forward, scale=SCALE,
                                         mxu_dtype=jnp.bfloat16))
    out16 = jax.block_until_ready(fwd_bf16(x, params))
    assert bool(jnp.allclose(out16, ref, rtol=1e-1, atol=1e-1)), \
        float(jnp.max(jnp.abs(out16 - ref)))

    print("KERNEL_OK")
</pallas_src>

<mosaic_0001>
module attributes {stable_mosaic.version = 11 : i64} {
  func.func private @main(%arg0: i32) attributes {dimension_semantics = [#tpu.dimension_semantics<core_parallel>], iteration_bounds = array<i64: 2>, tpu.core_type = #tpu.core_type<sc_scalar_subcore>, window_params = []} {
    return
  }
}

module attributes {stable_mosaic.version = 11 : i64} {
  func.func private @main(%arg0: i32) attributes {dimension_semantics = [#tpu.dimension_semantics<core_parallel>], iteration_bounds = array<i64: 2>, tpu.core_type = #tpu.core_type<sc_scalar_subcore>, window_params = []} {
    return
  }
}

module attributes {stable_mosaic.version = 11 : i64} {
  func.func @_k1_upsample_conv1_shortcut(%arg0: i32, %arg1: i32, %arg2: memref<1x12x16xf32, #tpu.memory_space<vmem>>, %arg3: memref<1x16x64xf32, #tpu.memory_space<vmem>>, %arg4: memref<64x128xf32, #tpu.memory_space<vmem>>, %arg5: memref<3x128x256xf32, #tpu.memory_space<vmem>>, %arg6: memref<128x256xf32, #tpu.memory_space<vmem>>, %arg7: memref<1x256xf32, #tpu.memory_space<vmem>>, %arg8: memref<1x256xf32, #tpu.memory_space<vmem>>, %arg9: memref<1x1x10x256xf32, #tpu.memory_space<vmem>>, %arg10: memref<1x8x256xf32, #tpu.memory_space<vmem>>, %arg11: memref<1x1x4x256xf32, #tpu.memory_space<vmem>>) attributes {dimension_semantics = [#tpu.dimension_semantics<parallel>, #tpu.dimension_semantics<parallel>], iteration_bounds = array<i64: 2, 4>, scalar_prefetch = 0 : i64, scratch_operands = 0 : i64, tpu.core_type = #tpu.core_type<tc>, window_params = [{transform_indices = @transform_0, window_bounds = array<i64: 1, 12, 16>}, {transform_indices = @transform_1, window_bounds = array<i64: 1, 16, 64>}, {pipeline_mode = #tpu.pipeline_mode<synchronous>, transform_indices = @transform_2, window_bounds = array<i64: 64, 128>}, {pipeline_mode = #tpu.pipeline_mode<synchronous>, transform_indices = @transform_3, window_bounds = array<i64: 3, 128, 256>}, {pipeline_mode = #tpu.pipeline_mode<synchronous>, transform_indices = @transform_4, window_bounds = array<i64: 128, 256>}, {pipeline_mode = #tpu.pipeline_mode<synchronous>, transform_indices = @transform_5, window_bounds = array<i64: 1, 256>}, {pipeline_mode = #tpu.pipeline_mode<synchronous>, transform_indices = @transform_6, window_bounds = array<i64: 1, 256>}, {transform_indices = @transform_7, window_bounds = array<i64: 1, 1, 10, 256>}, {transform_indices = @transform_8, window_bounds = array<i64: 1, 8, 256>}, {transform_indices = @transform_9, window_bounds = array<i64: 1, 1, 4, 256>}]} {
    %c0 = arith.constant 0 : index
    %c0_0 = arith.constant 0 : index
    %c0_1 = arith.constant 0 : index
    %0 = vector.load %arg2[%c0, %c0_0, %c0_1] : memref<1x12x16xf32, #tpu.memory_space<vmem>>, vector<1x12x16xf32>
    %1 = vector.shape_cast %0 : vector<1x12x16xf32> to vector<12x16xf32>
    %c0_2 = arith.constant 0 : index
    %c0_3 = arith.constant 0 : index
    %c0_4 = arith.constant 0 : index
    %2 = vector.load %arg3[%c0_2, %c0_3, %c0_4] : memref<1x16x64xf32, #tpu.memory_space<vmem>>, vector<1x16x64xf32>
    %3 = vector.shape_cast %2 : vector<1x16x64xf32> to vector<16x64xf32>
    %cst = arith.constant dense<0.000000e+00> : vector<12x64xf32>
    %4 = tpu.matmul %1, %3, %cst {dimension_numbers = #tpu.dot_dimension_numbers<[1], [0], [0], [1], [0, 0, 1, 1], [], []>} : vector<12x16xf32>, vector<16x64xf32>, vector<12x64xf32> -> vector<12x64xf32>
    %c0_5 = arith.constant 0 : index
    %c0_6 = arith.constant 0 : index
    %5 = vector.load %arg4[%c0_5, %c0_6] : memref<64x128xf32, #tpu.memory_space<vmem>>, vector<64x128xf32>
    %cst_7 = arith.constant dense<0.000000e+00> : vector<12x128xf32>
    %6 = tpu.matmul %4, %5, %cst_7 {dimension_numbers = #tpu.dot_dimension_numbers<[1], [0], [0], [1], [0, 0, 1, 1], [], []>} : vector<12x64xf32>, vector<64x128xf32>, vector<12x128xf32> -> vector<12x128xf32>
    %7 = vector.extract_strided_slice %6 {offsets = [0, 0], sizes = [10, 128], strides = [1, 1]} : vector<12x128xf32> to vector<10x128xf32>
    %c0_8 = arith.constant 0 : index
    %c0_9 = arith.constant 0 : index
    %c0_10 = arith.constant 0 : index
    %8 = vector.load %arg5[%c0_8, %c0_9, %c0_10] : memref<3x128x256xf32, #tpu.memory_space<vmem>>, vector<1x128x256xf32>
    %9 = vector.shape_cast %8 : vector<1x128x256xf32> to vector<128x256xf32>
    %cst_11 = arith.constant dense<0.000000e+00> : vector<10x256xf32>
    %10 = tpu.matmul %7, %9, %cst_11 {dimension_numbers = #tpu.dot_dimension_numbers<[1], [0], [0], [1], [0, 0, 1, 1], [], []>} : vector<10x128xf32>, vector<128x256xf32>, vector<10x256xf32> -> vector<10x256xf32>
    %11 = vector.extract_strided_slice %6 {offsets = [1, 0], sizes = [10, 128], strides = [1, 1]} : vector<12x128xf32> to vector<10x128xf32>
    %c1 = arith.constant 1 : index
    %c0_12 = arith.constant 0 : index
    %c0_13 = arith.constant 0 : index
    %12 = vector.load %arg5[%c1, %c0_12, %c0_13] : memref<3x128x256xf32, #tpu.memory_space<vmem>>, vector<1x128x256xf32>
    %13 = vector.shape_cast %12 : vector<1x128x256xf32> to vector<128x256xf32>
    %cst_14 = arith.constant dense<0.000000e+00> : vector<10x256xf32>
    %14 = tpu.matmul %11, %13, %cst_14 {dimension_numbers = #tpu.dot_dimension_numbers<[1], [0], [0], [1], [0, 0, 1, 1], [], []>} : vector<10x128xf32>, vector<128x256xf32>, vector<10x256xf32> -> vector<10x256xf32>
    %15 = arith.addf %10, %14 : vector<10x256xf32>
    %16 = vector.extract_strided_slice %6 {offsets = [2, 0], sizes = [10, 128], strides = [1, 1]} : vector<12x128xf32> to vector<10x128xf32>
    %c2 = arith.constant 2 : index
    %c0_15 = arith.constant 0 : index
    %c0_16 = arith.constant 0 : index
    %17 = vector.load %arg5[%c2, %c0_15, %c0_16] : memref<3x128x256xf32, #tpu.memory_space<vmem>>, vector<1x128x256xf32>
    %18 = vector.shape_cast %17 : vector<1x128x256xf32> to vector<128x256xf32>
    %cst_17 = arith.constant dense<0.000000e+00> : vector<10x256xf32>
    %19 = tpu.matmul %16, %18, %cst_17 {dimension_numbers = #tpu.dot_dimension_numbers<[1], [0], [0], [1], [0, 0, 1, 1], [], []>} : vector<10x128xf32>, vector<128x256xf32>, vector<10x256xf32> -> vector<10x256xf32>
    %20 = arith.addf %15, %19 : vector<10x256xf32>
    %c0_18 = arith.constant 0 : index
    %c0_19 = arith.constant 0 : index
    %21 = vector.load %arg7[%c0_18, %c0_19] : memref<1x256xf32, #tpu.memory_space<vmem>>, vector<1x256xf32>
    %22 = vector.broadcast %21 : vector<1x256xf32> to vector<10x256xf32>
    %23 = arith.addf %20, %22 : vector<10x256xf32>
    %24 = vector.extract_strided_slice %6 {offsets = [2, 0], sizes = [8, 128], strides = [1, 1]} : vector<12x128xf32> to vector<8x128xf32>
    %c0_20 = arith.constant 0 : index
    %c0_21 = arith.constant 0 : index
    %25 = vector.load %arg6[%c0_20, %c0_21] : memref<128x256xf32, #tpu.memory_space<vmem>>, vector<128x256xf32>
    %cst_22 = arith.constant dense<0.000000e+00> : vector<8x256xf32>
    %26 = tpu.matmul %24, %25, %cst_22 {dimension_numbers = #tpu.dot_dimension_numbers<[1], [0], [0], [1], [0, 0, 1, 1], [], []>} : vector<8x128xf32>, vector<128x256xf32>, vector<8x256xf32> -> vector<8x256xf32>
    %c0_23 = arith.constant 0 : index
    %c0_24 = arith.constant 0 : index
    %27 = vector.load %arg8[%c0_23, %c0_24] : memref<1x256xf32, #tpu.memory_space<vmem>>, vector<1x256xf32>
    %28 = vector.broadcast %27 : vector<1x256xf32> to vector<8x256xf32>
    %29 = arith.addf %26, %28 : vector<8x256xf32>
    %c0_25 = arith.constant 0 : index
    %c0_26 = arith.constant 0 : index
    %c0_27 = arith.constant 0 : index
    %c0_28 = arith.constant 0 : index
    %30 = vector.load %arg9[%c0_25, %c0_26, %c0_27, %c0_28] : memref<1x1x10x256xf32, #tpu.memory_space<vmem>>, vector<1x1x10x256xf32>
    %31 = vector.shape_cast %30 : vector<1x1x10x256xf32> to vector<10x256xf32>
    %32 = vector.shape_cast %23 : vector<10x256xf32> to vector<1x1x10x256xf32>
    tpu.vector_store %arg9[%c0_25, %c0_26, %c0_27, %c0_28], %32 {strides = array<i32>} : memref<1x1x10x256xf32, #tpu.memory_space<vmem>>, vector<1x1x10x256xf32>,
    %c0_29 = arith.constant 0 : index
    %c0_30 = arith.constant 0 : index
    %c0_31 = arith.constant 0 : index
    %33 = vector.load %arg10[%c0_29, %c0_30, %c0_31] : memref<1x8x256xf32, #tpu.memory_space<vmem>>, vector<1x8x256xf32>
    %34 = vector.shape_cast %33 : vector<1x8x256xf32> to vector<8x256xf32>
    %35 = vector.shape_cast %29 : vector<8x256xf32> to vector<1x8x256xf32>
    tpu.vector_store %arg10[%c0_29, %c0_30, %c0_31], %35 {strides = array<i32>} : memref<1x8x256xf32, #tpu.memory_space<vmem>>, vector<1x8x256xf32>,
    %36 = vector.extract_strided_slice %23 {offsets = [1, 0], sizes = [8, 256], strides = [1, 1]} : vector<10x256xf32> to vector<8x256xf32>
    %cst_32 = arith.constant dense<0.000000e+00> : vector<256xf32>
    %37 = vector.multi_reduction <add>, %36, %cst_32 [0] : vector<8x256xf32> to vector<256xf32>
    %38 = vector.shape_cast %37 : vector<256xf32> to vector<1x256xf32>
    %39 = arith.mulf %36, %36 : vector<8x256xf32>
    %cst_33 = arith.constant dense<0.000000e+00> : vector<256xf32>
    %40 = vector.multi_reduction <add>, %39, %cst_33 [0] : vector<8x256xf32> to vector<256xf32>
    %41 = vector.shape_cast %40 : vector<256xf32> to vector<1x256xf32>
    %cst_34 = arith.constant dense<0.000000e+00> : vector<256xf32>
    %42 = vector.multi_reduction <add>, %29, %cst_34 [0] : vector<8x256xf32> to vector<256xf32>
    %43 = vector.shape_cast %42 : vector<256xf32> to vector<1x256xf32>
    %44 = arith.mulf %29, %29 : vector<8x256xf32>
    %cst_35 = arith.constant dense<0.000000e+00> : vector<256xf32>
    %45 = vector.multi_reduction <add>, %44, %cst_35 [0] : vector<8x256xf32> to vector<256xf32>
    %46 = vector.shape_cast %45 : vector<256xf32> to vector<1x256xf32>
    %47 = tpu.concatenate %38, %41, %43, %46 in 0 : vector<1x256xf32>, vector<1x256xf32>, vector<1x256xf32>, vector<1x256xf32> -> vector<4x256xf32>
    %c0_36 = arith.constant 0 : index
    %c0_37 = arith.constant 0 : index
    %c0_38 = arith.constant 0 : index
    %c0_39 = arith.constant 0 : index
    %48 = vector.load %arg11[%c0_36, %c0_37, %c0_38, %c0_39] : memref<1x1x4x256xf32, #tpu.memory_space<vmem>>, vector<1x1x4x256xf32>
    %49 = vector.shape_cast %48 : vector<1x1x4x256xf32> to vector<4x256xf32>
    %50 = vector.shape_cast %47 : vector<4x256xf32> to vector<1x1x4x256xf32>
    tpu.vector_store %arg11[%c0_36, %c0_37, %c0_38, %c0_39], %50 {strides = array<i32>} : memref<1x1x4x256xf32, #tpu.memory_space<vmem>>, vector<1x1x4x256xf32>,
    return
  }
  func.func @transform_0(%arg0: i32, %arg1: i32) -> (i32, i32, i32) {
    %c0_i32 = arith.constant 0 : i32
    %c0_i32_0 = arith.constant 0 : i32
    %c0_i32_1 = arith.constant 0 : i32
    return %arg1, %c0_i32, %c0_i32_0 : i32, i32, i32
  }
  func.func @transform_1(%arg0: i32, %arg1: i32) -> (i32, i32, i32) {
    %c0_i32 = arith.constant 0 : i32
    %c0_i32_0 = arith.constant 0 : i32
    %c0_i32_1 = arith.constant 0 : i32
    return %arg0, %c0_i32, %c0_i32_0 : i32, i32, i32
  }
  func.func @transform_2(%arg0: i32, %arg1: i32) -> (i32, i32) {
    %c0_i32 = arith.constant 0 : i32
    %c0_i32_0 = arith.constant 0 : i32
    %c0_i32_1 = arith.constant 0 : i32
    return %c0_i32, %c0_i32_0 : i32, i32
  }
  func.func @transform_3(%arg0: i32, %arg1: i32) -> (i32, i32, i32) {
    %c0_i32 = arith.constant 0 : i32
    %c0_i32_0 = arith.constant 0 : i32
    %c0_i32_1 = arith.constant 0 : i32
    %c0_i32_2 = arith.constant 0 : i32
    return %c0_i32, %c0_i32_0, %c0_i32_1 : i32, i32, i32
  }
  func.func @transform_4(%arg0: i32, %arg1: i32) -> (i32, i32) {
    %c0_i32 = arith.constant 0 : i32
    %c0_i32_0 = arith.constant 0 : i32
    %c0_i32_1 = arith.constant 0 : i32
    return %c0_i32, %c0_i32_0 : i32, i32
  }
  func.func @transform_5(%arg0: i32, %arg1: i32) -> (i32, i32) {
    %c0_i32 = arith.constant 0 : i32
    %c0_i32_0 = arith.constant 0 : i32
    %c0_i32_1 = arith.constant 0 : i32
    return %c0_i32, %c0_i32_0 : i32, i32
  }
  func.func @transform_6(%arg0: i32, %arg1: i32) -> (i32, i32) {
    %c0_i32 = arith.constant 0 : i32
    %c0_i32_0 = arith.constant 0 : i32
    %c0_i32_1 = arith.constant 0 : i32
    return %c0_i32, %c0_i32_0 : i32, i32
  }
  func.func @transform_7(%arg0: i32, %arg1: i32) -> (i32, i32, i32, i32) {
    %c0_i32 = arith.constant 0 : i32
    %c0_i32_0 = arith.constant 0 : i32
    %c0_i32_1 = arith.constant 0 : i32
    return %arg0, %arg1, %c0_i32, %c0_i32_0 : i32, i32, i32, i32
  }
  func.func @transform_8(%arg0: i32, %arg1: i32) -> (i32, i32, i32) {
    %c0_i32 = arith.constant 0 : i32
    %c0_i32_0 = arith.constant 0 : i32
    return %arg0, %arg1, %c0_i32 : i32, i32, i32
  }
  func.func @transform_9(%arg0: i32, %arg1: i32) -> (i32, i32, i32, i32) {
    %c0_i32 = arith.constant 0 : i32
    %c0_i32_0 = arith.constant 0 : i32
    %c0_i32_1 = arith.constant 0 : i32
    return %arg0, %arg1, %c0_i32, %c0_i32_0 : i32, i32, i32, i32
  }
}

module attributes {stable_mosaic.version = 11 : i64} {
  func.func @_k2_bn1_relu_conv2(%arg0: i32, %arg1: i32, %arg2: memref<1x1x10x256xf32, #tpu.memory_space<vmem>>, %arg3: memref<2x256xf32, #tpu.memory_space<vmem>>, %arg4: memref<3x256x256xf32, #tpu.memory_space<vmem>>, %arg5: memref<1x256xf32, #tpu.memory_space<vmem>>, %arg6: memref<1x8x256xf32, #tpu.memory_space<vmem>>, %arg7: memref<1x1x2x256xf32, #tpu.memory_space<vmem>>) attributes {dimension_semantics = [#tpu.dimension_semantics<parallel>, #tpu.dimension_semantics<parallel>], iteration_bounds = array<i64: 2, 4>, scalar_prefetch = 0 : i64, scratch_operands = 0 : i64, tpu.core_type = #tpu.core_type<tc>, window_params = [{transform_indices = @transform_0, window_bounds = array<i64: 1, 1, 10, 256>}, {pipeline_mode = #tpu.pipeline_mode<synchronous>, transform_indices = @transform_1, window_bounds = array<i64: 2, 256>}, {pipeline_mode = #tpu.pipeline_mode<synchronous>, transform_indices = @transform_2, window_bounds = array<i64: 3, 256, 256>}, {pipeline_mode = #tpu.pipeline_mode<synchronous>, transform_indices = @transform_3, window_bounds = array<i64: 1, 256>}, {transform_indices = @transform_4, window_bounds = array<i64: 1, 8, 256>}, {transform_indices = @transform_5, window_bounds = array<i64: 1, 1, 2, 256>}]} {
    %c0 = arith.constant 0 : index
    %c0_0 = arith.constant 0 : index
    %0 = vector.load %arg3[%c0, %c0_0] : memref<2x256xf32, #tpu.memory_space<vmem>>, vector<2x256xf32>
    %c0_1 = arith.constant 0 : index
    %c0_2 = arith.constant 0 : index
    %c0_3 = arith.constant 0 : index
    %c0_4 = arith.constant 0 : index
    %1 = vector.load %arg2[%c0_1, %c0_2, %c0_3, %c0_4] : memref<1x1x10x256xf32, #tpu.memory_space<vmem>>, vector<1x1x10x256xf32>
    %2 = vector.shape_cast %1 : vector<1x1x10x256xf32> to vector<10x256xf32>
    %3 = vector.extract_strided_slice %0 {offsets = [0, 0], sizes = [1, 256], strides = [1, 1]} : vector<2x256xf32> to vector<1x256xf32>
    %4 = vector.broadcast %3 : vector<1x256xf32> to vector<10x256xf32>
    %5 = arith.mulf %2, %4 : vector<10x256xf32>
    %6 = vector.extract_strided_slice %0 {offsets = [1, 0], sizes = [1, 256], strides = [1, 1]} : vector<2x256xf32> to vector<1x256xf32>
    %7 = vector.broadcast %6 : vector<1x256xf32> to vector<10x256xf32>
    %8 = arith.addf %5, %7 : vector<10x256xf32>
    %cst = arith.constant 0.000000e+00 : f32
    %9 = vector.broadcast %cst : f32 to vector<10x256xf32>
    %10 = arith.maximumf %8, %9 : vector<10x256xf32>
    %11 = tpu.iota {dimensions = array<i32: 0>} : vector<10x256xi32>
    %c0_i32 = arith.constant 0 : i32
    %12 = vector.broadcast %c0_i32 : i32 to vector<10x256xi32>
    %13 = arith.cmpi eq, %11, %12 : vector<10x256xi32>
    %c0_i32_5 = arith.constant 0 : i32
    %14 = arith.cmpi eq, %arg1, %c0_i32_5 : i32
    %15 = vector.broadcast %14 : i1 to vector<10x256xi1>
    %16 = arith.andi %13, %15 : vector<10x256xi1>
    %c9_i32 = arith.constant 9 : i32
    %17 = vector.broadcast %c9_i32 : i32 to vector<10x256xi32>
    %18 = arith.cmpi eq, %11, %17 : vector<10x256xi32>
    %c3_i32 = arith.constant 3 : i32
    %19 = arith.cmpi eq, %arg1, %c3_i32 : i32
    %20 = vector.broadcast %19 : i1 to vector<10x256xi1>
    %21 = arith.andi %18, %20 : vector<10x256xi1>
    %22 = arith.ori %16, %21 : vector<10x256xi1>
    %cst_6 = arith.constant 0.000000e+00 : f32
    %23 = vector.broadcast %cst_6 : f32 to vector<10x256xf32>
    %24 = arith.select %22, %23, %10 : vector<10x256xi1>, vector<10x256xf32>
    %25 = vector.extract_strided_slice %24 {offsets = [0, 0], sizes = [8, 256], strides = [1, 1]} : vector<10x256xf32> to vector<8x256xf32>
    %c0_7 = arith.constant 0 : index
    %c0_8 = arith.constant 0 : index
    %c0_9 = arith.constant 0 : index
    %26 = vector.load %arg4[%c0_7, %c0_8, %c0_9] : memref<3x256x256xf32, #tpu.memory_space<vmem>>, vector<1x256x256xf32>
    %27 = vector.shape_cast %26 : vector<1x256x256xf32> to vector<256x256xf32>
    %cst_10 = arith.constant dense<0.000000e+00> : vector<8x256xf32>
    %28 = tpu.matmul %25, %27, %cst_10 {dimension_numbers = #tpu.dot_dimension_numbers<[1], [0], [0], [1], [0, 0, 1, 1], [], []>} : vector<8x256xf32>, vector<256x256xf32>, vector<8x256xf32> -> vector<8x256xf32>
    %29 = vector.extract_strided_slice %24 {offsets = [1, 0], sizes = [8, 256], strides = [1, 1]} : vector<10x256xf32> to vector<8x256xf32>
    %c1 = arith.constant 1 : index
    %c0_11 = arith.constant 0 : index
    %c0_12 = arith.constant 0 : index
    %30 = vector.load %arg4[%c1, %c0_11, %c0_12] : memref<3x256x256xf32, #tpu.memory_space<vmem>>, vector<1x256x256xf32>
    %31 = vector.shape_cast %30 : vector<1x256x256xf32> to vector<256x256xf32>
    %cst_13 = arith.constant dense<0.000000e+00> : vector<8x256xf32>
    %32 = tpu.matmul %29, %31, %cst_13 {dimension_numbers = #tpu.dot_dimension_numbers<[1], [0], [0], [1], [0, 0, 1, 1], [], []>} : vector<8x256xf32>, vector<256x256xf32>, vector<8x256xf32> -> vector<8x256xf32>
    %33 = arith.addf %28, %32 : vector<8x256xf32>
    %34 = vector.extract_strided_slice %24 {offsets = [2, 0], sizes = [8, 256], strides = [1, 1]} : vector<10x256xf32> to vector<8x256xf32>
    %c2 = arith.constant 2 : index
    %c0_14 = arith.constant 0 : index
    %c0_15 = arith.constant 0 : index
    %35 = vector.load %arg4[%c2, %c0_14, %c0_15] : memref<3x256x256xf32, #tpu.memory_space<vmem>>, vector<1x256x256xf32>
    %36 = vector.shape_cast %35 : vector<1x256x256xf32> to vector<256x256xf32>
    %cst_16 = arith.constant dense<0.000000e+00> : vector<8x256xf32>
    %37 = tpu.matmul %34, %36, %cst_16 {dimension_numbers = #tpu.dot_dimension_numbers<[1], [0], [0], [1], [0, 0, 1, 1], [], []>} : vector<8x256xf32>, vector<256x256xf32>, vector<8x256xf32> -> vector<8x256xf32>
    %38 = arith.addf %33, %37 : vector<8x256xf32>
    %c0_17 = arith.constant 0 : index
    %c0_18 = arith.constant 0 : index
    %39 = vector.load %arg5[%c0_17, %c0_18] : memref<1x256xf32, #tpu.memory_space<vmem>>, vector<1x256xf32>
    %40 = vector.broadcast %39 : vector<1x256xf32> to vector<8x256xf32>
    %41 = arith.addf %38, %40 : vector<8x256xf32>
    %c0_19 = arith.constant 0 : index
    %c0_20 = arith.constant 0 : index
    %c0_21 = arith.constant 0 : index
    %42 = vector.load %arg6[%c0_19, %c0_20, %c0_21] : memref<1x8x256xf32, #tpu.memory_space<vmem>>, vector<1x8x256xf32>
    %43 = vector.shape_cast %42 : vector<1x8x256xf32> to vector<8x256xf32>
    %44 = vector.shape_cast %41 : vector<8x256xf32> to vector<1x8x256xf32>
    tpu.vector_store %arg6[%c0_19, %c0_20, %c0_21], %44 {strides = array<i32>} : memref<1x8x256xf32, #tpu.memory_space<vmem>>, vector<1x8x256xf32>,
    %cst_22 = arith.constant dense<0.000000e+00> : vector<256xf32>
    %45 = vector.multi_reduction <add>, %41, %cst_22 [0] : vector<8x256xf32> to vector<256xf32>
    %46 = vector.shape_cast %45 : vector<256xf32> to vector<1x256xf32>
    %47 = arith.mulf %41, %41 : vector<8x256xf32>
    %cst_23 = arith.constant dense<0.000000e+00> : vector<256xf32>
    %48 = vector.multi_reduction <add>, %47, %cst_23 [0] : vector<8x256xf32> to vector<256xf32>
    %49 = vector.shape_cast %48 : vector<256xf32> to vector<1x256xf32>
    %50 = tpu.concatenate %46, %49 in 0 : vector<1x256xf32>, vector<1x256xf32> -> vector<2x256xf32>
    %c0_24 = arith.constant 0 : index
    %c0_25 = arith.constant 0 : index
    %c0_26 = arith.constant 0 : index
    %c0_27 = arith.constant 0 : index
    %51 = vector.load %arg7[%c0_24, %c0_25, %c0_26, %c0_27] : memref<1x1x2x256xf32, #tpu.memory_space<vmem>>, vector<1x1x2x256xf32>
    %52 = vector.shape_cast %51 : vector<1x1x2x256xf32> to vector<2x256xf32>
    %53 = vector.shape_cast %50 : vector<2x256xf32> to vector<1x1x2x256xf32>
    tpu.vector_store %arg7[%c0_24, %c0_25, %c0_26, %c0_27], %53 {strides = array<i32>} : memref<1x1x2x256xf32, #tpu.memory_space<vmem>>, vector<1x1x2x256xf32>,
    return
  }
  func.func @transform_0(%arg0: i32, %arg1: i32) -> (i32, i32, i32, i32) {
    %c0_i32 = arith.constant 0 : i32
    %c0_i32_0 = arith.constant 0 : i32
    %c0_i32_1 = arith.constant 0 : i32
    return %arg0, %arg1, %c0_i32, %c0_i32_0 : i32, i32, i32, i32
  }
  func.func @transform_1(%arg0: i32, %arg1: i32) -> (i32, i32) {
    %c0_i32 = arith.constant 0 : i32
    %c0_i32_0 = arith.constant 0 : i32
    %c0_i32_1 = arith.constant 0 : i32
    return %c0_i32, %c0_i32_0 : i32, i32
  }
  func.func @transform_2(%arg0: i32, %arg1: i32) -> (i32, i32, i32) {
    %c0_i32 = arith.constant 0 : i32
    %c0_i32_0 = arith.constant 0 : i32
    %c0_i32_1 = arith.constant 0 : i32
    %c0_i32_2 = arith.constant 0 : i32
    return %c0_i32, %c0_i32_0, %c0_i32_1 : i32, i32, i32
  }
  func.func @transform_3(%arg0: i32, %arg1: i32) -> (i32, i32) {
    %c0_i32 = arith.constant 0 : i32
    %c0_i32_0 = arith.constant 0 : i32
    %c0_i32_1 = arith.constant 0 : i32
    return %c0_i32, %c0_i32_0 : i32, i32
  }
  func.func @transform_4(%arg0: i32, %arg1: i32) -> (i32, i32, i32) {
    %c0_i32 = arith.constant 0 : i32
    %c0_i32_0 = arith.constant 0 : i32
    return %arg0, %arg1, %c0_i32 : i32, i32, i32
  }
  func.func @transform_5(%arg0: i32, %arg1: i32) -> (i32, i32, i32, i32) {
    %c0_i32 = arith.constant 0 : i32
    %c0_i32_0 = arith.constant 0 : i32
    %c0_i32_1 = arith.constant 0 : i32
    return %arg0, %arg1, %c0_i32, %c0_i32_0 : i32, i32, i32, i32
  }
}

module attributes {stable_mosaic.version = 11 : i64} {
  func.func @_k3_bn2_bns_add_relu(%arg0: i32, %arg1: i32, %arg2: memref<1x8x256xf32, #tpu.memory_space<vmem>>, %arg3: memref<1x8x256xf32, #tpu.memory_space<vmem>>, %arg4: memref<4x256xf32, #tpu.memory_space<vmem>>, %arg5: memref<1x8x256xf32, #tpu.memory_space<vmem>>) attributes {dimension_semantics = [#tpu.dimension_semantics<parallel>, #tpu.dimension_semantics<parallel>], iteration_bounds = array<i64: 2, 4>, scalar_prefetch = 0 : i64, scratch_operands = 0 : i64, tpu.core_type = #tpu.core_type<tc>, window_params = [{transform_indices = @transform_0, window_bounds = array<i64: 1, 8, 256>}, {transform_indices = @transform_1, window_bounds = array<i64: 1, 8, 256>}, {pipeline_mode = #tpu.pipeline_mode<synchronous>, transform_indices = @transform_2, window_bounds = array<i64: 4, 256>}, {transform_indices = @transform_3, window_bounds = array<i64: 1, 8, 256>}]} {
    %c0 = arith.constant 0 : index
    %c0_0 = arith.constant 0 : index
    %0 = vector.load %arg4[%c0, %c0_0] : memref<4x256xf32, #tpu.memory_space<vmem>>, vector<4x256xf32>
    %c0_1 = arith.constant 0 : index
    %c0_2 = arith.constant 0 : index
    %c0_3 = arith.constant 0 : index
    %1 = vector.load %arg2[%c0_1, %c0_2, %c0_3] : memref<1x8x256xf32, #tpu.memory_space<vmem>>, vector<1x8x256xf32>
    %2 = vector.shape_cast %1 : vector<1x8x256xf32> to vector<8x256xf32>
    %3 = vector.extract_strided_slice %0 {offsets = [0, 0], sizes = [1, 256], strides = [1, 1]} : vector<4x256xf32> to vector<1x256xf32>
    %4 = vector.broadcast %3 : vector<1x256xf32> to vector<8x256xf32>
    %5 = arith.mulf %2, %4 : vector<8x256xf32>
    %6 = vector.extract_strided_slice %0 {offsets = [1, 0], sizes = [1, 256], strides = [1, 1]} : vector<4x256xf32> to vector<1x256xf32>
    %7 = vector.broadcast %6 : vector<1x256xf32> to vector<8x256xf32>
    %8 = arith.addf %5, %7 : vector<8x256xf32>
    %c0_4 = arith.constant 0 : index
    %c0_5 = arith.constant 0 : index
    %c0_6 = arith.constant 0 : index
    %9 = vector.load %arg3[%c0_4, %c0_5, %c0_6] : memref<1x8x256xf32, #tpu.memory_space<vmem>>, vector<1x8x256xf32>
    %10 = vector.shape_cast %9 : vector<1x8x256xf32> to vector<8x256xf32>
    %11 = vector.extract_strided_slice %0 {offsets = [2, 0], sizes = [1, 256], strides = [1, 1]} : vector<4x256xf32> to vector<1x256xf32>
    %12 = vector.broadcast %11 : vector<1x256xf32> to vector<8x256xf32>
    %13 = arith.mulf %10, %12 : vector<8x256xf32>
    %14 = arith.addf %8, %13 : vector<8x256xf32>
    %15 = vector.extract_strided_slice %0 {offsets = [3, 0], sizes = [1, 256], strides = [1, 1]} : vector<4x256xf32> to vector<1x256xf32>
    %16 = vector.broadcast %15 : vector<1x256xf32> to vector<8x256xf32>
    %17 = arith.addf %14, %16 : vector<8x256xf32>
    %cst = arith.constant 0.000000e+00 : f32
    %18 = vector.broadcast %cst : f32 to vector<8x256xf32>
    %19 = arith.maximumf %17, %18 : vector<8x256xf32>
    %c0_7 = arith.constant 0 : index
    %c0_8 = arith.constant 0 : index
    %c0_9 = arith.constant 0 : index
    %20 = vector.load %arg5[%c0_7, %c0_8, %c0_9] : memref<1x8x256xf32, #tpu.memory_space<vmem>>, vector<1x8x256xf32>
    %21 = vector.shape_cast %20 : vector<1x8x256xf32> to vector<8x256xf32>
    %22 = vector.shape_cast %19 : vector<8x256xf32> to vector<1x8x256xf32>
    tpu.vector_store %arg5[%c0_7, %c0_8, %c0_9], %22 {strides = array<i32>} : memref<1x8x256xf32, #tpu.memory_space<vmem>>, vector<1x8x256xf32>,
    return
  }
  func.func @transform_0(%arg0: i32, %arg1: i32) -> (i32, i32, i32) {
    %c0_i32 = arith.constant 0 : i32
    %c0_i32_0 = arith.constant 0 : i32
    return %arg0, %arg1, %c0_i32 : i32, i32, i32
  }
  func.func @transform_1(%arg0: i32, %arg1: i32) -> (i32, i32, i32) {
    %c0_i32 = arith.constant 0 : i32
    %c0_i32_0 = arith.constant 0 : i32
    return %arg0, %arg1, %c0_i32 : i32, i32, i32
  }
  func.func @transform_2(%arg0: i32, %arg1: i32) -> (i32, i32) {
    %c0_i32 = arith.constant 0 : i32
    %c0_i32_0 = arith.constant 0 : i32
    %c0_i32_1 = arith.constant 0 : i32
    return %c0_i32, %c0_i32_0 : i32, i32
  }
  func.func @transform_3(%arg0: i32, %arg1: i32) -> (i32, i32, i32) {
    %c0_i32 = arith.constant 0 : i32
    %c0_i32_0 = arith.constant 0 : i32
    return %arg0, %arg1, %c0_i32 : i32, i32, i32
  }
}

</mosaic_0001>

<llo_original>
// kernel: tile.48
$region0: #{tile.48}
  #allocation0 [shape = 's32[1]{0}', space=sflag, size = 0x4, scoped, tag = 'scoped memory for tile.48']
  %s0 = inlined_call_operand.vmem [shape: f32[8], index: 0, kind: input, shape index: {}]
  %s1 = inlined_call_operand.vmem [shape: f32[32,8], index: 1, kind: output, shape index: {}]
  // Predicated region
  $region2: #{tile.48} parent=0 // pred_check
    _
  $region3: #{tile.48} parent=0 // pred_check_branch
    %3 = sbr.rel (0) target = $region5
  $region4: #{tile.48} parent=0 // pred_region
    _
  $region5: #{tile.48} parent=0 // pred_fallthru
    _
  %v4 = vld [vmem:[%s0] ss:$0 sm:$0xff]
  %5 = vst [vmem:[%s1] sm:$0xff] %v4
  %s6 = scalar_lea.vmem %s1, 8
  %7 = vst [vmem:[%s6] sm:$0xff] %v4
  %s8 = scalar_lea.vmem %s1, 16
  %9 = vst [vmem:[%s8] sm:$0xff] %v4
  %s10 = scalar_lea.vmem %s1, 24
  %11 = vst [vmem:[%s10] sm:$0xff] %v4

// kernel: tile.49
$region0: #{tile.49}
  %s0 = inlined_call_operand.vmem [shape: f32[32,8], index: 0, kind: input, shape index: {}]
  %s1 = inlined_call_operand.vmem [shape: f32[1,256], index: 1, kind: output, shape index: {}]
  $region1: #{tile.49} parent=0
    #allocation0 [shape = 'u8[8192]{0}', space=vmem, size = 0x2000, scoped, tag = 'scoped mem for output reshape']
    %s2 = smov 3
    %v3 = vld [vmem:[%s0] ss:$16 sm:%s2]
    %vm4 = vcmask 64512
    %5 = vst.msk [vmem:[#allocation0] ss:$8 sm:$0x3] %vm4, %v3
    %s6 = scalar_lea.vmem %s0, 15
    %s7 = smov 3
    %v8 = vld [vmem:[%s6] ss:$16 sm:%s7]
    %9 = vrot.lane.b32.xlu0 %v8, 120
    %v10 = vpop.permute.xlu0 %9
    %vm11 = vcmask 1048512
    %12 = vst.msk [vmem:[#allocation0] ss:$8 sm:$0x3] %vm11, %v10
    %s13 = scalar_lea.vmem %s0, 14
    %s14 = smov 3
    %v15 = vld [vmem:[%s13] ss:$16 sm:%s14]
    %16 = vrot.lane.b32.xlu0 %v15, 112
    %v17 = vpop.permute.xlu0 %16
    %vm18 = vcmask 982912
    %19 = vst.msk [vmem:[#allocation0] ss:$8 sm:$0x3] %vm18, %v17
    %s20 = scalar_lea.vmem %s0, 13
    %s21 = smov 3
    %v22 = vld [vmem:[%s20] ss:$16 sm:%s21]
    %23 = vrot.lane.b32.xlu0 %v22, 104
    %v24 = vpop.permute.xlu0 %23
    %vm25 = vcmask 917312
    %26 = vst.msk [vmem:[#allocation0] ss:$8 sm:$0x3] %vm25, %v24
    %s27 = scalar_lea.vmem %s0, 12
    %s28 = smov 3
    %v29 = vld [vmem:[%s27] ss:$16 sm:%s28]
    %30 = vrot.lane.b32.xlu0 %v29, 96
    %v31 = vpop.permute.xlu0 %30
    %vm32 = vcmask 851712
    %33 = vst.msk [vmem:[#allocation0] ss:$8 sm:$0x3] %vm32, %v31
    %s34 = scalar_lea.vmem %s0, 11
    %s35 = smov 3
    %v36 = vld [vmem:[%s34] ss:$16 sm:%s35]
    %37 = vrot.lane.b32.xlu0 %v36, 88
    %v38 = vpop.permute.xlu0 %37
    %vm39 = vcmask 786112
    %40 = vst.msk [vmem:[#allocation0] ss:$8 sm:$0x3] %vm39, %v38
    %s41 = scalar_lea.vmem %s0, 10
    %s42 = smov 3
    %v43 = vld [vmem:[%s41] ss:$16 sm:%s42]
    %44 = vrot.lane.b32.xlu0 %v43, 80
    %v45 = vpop.permute.xlu0 %44
    %vm46 = vcmask 720512
    %47 = vst.msk [vmem:[#allocation0] ss:$8 sm:$0x3] %vm46, %v45
    %s48 = scalar_lea.vmem %s0, 9
    %s49 = smov 3
    %v50 = vld [vmem:[%s48] ss:$16 sm:%s49]
    %51 = vrot.lane.b32.xlu0 %v50, 72
    %v52 = vpop.permute.xlu0 %51
    %vm53 = vcmask 654912
    %54 = vst.msk [vmem:[#allocation0] ss:$8 sm:$0x3] %vm53, %v52
    %s55 = scalar_lea.vmem %s0, 8
    %s56 = smov 3
    %v57 = vld [vmem:[%s55] ss:$16 sm:%s56]
    %58 = vrot.lane.b32.xlu0 %v57, 64
    %v59 = vpop.permute.xlu0 %58
    %vm60 = vcmask 589312
    %61 = vst.msk [vmem:[#allocation0] ss:$8 sm:$0x3] %vm60, %v59
    %s62 = scalar_lea.vmem %s0, 7
    %s63 = smov 3
    %v64 = vld [vmem:[%s62] ss:$16 sm:%s63]
    %65 = vrot.lane.b32.xlu0 %v64, 56
    %v66 = vpop.permute.xlu0 %65
    %vm67 = vcmask 523712
    %68 = vst.msk [vmem:[#allocation0] ss:$8 sm:$0x3] %vm67, %v66
    %s69 = scalar_lea.vmem %s0, 6
    %s70 = smov 3
    %v71 = vld [vmem:[%s69] ss:$16 sm:%s70]
    %72 = vrot.lane.b32.xlu0 %v71, 48
    %v73 = vpop.permute.xlu0 %72
    %vm74 = vcmask 458112
    %75 = vst.msk [vmem:[#allocation0] ss:$8 sm:$0x3] %vm74, %v73
    %s76 = scalar_lea.vmem %s0, 5
    %s77 = smov 3
    %v78 = vld [vmem:[%s76] ss:$16 sm:%s77]
    %79 = vrot.lane.b32.xlu0 %v78, 40
    %v80 = vpop.permute.xlu0 %79
    %vm81 = vcmask 392512
    %82 = vst.msk [vmem:[#allocation0] ss:$8 sm:$0x3] %vm81, %v80
    %s83 = scalar_lea.vmem %s0, 4
    %s84 = smov 3
    %v85 = vld [vmem:[%s83] ss:$16 sm:%s84]
    %86 = vrot.lane.b32.xlu0 %v85, 32
    %v87 = vpop.permute.xlu0 %86
    %vm88 = vcmask 326912
    %89 = vst.msk [vmem:[#allocation0] ss:$8 sm:$0x3] %vm88, %v87
    %s90 = scalar_lea.vmem %s0, 3
    %s91 = smov 3
    %v92 = vld [vmem:[%s90] ss:$16 sm:%s91]
    %93 = vrot.lane.b32.xlu0 %v92, 24
    %v94 = vpop.permute.xlu0 %93
    %vm95 = vcmask 261312
    %96 = vst.msk [vmem:[#allocation0] ss:$8 sm:$0x3] %vm95, %v94
    %s97 = scalar_lea.vmem %s0, 2
    %s98 = smov 3
    %v99 = vld [vmem:[%s97] ss:$16 sm:%s98]
    %100 = vrot.lane.b32.xlu0 %v99, 16
    %v101 = vpop.permute.xlu0 %100
    %vm102 = vcmask 195712
    %103 = vst.msk [vmem:[#allocation0] ss:$8 sm:$0x3] %vm102, %v101
    %s104 = scalar_lea.vmem %s0, 1
    %s105 = smov 3
    %v106 = vld [vmem:[%s104] ss:$16 sm:%s105]
    %107 = vrot.lane.b32.xlu0 %v106, 8
    %v108 = vpop.permute.xlu0 %107
    %vm109 = vcmask 130112
    %110 = vst.msk [vmem:[#allocation0] ss:$8 sm:$0x3] %vm109, %v108
    %s112 = sshllo.u32 0, 1
    %v114 = vld [vmem:[#allocation0] sm:%s112]
    %s115 = sshllo.u32 0, 1
    %116 = vst [vmem:[%s1] sm:%s115] %v114
    %s117 = scalar_lea.vmem [#allocation0], 8
    %v118 = vld [vmem:[%s117] sm:%s112]
    %s119 = sshllo.u32 0, 1
    %s120 = scalar_lea.vmem %s1, 1
    %121 = vst [vmem:[%s120] sm:%s119] %v118

// kernel: upblock_forward.3
$region0: #{upblock_forward.3}
  #allocation0 [shape = 'u32[]', space=smem, size = 0x4, offset = 0x4, fixed_abs, tag = 'smem constant byte address 0x4 - core index']
  #allocation1 [shape = 'u32[144,128]{1,0:T(1,128)}', space=vmem, size = 0x12000, scoped, tag = 'internal scratch']
  %s0 = inlined_call_operand.vmem [shape: f32[4,12,16], index: 0, kind: input, shape index: {}]
  %s1 = inlined_call_operand.vmem [shape: f32[2,16,64], index: 1, kind: input, shape index: {}]
  %s2 = inlined_call_operand.vmem [shape: f32[64,128], index: 2, kind: input, shape index: {}]
  %s3 = inlined_call_operand.vmem [shape: f32[3,128,256], index: 3, kind: input, shape index: {}]
  %s4 = inlined_call_operand.vmem [shape: f32[128,256], index: 4, kind: input, shape index: {}]
  %s5 = inlined_call_operand.vmem [shape: f32[1,256], index: 5, kind: input, shape index: {}]
  %s6 = inlined_call_operand.vmem [shape: f32[1,256], index: 6, kind: input, shape index: {}]
  %s7 = inlined_call_operand.vmem [shape: f32[2,4,10,256], index: 7, kind: output, shape index: {0}]
  %s8 = inlined_call_operand.vmem [shape: f32[2,32,256], index: 8, kind: output, shape index: {1}]
  %s9 = inlined_call_operand.vmem [shape: f32[2,4,4,256], index: 9, kind: output, shape index: {2}]
  %10 = xla_tuple %s7, %s8, %s9
  %s11 = sld [smem:[#allocation0]]
  $region77: #{upblock_forward.3} parent=0
    _
  %s13 = ssub.s32 1, %s11
  %s14 = scalar_select 0, %s13, %s11
  loop: start=0, step=1, limit=10
  $region2: #{upblock_forward.3} parent=0 // loop_pre_header
    _
  $region3: #{upblock_forward.3} parent=0 // loop_header
    %s16 = sphi 0, %s20
    %p17 = scmp.ge.s32.totalorder %s16, 10
    %s23 = sphi 0, %s35
    %s24 = sphi 0, %s31
    %s25 = sphi 0, %s23
    %s26 = sphi 0, %s24
    %s27 = sphi 0, %s25
    %s28 = sphi 0, %s26
    %s38 = sphi 0, %s40
    %s41 = sphi 0, %s38
    %s42 = sphi 0, %s41
    %s58 = sphi 0, %s42
    %s64 = sphi 0, %s66
    %s67 = sphi 0, %s64
    %s68 = sphi 0, %s67
    %s84 = sphi 0, %s68
    %s88 = sphi 0, %s88
    %s90 = sphi 0, %s88
    %s91 = sphi 0, %s90
    %s105 = sphi 0, %s91
    %s109 = sphi 0, %s109
    %s111 = sphi 0, %s109
    %s112 = sphi 0, %s111
    %s126 = sphi 0, %s112
    %s130 = sphi 0, %s130
    %s132 = sphi 0, %s130
    %s133 = sphi 0, %s132
    %s147 = sphi 0, %s133
    %s151 = sphi 0, %s151
    %s153 = sphi 0, %s151
    %s154 = sphi 0, %s153
    %s168 = sphi 0, %s154
    %s172 = sphi 0, %s172
    %s174 = sphi 0, %s172
    %s175 = sphi 0, %s174
    %s189 = sphi 0, %s175
    %s197 = sphi 0, %s199
    %s200 = sphi 0, %s197
    %s201 = sphi 0, %s200
    %s217 = sphi 0, %s201
    %s225 = sphi 0, %s227
    %s228 = sphi 0, %s225
    %s229 = sphi 0, %s228
    %s245 = sphi 0, %s229
    %s253 = sphi 0, %s255
    %s256 = sphi 0, %s253
    %s257 = sphi 0, %s256
    %s273 = sphi 0, %s257
  $region4: #{upblock_forward.3} parent=0 // loop_header_branch
    %19 = sbr.rel (%p17) target = $region8
  $region5: #{upblock_forward.3} parent=0 // loop_body
    %s21 = ssub.s32 %s16, 1
    %s22 = ssub.s32 %s16, 2
    %s29 = sadd.s32 1, %s24
    %p30 = scmp.ge.s32.totalorder %s29, 4
    %s31 = scalar_select %p30, 0, %s29
    %s32 = sadd.s32 1, %s23
    %s33 = scalar_select %p30, %s32, %s23
    %p34 = scmp.ge.s32.totalorder %s33, 2
    %s35 = scalar_select %p34, 0, %s33
    %s36 = ssub.s32 %s24, %s31
    %p37 = scmp.eq.s32.totalorder %s36, 0
    %s39 = sadd.s32 %s38, 1
    %s40 = scalar_select %p37, %s38, %s39
    %p43 = pneg %p37
    %p44 = scmp.eq.s32.totalorder %s16, 7
    %p45 = por %p43, %p44
    %p46 = scmp.ne.s32.totalorder %s38, %s41
    %p47 = scmp.eq.s32.totalorder %s16, 0
    %p48 = por %p46, %p47
    %p49 = scmp.ne.s32.totalorder %s38, %s41
    %p50 = scmp.eq.s32.totalorder %s21, 7
    %p51 = por %p49, %p50
    %p52 = scmp.ne.s32.totalorder %s41, %s42
    %p53 = scmp.eq.s32.totalorder %s21, 0
    %p54 = por %p52, %p53
    %p55 = scmp.ne.s32.totalorder %s41, %s42
    %p56 = scmp.eq.s32.totalorder %s22, 7
    %p57 = por %p55, %p56
    %p59 = scmp.ne.s32.totalorder %s42, %s58
    %p60 = scmp.eq.s32.totalorder %s22, 0
    %p61 = por %p59, %p60
    %s62 = ssub.s32 %s23, %s35
    %p63 = scmp.eq.s32.totalorder %s62, 0
    %s65 = sadd.s32 %s64, 1
    %s66 = scalar_select %p63, %s64, %s65
    %p69 = pneg %p63
    %p70 = scmp.eq.s32.totalorder %s16, 7
    %p71 = por %p69, %p70
    %p72 = scmp.ne.s32.totalorder %s64, %s67
    %p73 = scmp.eq.s32.totalorder %s16, 0
    %p74 = por %p72, %p73
    %p75 = scmp.ne.s32.totalorder %s64, %s67
    %p76 = scmp.eq.s32.totalorder %s21, 7
    %p77 = por %p75, %p76
    %p78 = scmp.ne.s32.totalorder %s67, %s68
    %p79 = scmp.eq.s32.totalorder %s21, 0
    %p80 = por %p78, %p79
    %p81 = scmp.ne.s32.totalorder %s67, %s68
    %p82 = scmp.eq.s32.totalorder %s22, 7
    %p83 = por %p81, %p82
    %p85 = scmp.ne.s32.totalorder %s68, %s84
    %p86 = scmp.eq.s32.totalorder %s22, 0
    %p87 = por %p85, %p86
    %s89 = sadd.s32 %s88, 1
    %p92 = scmp.eq.s32.totalorder %s16, 7
    %p93 = scmp.ne.s32.totalorder %s88, %s90
    %p94 = scmp.eq.s32.totalorder %s16, 0
    %p95 = por %p93, %p94
    %p96 = scmp.ne.s32.totalorder %s88, %s90
    %p97 = scmp.eq.s32.totalorder %s21, 7
    %p98 = por %p96, %p97
    %p99 = scmp.ne.s32.totalorder %s90, %s91
    %p100 = scmp.eq.s32.totalorder %s21, 0
    %p101 = por %p99, %p100
    %p102 = scmp.ne.s32.totalorder %s90, %s91
    %p103 = scmp.eq.s32.totalorder %s22, 7
    %p104 = por %p102, %p103
    %p106 = scmp.ne.s32.totalorder %s91, %s105
    %p107 = scmp.eq.s32.totalorder %s22, 0
    %p108 = por %p106, %p107
    %s110 = sadd.s32 %s109, 1
    %p113 = scmp.eq.s32.totalorder %s16, 7
    %p114 = scmp.ne.s32.totalorder %s109, %s111
    %p115 = scmp.eq.s32.totalorder %s16, 0
    %p116 = por %p114, %p115
    %p117 = scmp.ne.s32.totalorder %s109, %s111
    %p118 = scmp.eq.s32.totalorder %s21, 7
    %p119 = por %p117, %p118
    %p120 = scmp.ne.s32.totalorder %s111, %s112
    %p121 = scmp.eq.s32.totalorder %s21, 0
    %p122 = por %p120, %p121
    %p123 = scmp.ne.s32.totalorder %s111, %s112
    %p124 = scmp.eq.s32.totalorder %s22, 7
    %p125 = por %p123, %p124
    %p127 = scmp.ne.s32.totalorder %s112, %s126
    %p128 = scmp.eq.s32.totalorder %s22, 0
    %p129 = por %p127, %p128
    %s131 = sadd.s32 %s130, 1
    %p134 = scmp.eq.s32.totalorder %s16, 7
    %p135 = scmp.ne.s32.totalorder %s130, %s132
    %p136 = scmp.eq.s32.totalorder %s16, 0
    %p137 = por %p135, %p136
    %p138 = scmp.ne.s32.totalorder %s130, %s132
    %p139 = scmp.eq.s32.totalorder %s21, 7
    %p140 = por %p138, %p139
    %p141 = scmp.ne.s32.totalorder %s132, %s133
    %p142 = scmp.eq.s32.totalorder %s21, 0
    %p143 = por %p141, %p142
    %p144 = scmp.ne.s32.totalorder %s132, %s133
    %p145 = scmp.eq.s32.totalorder %s22, 7
    %p146 = por %p144, %p145
    %p148 = scmp.ne.s32.totalorder %s133, %s147
    %p149 = scmp.eq.s32.totalorder %s22, 0
    %p150 = por %p148, %p149
    %s152 = sadd.s32 %s151, 1
    %p155 = scmp.eq.s32.totalorder %s16, 7
    %p156 = scmp.ne.s32.totalorder %s151, %s153
    %p157 = scmp.eq.s32.totalorder %s16, 0
    %p158 = por %p156, %p157
    %p159 = scmp.ne.s32.totalorder %s151, %s153
    %p160 = scmp.eq.s32.totalorder %s21, 7
    %p161 = por %p159, %p160
    %p162 = scmp.ne.s32.totalorder %s153, %s154
    %p163 = scmp.eq.s32.totalorder %s21, 0
    %p164 = por %p162, %p163
    %p165 = scmp.ne.s32.totalorder %s153, %s154
    %p166 = scmp.eq.s32.totalorder %s22, 7
    %p167 = por %p165, %p166
    %p169 = scmp.ne.s32.totalorder %s154, %s168
    %p170 = scmp.eq.s32.totalorder %s22, 0
    %p171 = por %p169, %p170
    %s173 = sadd.s32 %s172, 1
    %p176 = scmp.eq.s32.totalorder %s16, 7
    %p177 = scmp.ne.s32.totalorder %s172, %s174
    %p178 = scmp.eq.s32.totalorder %s16, 0
    %p179 = por %p177, %p178
    %p180 = scmp.ne.s32.totalorder %s172, %s174
    %p181 = scmp.eq.s32.totalorder %s21, 7
    %p182 = por %p180, %p181
    %p183 = scmp.ne.s32.totalorder %s174, %s175
    %p184 = scmp.eq.s32.totalorder %s21, 0
    %p185 = por %p183, %p184
    %p186 = scmp.ne.s32.totalorder %s174, %s175
    %p187 = scmp.eq.s32.totalorder %s22, 7
    %p188 = por %p186, %p187
    %p190 = scmp.ne.s32.totalorder %s175, %s189
    %p191 = scmp.eq.s32.totalorder %s22, 0
    %p192 = por %p190, %p191
    %s193 = ssub.s32 %s23, %s35
    %s194 = ssub.s32 %s24, %s31
    %s195 = sor.u32 %s193, %s194
    %p196 = scmp.eq.s32.totalorder %s195, 0
    %s198 = sadd.s32 %s197, 1
    %s199 = scalar_select %p196, %s197, %s198
    %p202 = pneg %p196
    %p203 = scmp.eq.s32.totalorder %s16, 7
    %p204 = por %p202, %p203
    %p205 = scmp.ne.s32.totalorder %s197, %s200
    %p206 = scmp.eq.s32.totalorder %s16, 0
    %p207 = por %p205, %p206
    %p208 = scmp.ne.s32.totalorder %s197, %s200
    %p209 = scmp.eq.s32.totalorder %s21, 7
    %p210 = por %p208, %p209
    %p211 = scmp.ne.s32.totalorder %s200, %s201
    %p212 = scmp.eq.s32.totalorder %s21, 0
    %p213 = por %p211, %p212
    %p214 = scmp.ne.s32.totalorder %s200, %s201
    %p215 = scmp.eq.s32.totalorder %s22, 7
    %p216 = por %p214, %p215
    %p218 = scmp.ne.s32.totalorder %s201, %s217
    %p219 = scmp.eq.s32.totalorder %s22, 0
    %p220 = por %p218, %p219
    %s221 = ssub.s32 %s23, %s35
    %s222 = ssub.s32 %s24, %s31
    %s223 = sor.u32 %s221, %s222
    %p224 = scmp.eq.s32.totalorder %s223, 0
    %s226 = sadd.s32 %s225, 1
    %s227 = scalar_select %p224, %s225, %s226
    %p230 = pneg %p224
    %p231 = scmp.eq.s32.totalorder %s16, 7
    %p232 = por %p230, %p231
    %p233 = scmp.ne.s32.totalorder %s225, %s228
    %p234 = scmp.eq.s32.totalorder %s16, 0
    %p235 = por %p233, %p234
    %p236 = scmp.ne.s32.totalorder %s225, %s228
    %p237 = scmp.eq.s32.totalorder %s21, 7
    %p238 = por %p236, %p237
    %p239 = scmp.ne.s32.totalorder %s228, %s229
    %p240 = scmp.eq.s32.totalorder %s21, 0
    %p241 = por %p239, %p240
    %p242 = scmp.ne.s32.totalorder %s228, %s229
    %p243 = scmp.eq.s32.totalorder %s22, 7
    %p244 = por %p242, %p243
    %p246 = scmp.ne.s32.totalorder %s229, %s245
    %p247 = scmp.eq.s32.totalorder %s22, 0
    %p248 = por %p246, %p247
    %s249 = ssub.s32 %s23, %s35
    %s250 = ssub.s32 %s24, %s31
    %s251 = sor.u32 %s249, %s250
    %p252 = scmp.eq.s32.totalorder %s251, 0
    %s254 = sadd.s32 %s253, 1
    %s255 = scalar_select %p252, %s253, %s254
    %p258 = pneg %p252
    %p259 = scmp.eq.s32.totalorder %s16, 7
    %p260 = por %p258, %p259
    %p261 = scmp.ne.s32.totalorder %s253, %s256
    %p262 = scmp.eq.s32.totalorder %s16, 0
    %p263 = por %p261, %p262
    %p264 = scmp.ne.s32.totalorder %s253, %s256
    %p265 = scmp.eq.s32.totalorder %s21, 7
    %p266 = por %p264, %p265
    %p267 = scmp.ne.s32.totalorder %s256, %s257
    %p268 = scmp.eq.s32.totalorder %s21, 0
    %p269 = por %p267, %p268
    %p270 = scmp.ne.s32.totalorder %s256, %s257
    %p271 = scmp.eq.s32.totalorder %s22, 7
    %p272 = por %p270, %p271
    %p274 = scmp.ne.s32.totalorder %s257, %s273
    %p275 = scmp.eq.s32.totalorder %s22, 0
    %p276 = por %p274, %p275
    %p277 = scmp.le.s32.totalorder 1, %s16
    %p278 = scmp.lt.s32.totalorder %s16, 9
    %p279 = pnand %p277, %p278
    %p280 = pneg %p279
    // Predicated region
    $region9: #{upblock_forward.3} parent=5 // pred_check
      _
    $region10: #{upblock_forward.3} parent=5 // pred_check_branch
      %282 = sbr.rel (%p279) target = $region12
    $region11: #{upblock_forward.3} parent=5 // pred_region
      %s283 = ssub.s32 %s16, 1
      // Predicated region
      $region13: #{upblock_forward.3} parent=11 // pred_check
        %p284 = pneg %p101
      $region14: #{upblock_forward.3} parent=11 // pred_check_branch
        %286 = sbr.rel (%p284) target = $region16
      $region15: #{upblock_forward.3} parent=11 // pred_region
        _
      $region16: #{upblock_forward.3} parent=11 // pred_fallthru
        _
      // Predicated region
      $region17: #{upblock_forward.3} parent=11 // pred_check
        %p287 = pneg %p122
      $region18: #{upblock_forward.3} parent=11 // pred_check_branch
        %289 = sbr.rel (%p287) target = $region20
      $region19: #{upblock_forward.3} parent=11 // pred_region
        _
      $region20: #{upblock_forward.3} parent=11 // pred_fallthru
        _
      // Predicated region
      $region21: #{upblock_forward.3} parent=11 // pred_check
        %p290 = pneg %p143
      $region22: #{upblock_forward.3} parent=11 // pred_check_branch
        %292 = sbr.rel (%p290) target = $region24
      $region23: #{upblock_forward.3} parent=11 // pred_region
        _
      $region24: #{upblock_forward.3} parent=11 // pred_fallthru
        _
      // Predicated region
      $region25: #{upblock_forward.3} parent=11 // pred_check
        %p293 = pneg %p164
      $region26: #{upblock_forward.3} parent=11 // pred_check_branch
        %295 = sbr.rel (%p293) target = $region28
      $region27: #{upblock_forward.3} parent=11 // pred_region
        _
      $region28: #{upblock_forward.3} parent=11 // pred_fallthru
        _
      // Predicated region
      $region29: #{upblock_forward.3} parent=11 // pred_check
        %p296 = pneg %p185
      $region30: #{upblock_forward.3} parent=11 // pred_check_branch
        %298 = sbr.rel (%p296) target = $region32
      $region31: #{upblock_forward.3} parent=11 // pred_region
        _
      $region32: #{upblock_forward.3} parent=11 // pred_fallthru
        _
    $region12: #{upblock_forward.3} parent=5 // pred_fallthru
      _
    %p299 = scmp.lt.s32.totalorder %s16, 8
    // Predicated region
    $region33: #{upblock_forward.3} parent=5 // pred_check
      %p300 = pneg %p299
    $region34: #{upblock_forward.3} parent=5 // pred_check_branch
      %302 = sbr.rel (%p300) target = $region36
    $region35: #{upblock_forward.3} parent=5 // pred_region
      // Predicated region
      $region37: #{upblock_forward.3} parent=35 // pred_check
        %p303 = pneg %p48
      $region38: #{upblock_forward.3} parent=35 // pred_check_branch
        %305 = sbr.rel (%p303) target = $region40
      $region39: #{upblock_forward.3} parent=35 // pred_region
        %p306 = scmp.lt.s32.totalorder %s24, 3
        %s307 = scalar_select %p306, %s24, 3
        %s308 = smul.addr %s307, 2
        %s309 = smul.addr %s308, 8
        %s310 = scalar_lea.vmem %s0, %s309
      $region40: #{upblock_forward.3} parent=35 // pred_fallthru
        _
      // Predicated region
      $region41: #{upblock_forward.3} parent=35 // pred_check
        %p311 = pneg %p74
      $region42: #{upblock_forward.3} parent=35 // pred_check_branch
        %313 = sbr.rel (%p311) target = $region44
      $region43: #{upblock_forward.3} parent=35 // pred_region
        %p314 = scmp.lt.s32.totalorder %s23, 1
        %s315 = scalar_select %p314, %s23, 1
        %s316 = smul.addr %s315, 2
        %s317 = smul.addr %s316, 8
        %s318 = scalar_lea.vmem %s1, %s317
      $region44: #{upblock_forward.3} parent=35 // pred_fallthru
        _
    $region36: #{upblock_forward.3} parent=5 // pred_fallthru
      _
    %p319 = scmp.le.s32.totalorder 1, %s16
    %p320 = scmp.lt.s32.totalorder %s16, 9
    %p321 = pnand %p319, %p320
    %p322 = pneg %p321
    // Predicated region
    $region45: #{upblock_forward.3} parent=5 // pred_check
      _
    $region46: #{upblock_forward.3} parent=5 // pred_check_branch
      %324 = sbr.rel (%p321) target = $region48
    $region47: #{upblock_forward.3} parent=5 // pred_region
      %s325 = ssub.s32 %s16, 1
      %p326 = scmp.lt.s32.totalorder %s26, 3
      %s327 = scalar_select %p326, %s26, 3
      %s328 = smul.addr %s327, 2
      %s329 = smul.addr %s328, 8
      %s330 = scalar_lea.vmem %s0, %s329
      %p331 = pneg %p54
      %p332 = pneg %p51
      %p333 = scmp.lt.s32.totalorder %s25, 1
      %s334 = scalar_select %p333, %s25, 1
      %s335 = smul.addr %s334, 2
      %s336 = smul.addr %s335, 8
      %s337 = scalar_lea.vmem %s1, %s336
      %p338 = pneg %p80
      %p339 = pneg %p77
      %p340 = pneg %p101
      %p341 = pneg %p98
      %p342 = pneg %p122
      %p343 = pneg %p119
      %p344 = pneg %p143
      %p345 = pneg %p140
      %p346 = pneg %p164
      %p347 = pneg %p161
      %p348 = pneg %p185
      %p349 = pneg %p182
      %p350 = pneg %p213
      %p351 = pneg %p210
      %p352 = scmp.lt.s32.totalorder %s25, 1
      %s353 = scalar_select %p352, %s25, 1
      %p354 = scmp.lt.s32.totalorder %s26, 3
      %s355 = scalar_select %p354, %s26, 3
      %s356 = smul.addr %s355, 4
      %s357 = smul.addr %s353, 16
      %s358 = sadd.s32 %s356, %s357
      %s359 = smul.addr %s358, 8
      %s360 = scalar_lea.vmem %s7, %s359
      %p361 = pneg %p241
      %p362 = pneg %p238
      %p363 = scmp.lt.s32.totalorder %s25, 1
      %s364 = scalar_select %p363, %s25, 1
      %p365 = scmp.lt.s32.totalorder %s26, 3
      %s366 = scalar_select %p365, %s26, 3
      %s367 = smul.addr %s366, 2
      %s368 = smul.addr %s364, 8
      %s369 = sadd.s32 %s367, %s368
      %s370 = smul.addr %s369, 8
      %s371 = scalar_lea.vmem %s8, %s370
      %p372 = pneg %p269
      %p373 = pneg %p266
      %p374 = scmp.lt.s32.totalorder %s25, 1
      %s375 = scalar_select %p374, %s25, 1
      %p376 = scmp.lt.s32.totalorder %s26, 3
      %s377 = scalar_select %p376, %s26, 3
      %s378 = smul.addr %s377, 2
      %s379 = smul.addr %s375, 8
      %s380 = sadd.s32 %s378, %s379
      %s381 = smul.addr %s380, 4
      %s382 = scalar_lea.vmem %s9, %s381
      %p383 = scmp.lt.s32.totalorder %s26, 3
      %s384 = scalar_select %p383, %s26, 3
      %s385 = smul.addr %s384, 2
      %s386 = smul.addr %s385, 8
      %s387 = scalar_lea.vmem %s0, %s386
      %p388 = scmp.lt.s32.totalorder %s25, 1
      %s389 = scalar_select %p388, %s25, 1
      %s390 = smul.addr %s389, 2
      %s391 = smul.addr %s390, 8
      %s392 = scalar_lea.vmem %s1, %s391
      %p393 = scmp.lt.s32.totalorder %s25, 1
      %s394 = scalar_select %p393, %s25, 1
      %p395 = scmp.lt.s32.totalorder %s26, 3
      %s396 = scalar_select %p395, %s26, 3
      %s397 = smul.addr %s396, 4
      %s398 = smul.addr %s394, 16
      %s399 = sadd.s32 %s397, %s398
      %s400 = smul.addr %s399, 8
      %s401 = scalar_lea.vmem %s7, %s400
      %p402 = scmp.lt.s32.totalorder %s25, 1
      %s403 = scalar_select %p402, %s25, 1
      %p404 = scmp.lt.s32.totalorder %s26, 3
      %s405 = scalar_select %p404, %s26, 3
      %s406 = smul.addr %s405, 2
      %s407 = smul.addr %s403, 8
      %s408 = sadd.s32 %s406, %s407
      %s409 = smul.addr %s408, 8
      %s410 = scalar_lea.vmem %s8, %s409
      %p411 = scmp.lt.s32.totalorder %s25, 1
      %s412 = scalar_select %p411, %s25, 1
      %p413 = scmp.lt.s32.totalorder %s26, 3
      %s414 = scalar_select %p413, %s26, 3
      %s415 = smul.addr %s414, 2
      %s416 = smul.addr %s412, 8
      %s417 = sadd.s32 %s415, %s416
      %s418 = smul.addr %s417, 4
      %s419 = scalar_lea.vmem %s9, %s418
      %v420 = vld [vmem:[%s387] sm:$0xff]
      %v421 = vld [vmem:[%s387 + $0x8] sm:$0xf]
      %v422 = vld [vmem:[%s392] sm:$0xff]
      %v423 = vld [vmem:[%s392 + $0x8] sm:$0xff]
      %vm424 = vcmask 130048
      %v426 = vsel %vm424, %v420, 0
      %v429 = vsel %vm424, %v421, 0
      %431 = vmatprep.subr.mxu0 0.0
      %432 = vmatpush1.msra.mxu0 %v422
      %433 = vmatprep.subr.mxu0 0.0
      %434 = vmatpush1.msra.mxu0 %v423
      %435 = vmatprep.subr.mxu0 0.0
      %436 = vmatpush1.msra.mxu0 0.0
      %437 = vmatprep.subr.mxu0 0.0
      %438 = vmatpush1.msra.mxu0 0.0
      %439 = vmatprep.subr.mxu0 0.0
      %440 = vmatpush1.msra.mxu0 0.0
      %441 = vmatprep.subr.mxu0 0.0
      %442 = vmatpush1.msra.mxu0 0.0
      %443 = vmatprep.subr.mxu0 0.0
      %444 = vmatpush1.msra.mxu0 0.0
      %445 = vmatprep.subr.mxu0 0.0
      %446 = vmatpush1.msra.mxu0 0.0
      %447 = vmatprep.subr.mxu0 0.0
      %448 = vmatpush1.msra.mxu0 0.0
      %449 = vmatprep.subr.mxu0 0.0
      %450 = vmatpush1.msra.mxu0 0.0
      %451 = vmatprep.subr.mxu0 0.0
      %452 = vmatpush1.msra.mxu0 0.0
      %453 = vmatprep.subr.mxu0 0.0
      %454 = vmatpush1.msra.mxu0 0.0
      %455 = vmatprep.subr.mxu0 0.0
      %456 = vmatpush1.msra.mxu0 0.0
      %457 = vmatprep.subr.mxu0 0.0
      %458 = vmatpush1.msra.mxu0 0.0
      %459 = vmatprep.subr.mxu0 0.0
      %460 = vmatpush1.msra.mxu0 0.0
      %461 = vmatprep.subr.mxu0 0.0
      %462 = vmatpush1.msra.mxu0 0.0
      %463 = vmatprep.subr.mxu0 0.0
      %464 = vmatpush1.msra.mxu0 0.0
      %465 = vmatprep.subr.mxu0 0.0
      %466 = vmatpush1.msra.mxu0 0.0
      %467 = vmatprep.subr.mxu0 0.0
      %468 = vmatpush1.msra.mxu0 0.0
      %469 = vmatprep.subr.mxu0 0.0
      %470 = vmatpush1.msra.mxu0 0.0
      %471 = vmatprep.subr.mxu0 0.0
      %472 = vmatpush1.msra.mxu0 0.0
      %473 = vmatprep.subr.mxu0 0.0
      %474 = vmatpush1.msra.mxu0 0.0
      %475 = vmatprep.subr.mxu0 0.0
      %476 = vmatpush1.msra.mxu0 0.0
      %477 = vmatprep.subr.mxu0 0.0
      %478 = vmatpush1.msra.mxu0 0.0
      %479 = vmatprep.subr.mxu0 0.0
      %480 = vmatpush1.msra.mxu0 0.0
      %481 = vmatprep.subr.mxu0 0.0
      %482 = vmatpush1.msra.mxu0 0.0
      %483 = vmatprep.subr.mxu0 0.0
      %484 = vmatpush1.msra.mxu0 0.0
      %485 = vmatprep.subr.mxu0 0.0
      %486 = vmatpush1.msra.mxu0 0.0
      %487 = vmatprep.subr.mxu0 0.0
      %488 = vmatpush1.msra.mxu0 0.0
      %489 = vmatprep.subr.mxu0 0.0
      %490 = vmatpush1.msra.mxu0 0.0
      %491 = vmatprep.subr.mxu0 0.0
      %492 = vmatpush1.msra.mxu0 0.0
      %493 = vmatprep.subr.mxu0 0.0
      %494 = vmatpush1.msra.mxu0 0.0
      %495 = vmatprep.mubr.f32.mxu0 0.0
      %496 = vmatmul.mubr.f32.gmra.mrb[0].mxu0 %v426
      %v497 = vpop.f32.mrb[0].mxu0
      %v498 = vadd.f32 0.0, %v497
      %v499 = vpop.f32.mrb[0].mxu0
      %500 = vmatprep.mubr.f32.mxu0 0.0
      %501 = vmatmul.mubr.f32.gmra.mrb[0].mxu0 %v429
      %v502 = vpop.f32.mrb[0].mxu0
      %v503 = vadd.f32 0.0, %v502
      %v504 = vpop.f32.mrb[0].mxu0
      %505 = vdwg.mxu0
      %v506 = vld [vmem:[%s2] sm:$0xff]
      %v507 = vld [vmem:[%s2 + $0x8] sm:$0xff]
      %v508 = vld [vmem:[%s2 + $0x10] sm:$0xff]
      %v509 = vld [vmem:[%s2 + $0x18] sm:$0xff]
      %v510 = vld [vmem:[%s2 + $0x20] sm:$0xff]
      %v511 = vld [vmem:[%s2 + $0x28] sm:$0xff]
      %v512 = vld [vmem:[%s2 + $0x30] sm:$0xff]
      %v513 = vld [vmem:[%s2 + $0x38] sm:$0xff]
      %vm514 = vcmask 523264
      %v516 = vsel %vm514, %v498, 0
      %v519 = vsel %vm514, %v503, 0
      %521 = vmatprep.subr.mxu0 0.0
      %522 = vmatpush1.msra.mxu0 %v506
      %523 = vmatprep.subr.mxu0 0.0
      %524 = vmatpush1.msra.mxu0 %v507
      %525 = vmatprep.subr.mxu0 0.0
      %526 = vmatpush1.msra.mxu0 %v508
      %527 = vmatprep.subr.mxu0 0.0
      %528 = vmatpush1.msra.mxu0 %v509
      %529 = vmatprep.subr.mxu0 0.0
      %530 = vmatpush1.msra.mxu0 %v510
      %531 = vmatprep.subr.mxu0 0.0
      %532 = vmatpush1.msra.mxu0 %v511
      %533 = vmatprep.subr.mxu0 0.0
      %534 = vmatpush1.msra.mxu0 %v512
      %535 = vmatprep.subr.mxu0 0.0
      %536 = vmatpush1.msra.mxu0 %v513
      %537 = vmatprep.subr.mxu0 0.0
      %538 = vmatpush1.msra.mxu0 0.0
      %539 = vmatprep.subr.mxu0 0.0
      %540 = vmatpush1.msra.mxu0 0.0
      %541 = vmatprep.subr.mxu0 0.0
      %542 = vmatpush1.msra.mxu0 0.0
      %543 = vmatprep.subr.mxu0 0.0
      %544 = vmatpush1.msra.mxu0 0.0
      %545 = vmatprep.subr.mxu0 0.0
      %546 = vmatpush1.msra.mxu0 0.0
      %547 = vmatprep.subr.mxu0 0.0
      %548 = vmatpush1.msra.mxu0 0.0
      %549 = vmatprep.subr.mxu0 0.0
      %550 = vmatpush1.msra.mxu0 0.0
      %551 = vmatprep.subr.mxu0 0.0
      %552 = vmatpush1.msra.mxu0 0.0
      %553 = vmatprep.subr.mxu0 0.0
      %554 = vmatpush1.msra.mxu0 0.0
      %555 = vmatprep.subr.mxu0 0.0
      %556 = vmatpush1.msra.mxu0 0.0
      %557 = vmatprep.subr.mxu0 0.0
      %558 = vmatpush1.msra.mxu0 0.0
      %559 = vmatprep.subr.mxu0 0.0
      %560 = vmatpush1.msra.mxu0 0.0
      %561 = vmatprep.subr.mxu0 0.0
      %562 = vmatpush1.msra.mxu0 0.0
      %563 = vmatprep.subr.mxu0 0.0
      %564 = vmatpush1.msra.mxu0 0.0
      %565 = vmatprep.subr.mxu0 0.0
      %566 = vmatpush1.msra.mxu0 0.0
      %567 = vmatprep.subr.mxu0 0.0
      %568 = vmatpush1.msra.mxu0 0.0
      %569 = vmatprep.subr.mxu0 0.0
      %570 = vmatpush1.msra.mxu0 0.0
      %571 = vmatprep.subr.mxu0 0.0
      %572 = vmatpush1.msra.mxu0 0.0
      %573 = vmatprep.subr.mxu0 0.0
      %574 = vmatpush1.msra.mxu0 0.0
      %575 = vmatprep.subr.mxu0 0.0
      %576 = vmatpush1.msra.mxu0 0.0
      %577 = vmatprep.subr.mxu0 0.0
      %578 = vmatpush1.msra.mxu0 0.0
      %579 = vmatprep.subr.mxu0 0.0
      %580 = vmatpush1.msra.mxu0 0.0
      %581 = vmatprep.subr.mxu0 0.0
      %582 = vmatpush1.msra.mxu0 0.0
      %583 = vmatprep.subr.mxu0 0.0
      %584 = vmatpush1.msra.mxu0 0.0
      %585 = vmatprep.mubr.f32.mxu0 0.0
      %586 = vmatmul.mubr.f32.gmra.mrb[0].mxu0 %v516
      %v587 = vpop.f32.mrb[0].mxu0
      %v588 = vadd.f32 0.0, %v587
      %v589 = vpop.f32.mrb[0].mxu0
      %590 = vmatprep.mubr.f32.mxu0 0.0
      %591 = vmatmul.mubr.f32.gmra.mrb[0].mxu0 %v519
      %v592 = vpop.f32.mrb[0].mxu0
      %v593 = vadd.f32 0.0, %v592
      %v594 = vpop.f32.mrb[0].mxu0
      %595 = vdwg.mxu0
      %v596 = vld [vmem:[%s3] sm:$0xff]
      %v597 = vld [vmem:[%s3 + $0x8] sm:$0xff]
      %v598 = vld [vmem:[%s3 + $0x10] sm:$0xff]
      %v599 = vld [vmem:[%s3 + $0x18] sm:$0xff]
      %v600 = vld [vmem:[%s3 + $0x20] sm:$0xff]
      %v601 = vld [vmem:[%s3 + $0x28] sm:$0xff]
      %v602 = vld [vmem:[%s3 + $0x30] sm:$0xff]
      %v603 = vld [vmem:[%s3 + $0x38] sm:$0xff]
      %v604 = vld [vmem:[%s3 + $0x40] sm:$0xff]
      %v605 = vld [vmem:[%s3 + $0x48] sm:$0xff]
      %v606 = vld [vmem:[%s3 + $0x50] sm:$0xff]
      %v607 = vld [vmem:[%s3 + $0x58] sm:$0xff]
      %v608 = vld [vmem:[%s3 + $0x60] sm:$0xff]
      %v609 = vld [vmem:[%s3 + $0x68] sm:$0xff]
      %v610 = vld [vmem:[%s3 + $0x70] sm:$0xff]
      %v611 = vld [vmem:[%s3 + $0x78] sm:$0xff]
      %v612 = vld [vmem:[%s3 + $0x80] sm:$0xff]
      %v613 = vld [vmem:[%s3 + $0x88] sm:$0xff]
      %v614 = vld [vmem:[%s3 + $0x90] sm:$0xff]
      %v615 = vld [vmem:[%s3 + $0x98] sm:$0xff]
      %v616 = vld [vmem:[%s3 + $0xa0] sm:$0xff]
      %v617 = vld [vmem:[%s3 + $0xa8] sm:$0xff]
      %v618 = vld [vmem:[%s3 + $0xb0] sm:$0xff]
      %v619 = vld [vmem:[%s3 + $0xb8] sm:$0xff]
      %v620 = vld [vmem:[%s3 + $0xc0] sm:$0xff]
      %v621 = vld [vmem:[%s3 + $0xc8] sm:$0xff]
      %v622 = vld [vmem:[%s3 + $0xd0] sm:$0xff]
      %v623 = vld [vmem:[%s3 + $0xd8] sm:$0xff]
      %v624 = vld [vmem:[%s3 + $0xe0] sm:$0xff]
      %v625 = vld [vmem:[%s3 + $0xe8] sm:$0xff]
      %v626 = vld [vmem:[%s3 + $0xf0] sm:$0xff]
      %v627 = vld [vmem:[%s3 + $0xf8] sm:$0xff]
      %s628 = scalar_lea.vmem %s3, 256
      %v629 = vld [vmem:[%s628] sm:$0xff]
      %v630 = vld [vmem:[%s628 + $0x8] sm:$0xff]
      %v631 = vld [vmem:[%s628 + $0x10] sm:$0xff]
      %v632 = vld [vmem:[%s628 + $0x18] sm:$0xff]
      %v633 = vld [vmem:[%s628 + $0x20] sm:$0xff]
      %v634 = vld [vmem:[%s628 + $0x28] sm:$0xff]
      %v635 = vld [vmem:[%s628 + $0x30] sm:$0xff]
      %v636 = vld [vmem:[%s628 + $0x38] sm:$0xff]
      %v637 = vld [vmem:[%s628 + $0x40] sm:$0xff]
      %v638 = vld [vmem:[%s628 + $0x48] sm:$0xff]
      %v639 = vld [vmem:[%s628 + $0x50] sm:$0xff]
      %v640 = vld [vmem:[%s628 + $0x58] sm:$0xff]
      %v641 = vld [vmem:[%s628 + $0x60] sm:$0xff]
      %v642 = vld [vmem:[%s628 + $0x68] sm:$0xff]
      %v643 = vld [vmem:[%s628 + $0x70] sm:$0xff]
      %v644 = vld [vmem:[%s628 + $0x78] sm:$0xff]
      %v645 = vld [vmem:[%s628 + $0x80] sm:$0xff]
      %v646 = vld [vmem:[%s628 + $0x88] sm:$0xff]
      %v647 = vld [vmem:[%s628 + $0x90] sm:$0xff]
      %v648 = vld [vmem:[%s628 + $0x98] sm:$0xff]
      %v649 = vld [vmem:[%s628 + $0xa0] sm:$0xff]
      %v650 = vld [vmem:[%s628 + $0xa8] sm:$0xff]
      %v651 = vld [vmem:[%s628 + $0xb0] sm:$0xff]
      %v652 = vld [vmem:[%s628 + $0xb8] sm:$0xff]
      %v653 = vld [vmem:[%s628 + $0xc0] sm:$0xff]
      %v654 = vld [vmem:[%s628 + $0xc8] sm:$0xff]
      %v655 = vld [vmem:[%s628 + $0xd0] sm:$0xff]
      %v656 = vld [vmem:[%s628 + $0xd8] sm:$0xff]
      %v657 = vld [vmem:[%s628 + $0xe0] sm:$0xff]
      %v658 = vld [vmem:[%s628 + $0xe8] sm:$0xff]
      %v659 = vld [vmem:[%s628 + $0xf0] sm:$0xff]
      %v660 = vld [vmem:[%s628 + $0xf8] sm:$0xff]
      %vm663 = vcmask 1046528
      %v664 = vrot.slane %v588, 1
      %v665 = vrot.slane %v593, 1
      %v666 = vsel %vm663, %v664, %v665
      %669 = vmatprep.subr.mxu0 %v630
      %670 = vmatpush1.msra.mxu0 %v629
      %671 = vmatprep.subr.mxu0 %v632
      %672 = vmatpush1.msra.mxu0 %v631
      %673 = vmatprep.subr.mxu0 %v634
      %674 = vmatpush1.msra.mxu0 %v633
      %675 = vmatprep.subr.mxu0 %v636
      %676 = vmatpush1.msra.mxu0 %v635
      %677 = vmatprep.subr.mxu0 %v638
      %678 = vmatpush1.msra.mxu0 %v637
      %679 = vmatprep.subr.mxu0 %v640
      %680 = vmatpush1.msra.mxu0 %v639
      %681 = vmatprep.subr.mxu0 %v642
      %682 = vmatpush1.msra.mxu0 %v641
      %683 = vmatprep.subr.mxu0 %v644
      %684 = vmatpush1.msra.mxu0 %v643
      %685 = vmatprep.subr.mxu0 %v646
      %686 = vmatpush1.msra.mxu0 %v645
      %687 = vmatprep.subr.mxu0 %v648
      %688 = vmatpush1.msra.mxu0 %v647
      %689 = vmatprep.subr.mxu0 %v650
      %690 = vmatpush1.msra.mxu0 %v649
      %691 = vmatprep.subr.mxu0 %v652
      %692 = vmatpush1.msra.mxu0 %v651
      %693 = vmatprep.subr.mxu0 %v654
      %694 = vmatpush1.msra.mxu0 %v653
      %695 = vmatprep.subr.mxu0 %v656
      %696 = vmatpush1.msra.mxu0 %v655
      %697 = vmatprep.subr.mxu0 %v658
      %698 = vmatpush1.msra.mxu0 %v657
      %699 = vmatprep.subr.mxu0 %v660
      %700 = vmatpush1.msra.mxu0 %v659
      %701 = vmatprep.subr.mxu0 0.0
      %702 = vmatpush1.msra.mxu0 0.0
      %703 = vmatprep.subr.mxu0 0.0
      %704 = vmatpush1.msra.mxu0 0.0
      %705 = vmatprep.subr.mxu0 0.0
      %706 = vmatpush1.msra.mxu0 0.0
      %707 = vmatprep.subr.mxu0 0.0
      %708 = vmatpush1.msra.mxu0 0.0
      %709 = vmatprep.subr.mxu0 0.0
      %710 = vmatpush1.msra.mxu0 0.0
      %711 = vmatprep.subr.mxu0 0.0
      %712 = vmatpush1.msra.mxu0 0.0
      %713 = vmatprep.subr.mxu0 0.0
      %714 = vmatpush1.msra.mxu0 0.0
      %715 = vmatprep.subr.mxu0 0.0
      %716 = vmatpush1.msra.mxu0 0.0
      %717 = vmatprep.subr.mxu0 0.0
      %718 = vmatpush1.msra.mxu0 0.0
      %719 = vmatprep.subr.mxu0 0.0
      %720 = vmatpush1.msra.mxu0 0.0
      %721 = vmatprep.subr.mxu0 0.0
      %722 = vmatpush1.msra.mxu0 0.0
      %723 = vmatprep.subr.mxu0 0.0
      %724 = vmatpush1.msra.mxu0 0.0
      %725 = vmatprep.subr.mxu0 0.0
      %726 = vmatpush1.msra.mxu0 0.0
      %727 = vmatprep.subr.mxu0 0.0
      %728 = vmatpush1.msra.mxu0 0.0
      %729 = vmatprep.subr.mxu0 0.0
      %730 = vmatpush1.msra.mxu0 0.0
      %731 = vmatprep.subr.mxu0 0.0
      %732 = vmatpush1.msra.mxu0 0.0
      %733 = vmatprep.mubr.f32.mxu0 0.0
      %734 = vmatmul.mubr.f32.gmra.mrb[0].mxu0 %v666
      %v735 = vpop.f32.mrb[0].mxu0
      %v736 = vadd.f32 0.0, %v735
      %v737 = vpop.f32.mrb[0].mxu0
      %v738 = vadd.f32 0.0, %v737
      %739 = vmatprep.mubr.f32.mxu0 0.0
      %740 = vmatmul.mubr.f32.gmra.mrb[0].mxu0 %v665
      %v741 = vpop.f32.mrb[0].mxu0
      %v742 = vadd.f32 0.0, %v741
      %v743 = vpop.f32.mrb[0].mxu0
      %v744 = vadd.f32 0.0, %v743
      %745 = vdwg.mxu0
      %746 = vmatprep.subr.mxu0 %v597
      %747 = vmatpush1.msra.mxu0 %v596
      %748 = vmatprep.subr.mxu0 %v599
      %749 = vmatpush1.msra.mxu0 %v598
      %750 = vmatprep.subr.mxu0 %v601
      %751 = vmatpush1.msra.mxu0 %v600
      %752 = vmatprep.subr.mxu0 %v603
      %753 = vmatpush1.msra.mxu0 %v602
      %754 = vmatprep.subr.mxu0 %v605
      %755 = vmatpush1.msra.mxu0 %v604
      %756 = vmatprep.subr.mxu0 %v607
      %757 = vmatpush1.msra.mxu0 %v606
      %758 = vmatprep.subr.mxu0 %v609
      %759 = vmatpush1.msra.mxu0 %v608
      %760 = vmatprep.subr.mxu0 %v611
      %761 = vmatpush1.msra.mxu0 %v610
      %762 = vmatprep.subr.mxu0 %v613
      %763 = vmatpush1.msra.mxu0 %v612
      %764 = vmatprep.subr.mxu0 %v615
      %765 = vmatpush1.msra.mxu0 %v614
      %766 = vmatprep.subr.mxu0 %v617
      %767 = vmatpush1.msra.mxu0 %v616
      %768 = vmatprep.subr.mxu0 %v619
      %769 = vmatpush1.msra.mxu0 %v618
      %770 = vmatprep.subr.mxu0 %v621
      %771 = vmatpush1.msra.mxu0 %v620
      %772 = vmatprep.subr.mxu0 %v623
      %773 = vmatpush1.msra.mxu0 %v622
      %774 = vmatprep.subr.mxu0 %v625
      %775 = vmatpush1.msra.mxu0 %v624
      %776 = vmatprep.subr.mxu0 %v627
      %777 = vmatpush1.msra.mxu0 %v626
      %778 = vmatprep.subr.mxu0 0.0
      %779 = vmatpush1.msra.mxu0 0.0
      %780 = vmatprep.subr.mxu0 0.0
      %781 = vmatpush1.msra.mxu0 0.0
      %782 = vmatprep.subr.mxu0 0.0
      %783 = vmatpush1.msra.mxu0 0.0
      %784 = vmatprep.subr.mxu0 0.0
      %785 = vmatpush1.msra.mxu0 0.0
      %786 = vmatprep.subr.mxu0 0.0
      %787 = vmatpush1.msra.mxu0 0.0
      %788 = vmatprep.subr.mxu0 0.0
      %789 = vmatpush1.msra.mxu0 0.0
      %790 = vmatprep.subr.mxu0 0.0
      %791 = vmatpush1.msra.mxu0 0.0
      %792 = vmatprep.subr.mxu0 0.0
      %793 = vmatpush1.msra.mxu0 0.0
      %794 = vmatprep.subr.mxu0 0.0
      %795 = vmatpush1.msra.mxu0 0.0
      %796 = vmatprep.subr.mxu0 0.0
      %797 = vmatpush1.msra.mxu0 0.0
      %798 = vmatprep.subr.mxu0 0.0
      %799 = vmatpush1.msra.mxu0 0.0
      %800 = vmatprep.subr.mxu0 0.0
      %801 = vmatpush1.msra.mxu0 0.0
      %802 = vmatprep.subr.mxu0 0.0
      %803 = vmatpush1.msra.mxu0 0.0
      %804 = vmatprep.subr.mxu0 0.0
      %805 = vmatpush1.msra.mxu0 0.0
      %806 = vmatprep.subr.mxu0 0.0
      %807 = vmatpush1.msra.mxu0 0.0
      %808 = vmatprep.subr.mxu0 0.0
      %809 = vmatpush1.msra.mxu0 0.0
      %810 = vmatprep.mubr.f32.mxu0 0.0
      %811 = vmatmul.mubr.f32.gmra.mrb[0].mxu0 %v588
      %v812 = vpop.f32.mrb[0].mxu0
      %v813 = vadd.f32 %v736, %v812
      %v814 = vpop.f32.mrb[0].mxu0
      %v815 = vadd.f32 %v738, %v814
      %816 = vmatprep.mubr.f32.mxu0 0.0
      %817 = vmatmul.mubr.f32.gmra.mrb[0].mxu0 %v593
      %v818 = vpop.f32.mrb[0].mxu0
      %v819 = vadd.f32 %v742, %v818
      %v820 = vpop.f32.mrb[0].mxu0
      %v821 = vadd.f32 %v744, %v820
      %822 = vdwg.mxu0
      %s823 = scalar_lea.vmem %s3, 512
      %v824 = vld [vmem:[%s823] sm:$0xff]
      %v825 = vld [vmem:[%s823 + $0x8] sm:$0xff]
      %v826 = vld [vmem:[%s823 + $0x10] sm:$0xff]
      %v827 = vld [vmem:[%s823 + $0x18] sm:$0xff]
      %v828 = vld [vmem:[%s823 + $0x20] sm:$0xff]
      %v829 = vld [vmem:[%s823 + $0x28] sm:$0xff]
      %v830 = vld [vmem:[%s823 + $0x30] sm:$0xff]
      %v831 = vld [vmem:[%s823 + $0x38] sm:$0xff]
      %v832 = vld [vmem:[%s823 + $0x40] sm:$0xff]
      %v833 = vld [vmem:[%s823 + $0x48] sm:$0xff]
      %v834 = vld [vmem:[%s823 + $0x50] sm:$0xff]
      %v835 = vld [vmem:[%s823 + $0x58] sm:$0xff]
      %v836 = vld [vmem:[%s823 + $0x60] sm:$0xff]
      %v837 = vld [vmem:[%s823 + $0x68] sm:$0xff]
      %v838 = vld [vmem:[%s823 + $0x70] sm:$0xff]
      %v839 = vld [vmem:[%s823 + $0x78] sm:$0xff]
      %v840 = vld [vmem:[%s823 + $0x80] sm:$0xff]
      %v841 = vld [vmem:[%s823 + $0x88] sm:$0xff]
      %v842 = vld [vmem:[%s823 + $0x90] sm:$0xff]
      %v843 = vld [vmem:[%s823 + $0x98] sm:$0xff]
      %v844 = vld [vmem:[%s823 + $0xa0] sm:$0xff]
      %v845 = vld [vmem:[%s823 + $0xa8] sm:$0xff]
      %v846 = vld [vmem:[%s823 + $0xb0] sm:$0xff]
      %v847 = vld [vmem:[%s823 + $0xb8] sm:$0xff]
      %v848 = vld [vmem:[%s823 + $0xc0] sm:$0xff]
      %v849 = vld [vmem:[%s823 + $0xc8] sm:$0xff]
      %v850 = vld [vmem:[%s823 + $0xd0] sm:$0xff]
      %v851 = vld [vmem:[%s823 + $0xd8] sm:$0xff]
      %v852 = vld [vmem:[%s823 + $0xe0] sm:$0xff]
      %v853 = vld [vmem:[%s823 + $0xe8] sm:$0xff]
      %v854 = vld [vmem:[%s823 + $0xf0] sm:$0xff]
      %v855 = vld [vmem:[%s823 + $0xf8] sm:$0xff]
      %vm856 = vcmask 1045504
      %v857 = vrot.slane %v588, 2
      %v858 = vrot.slane %v593, 2
      %v859 = vsel %vm856, %v857, %v858
      %862 = vmatprep.subr.mxu0 %v825
      %863 = vmatpush1.msra.mxu0 %v824
      %864 = vmatprep.subr.mxu0 %v827
      %865 = vmatpush1.msra.mxu0 %v826
      %866 = vmatprep.subr.mxu0 %v829
      %867 = vmatpush1.msra.mxu0 %v828
      %868 = vmatprep.subr.mxu0 %v831
      %869 = vmatpush1.msra.mxu0 %v830
      %870 = vmatprep.subr.mxu0 %v833
      %871 = vmatpush1.msra.mxu0 %v832
      %872 = vmatprep.subr.mxu0 %v835
      %873 = vmatpush1.msra.mxu0 %v834
      %874 = vmatprep.subr.mxu0 %v837
      %875 = vmatpush1.msra.mxu0 %v836
      %876 = vmatprep.subr.mxu0 %v839
      %877 = vmatpush1.msra.mxu0 %v838
      %878 = vmatprep.subr.mxu0 %v841
      %879 = vmatpush1.msra.mxu0 %v840
      %880 = vmatprep.subr.mxu0 %v843
      %881 = vmatpush1.msra.mxu0 %v842
      %882 = vmatprep.subr.mxu0 %v845
      %883 = vmatpush1.msra.mxu0 %v844
      %884 = vmatprep.subr.mxu0 %v847
      %885 = vmatpush1.msra.mxu0 %v846
      %886 = vmatprep.subr.mxu0 %v849
      %887 = vmatpush1.msra.mxu0 %v848
      %888 = vmatprep.subr.mxu0 %v851
      %889 = vmatpush1.msra.mxu0 %v850
      %890 = vmatprep.subr.mxu0 %v853
      %891 = vmatpush1.msra.mxu0 %v852
      %892 = vmatprep.subr.mxu0 %v855
      %893 = vmatpush1.msra.mxu0 %v854
      %894 = vmatprep.subr.mxu0 0.0
      %895 = vmatpush1.msra.mxu0 0.0
      %896 = vmatprep.subr.mxu0 0.0
      %897 = vmatpush1.msra.mxu0 0.0
      %898 = vmatprep.subr.mxu0 0.0
      %899 = vmatpush1.msra.mxu0 0.0
      %900 = vmatprep.subr.mxu0 0.0
      %901 = vmatpush1.msra.mxu0 0.0
      %902 = vmatprep.subr.mxu0 0.0
      %903 = vmatpush1.msra.mxu0 0.0
      %904 = vmatprep.subr.mxu0 0.0
      %905 = vmatpush1.msra.mxu0 0.0
      %906 = vmatprep.subr.mxu0 0.0
      %907 = vmatpush1.msra.mxu0 0.0
      %908 = vmatprep.subr.mxu0 0.0
      %909 = vmatpush1.msra.mxu0 0.0
      %910 = vmatprep.subr.mxu0 0.0
      %911 = vmatpush1.msra.mxu0 0.0
      %912 = vmatprep.subr.mxu0 0.0
      %913 = vmatpush1.msra.mxu0 0.0
      %914 = vmatprep.subr.mxu0 0.0
      %915 = vmatpush1.msra.mxu0 0.0
      %916 = vmatprep.subr.mxu0 0.0
      %917 = vmatpush1.msra.mxu0 0.0
      %918 = vmatprep.subr.mxu0 0.0
      %919 = vmatpush1.msra.mxu0 0.0
      %920 = vmatprep.subr.mxu0 0.0
      %921 = vmatpush1.msra.mxu0 0.0
      %922 = vmatprep.subr.mxu0 0.0
      %923 = vmatpush1.msra.mxu0 0.0
      %924 = vmatprep.subr.mxu0 0.0
      %925 = vmatpush1.msra.mxu0 0.0
      %926 = vmatprep.mubr.f32.mxu0 0.0
      %927 = vmatmul.mubr.f32.gmra.mrb[0].mxu0 %v859
      %v928 = vpop.f32.mrb[0].mxu0
      %v929 = vadd.f32 0.0, %v928
      %v930 = vpop.f32.mrb[0].mxu0
      %v931 = vadd.f32 0.0, %v930
      %932 = vmatprep.mubr.f32.mxu0 0.0
      %933 = vmatmul.mubr.f32.gmra.mrb[0].mxu0 %v858
      %v934 = vpop.f32.mrb[0].mxu0
      %v935 = vadd.f32 0.0, %v934
      %v936 = vpop.f32.mrb[0].mxu0
      %v937 = vadd.f32 0.0, %v936
      %938 = vdwg.mxu0
      %v939 = vadd.f32 %v813, %v929
      %v940 = vadd.f32 %v815, %v931
      %v941 = vadd.f32 %v819, %v935
      %v942 = vadd.f32 %v821, %v937
      %v943 = vld [vmem:[%s5] sm:$0x3]
      %v945 = vlaneseq
      %v946 = vshrl.u32 %v945, 7
      %v947 = vsub.s32 0, %v946
      %v948 = vrot.slane %v943, %v947
      %v949 = vlaneseq
      %v950 = vshrl.u32 %v949, 7
      %v951 = vsub.s32 1, %v950
      %v952 = vrot.slane %v943, %v951
      %v955 = vadd.f32 %v939, %v948
      %v956 = vadd.f32 %v940, %v952
      %v957 = vadd.f32 %v941, %v948
      %v958 = vadd.f32 %v942, %v952
      %v959 = vld [vmem:[%s4] sm:$0xff]
      %v960 = vld [vmem:[%s4 + $0x8] sm:$0xff]
      %v961 = vld [vmem:[%s4 + $0x10] sm:$0xff]
      %v962 = vld [vmem:[%s4 + $0x18] sm:$0xff]
      %v963 = vld [vmem:[%s4 + $0x20] sm:$0xff]
      %v964 = vld [vmem:[%s4 + $0x28] sm:$0xff]
      %v965 = vld [vmem:[%s4 + $0x30] sm:$0xff]
      %v966 = vld [vmem:[%s4 + $0x38] sm:$0xff]
      %v967 = vld [vmem:[%s4 + $0x40] sm:$0xff]
      %v968 = vld [vmem:[%s4 + $0x48] sm:$0xff]
      %v969 = vld [vmem:[%s4 + $0x50] sm:$0xff]
      %v970 = vld [vmem:[%s4 + $0x58] sm:$0xff]
      %v971 = vld [vmem:[%s4 + $0x60] sm:$0xff]
      %v972 = vld [vmem:[%s4 + $0x68] sm:$0xff]
      %v973 = vld [vmem:[%s4 + $0x70] sm:$0xff]
      %v974 = vld [vmem:[%s4 + $0x78] sm:$0xff]
      %v975 = vld [vmem:[%s4 + $0x80] sm:$0xff]
      %v976 = vld [vmem:[%s4 + $0x88] sm:$0xff]
      %v977 = vld [vmem:[%s4 + $0x90] sm:$0xff]
      %v978 = vld [vmem:[%s4 + $0x98] sm:$0xff]
      %v979 = vld [vmem:[%s4 + $0xa0] sm:$0xff]
      %v980 = vld [vmem:[%s4 + $0xa8] sm:$0xff]
      %v981 = vld [vmem:[%s4 + $0xb0] sm:$0xff]
      %v982 = vld [vmem:[%s4 + $0xb8] sm:$0xff]
      %v983 = vld [vmem:[%s4 + $0xc0] sm:$0xff]
      %v984 = vld [vmem:[%s4 + $0xc8] sm:$0xff]
      %v985 = vld [vmem:[%s4 + $0xd0] sm:$0xff]
      %v986 = vld [vmem:[%s4 + $0xd8] sm:$0xff]
      %v987 = vld [vmem:[%s4 + $0xe0] sm:$0xff]
      %v988 = vld [vmem:[%s4 + $0xe8] sm:$0xff]
      %v989 = vld [vmem:[%s4 + $0xf0] sm:$0xff]
      %v990 = vld [vmem:[%s4 + $0xf8] sm:$0xff]
      %v991 = vld [vmem:[%s6] sm:$0x3]
      %v993 = vlaneseq
      %v994 = vshrl.u32 %v993, 7
      %v995 = vsub.s32 0, %v994
      %v996 = vrot.slane %v991, %v995
      %v997 = vlaneseq
      %v998 = vshrl.u32 %v997, 7
      %v999 = vsub.s32 1, %v998
      %v1000 = vrot.slane %v991, %v999
      %1003 = vmatprep.subr.mxu0 %v960
      %1004 = vmatpush1.msra.mxu0 %v959
      %1005 = vmatprep.subr.mxu0 %v962
      %1006 = vmatpush1.msra.mxu0 %v961
      %1007 = vmatprep.subr.mxu0 %v964
      %1008 = vmatpush1.msra.mxu0 %v963
      %1009 = vmatprep.subr.mxu0 %v966
      %1010 = vmatpush1.msra.mxu0 %v965
      %1011 = vmatprep.subr.mxu0 %v968
      %1012 = vmatpush1.msra.mxu0 %v967
      %1013 = vmatprep.subr.mxu0 %v970
      %1014 = vmatpush1.msra.mxu0 %v969
      %1015 = vmatprep.subr.mxu0 %v972
      %1016 = vmatpush1.msra.mxu0 %v971
      %1017 = vmatprep.subr.mxu0 %v974
      %1018 = vmatpush1.msra.mxu0 %v973
      %1019 = vmatprep.subr.mxu0 %v976
      %1020 = vmatpush1.msra.mxu0 %v975
      %1021 = vmatprep.subr.mxu0 %v978
      %1022 = vmatpush1.msra.mxu0 %v977
      %1023 = vmatprep.subr.mxu0 %v980
      %1024 = vmatpush1.msra.mxu0 %v979
      %1025 = vmatprep.subr.mxu0 %v982
      %1026 = vmatpush1.msra.mxu0 %v981
      %1027 = vmatprep.subr.mxu0 %v984
      %1028 = vmatpush1.msra.mxu0 %v983
      %1029 = vmatprep.subr.mxu0 %v986
      %1030 = vmatpush1.msra.mxu0 %v985
      %1031 = vmatprep.subr.mxu0 %v988
      %1032 = vmatpush1.msra.mxu0 %v987
      %1033 = vmatprep.subr.mxu0 %v990
      %1034 = vmatpush1.msra.mxu0 %v989
      %1035 = vmatprep.subr.mxu0 0.0
      %1036 = vmatpush1.msra.mxu0 0.0
      %1037 = vmatprep.subr.mxu0 0.0
      %1038 = vmatpush1.msra.mxu0 0.0
      %1039 = vmatprep.subr.mxu0 0.0
      %1040 = vmatpush1.msra.mxu0 0.0
      %1041 = vmatprep.subr.mxu0 0.0
      %1042 = vmatpush1.msra.mxu0 0.0
      %1043 = vmatprep.subr.mxu0 0.0
      %1044 = vmatpush1.msra.mxu0 0.0
      %1045 = vmatprep.subr.mxu0 0.0
      %1046 = vmatpush1.msra.mxu0 0.0
      %1047 = vmatprep.subr.mxu0 0.0
      %1048 = vmatpush1.msra.mxu0 0.0
      %1049 = vmatprep.subr.mxu0 0.0
      %1050 = vmatpush1.msra.mxu0 0.0
      %1051 = vmatprep.subr.mxu0 0.0
      %1052 = vmatpush1.msra.mxu0 0.0
      %1053 = vmatprep.subr.mxu0 0.0
      %1054 = vmatpush1.msra.mxu0 0.0
      %1055 = vmatprep.subr.mxu0 0.0
      %1056 = vmatpush1.msra.mxu0 0.0
      %1057 = vmatprep.subr.mxu0 0.0
      %1058 = vmatpush1.msra.mxu0 0.0
      %1059 = vmatprep.subr.mxu0 0.0
      %1060 = vmatpush1.msra.mxu0 0.0
      %1061 = vmatprep.subr.mxu0 0.0
      %1062 = vmatpush1.msra.mxu0 0.0
      %1063 = vmatprep.subr.mxu0 0.0
      %1064 = vmatpush1.msra.mxu0 0.0
      %1065 = vmatprep.subr.mxu0 0.0
      %1066 = vmatpush1.msra.mxu0 0.0
      %1067 = vmatprep.mubr.f32.mxu0 0.0
      %1068 = vmatmul.mubr.f32.gmra.mrb[0].mxu0 %v859
      %v1069 = vpop.f32.mrb[0].mxu0
      %v1070 = vadd.f32 %v996, %v1069
      %v1071 = vpop.f32.mrb[0].mxu0
      %v1072 = vadd.f32 %v1000, %v1071
      %1073 = vdwg.mxu0
      %1074 = vst [vmem:[%s401] sm:$0xff] %v955
      %1075 = vst [vmem:[%s401 + $0x8] sm:$0xff] %v956
      %1076 = vst [vmem:[%s401 + $0x10] sm:$0x3] %v957
      %1077 = vst [vmem:[%s401 + $0x18] sm:$0x3] %v958
      %1078 = vst [vmem:[%s410] sm:$0xff] %v1070
      %1079 = vst [vmem:[%s410 + $0x8] sm:$0xff] %v1072
      %v1084 = vrot.slane %v955, 1
      %v1085 = vrot.slane %v957, 1
      %v1086 = vsel %vm663, %v1084, %v1085
      %v1087 = vrot.slane %v956, 1
      %v1088 = vrot.slane %v958, 1
      %v1089 = vsel %vm663, %v1087, %v1088
      %v1092 = vrot.slane %v1086, 4
      %v1093 = vadd.f32 %v1086, %v1092
      %v1094 = vrot.slane %v1093, 2
      %v1095 = vadd.f32 %v1093, %v1094
      %v1096 = vrot.slane %v1095, 1
      %v1097 = vadd.f32 %v1095, %v1096
      %v1098 = vrot.slane %v1089, 4
      %v1099 = vadd.f32 %v1089, %v1098
      %v1100 = vrot.slane %v1099, 2
      %v1101 = vadd.f32 %v1099, %v1100
      %v1102 = vrot.slane %v1101, 1
      %v1103 = vadd.f32 %v1101, %v1102
      %v1104 = vmul.f32 %v955, %v955
      %v1105 = vmul.f32 %v956, %v956
      %v1106 = vmul.f32 %v957, %v957
      %v1107 = vmul.f32 %v958, %v958
      %v1112 = vrot.slane %v1104, 1
      %v1113 = vrot.slane %v1106, 1
      %v1114 = vsel %vm663, %v1112, %v1113
      %v1115 = vrot.slane %v1105, 1
      %v1116 = vrot.slane %v1107, 1
      %v1117 = vsel %vm663, %v1115, %v1116
      %v1120 = vrot.slane %v1114, 4
      %v1121 = vadd.f32 %v1114, %v1120
      %v1122 = vrot.slane %v1121, 2
      %v1123 = vadd.f32 %v1121, %v1122
      %v1124 = vrot.slane %v1123, 1
      %v1125 = vadd.f32 %v1123, %v1124
      %v1126 = vrot.slane %v1117, 4
      %v1127 = vadd.f32 %v1117, %v1126
      %v1128 = vrot.slane %v1127, 2
      %v1129 = vadd.f32 %v1127, %v1128
      %v1130 = vrot.slane %v1129, 1
      %v1131 = vadd.f32 %v1129, %v1130
      %v1132 = vrot.slane %v1070, 4
      %v1133 = vadd.f32 %v1070, %v1132
      %v1134 = vrot.slane %v1133, 2
      %v1135 = vadd.f32 %v1133, %v1134
      %v1136 = vrot.slane %v1135, 1
      %v1137 = vadd.f32 %v1135, %v1136
      %v1138 = vrot.slane %v1072, 4
      %v1139 = vadd.f32 %v1072, %v1138
      %v1140 = vrot.slane %v1139, 2
      %v1141 = vadd.f32 %v1139, %v1140
      %v1142 = vrot.slane %v1141, 1
      %v1143 = vadd.f32 %v1141, %v1142
      %v1144 = vmul.f32 %v1070, %v1070
      %v1145 = vmul.f32 %v1072, %v1072
      %v1146 = vrot.slane %v1144, 4
      %v1147 = vadd.f32 %v1144, %v1146
      %v1148 = vrot.slane %v1147, 2
      %v1149 = vadd.f32 %v1147, %v1148
      %v1150 = vrot.slane %v1149, 1
      %v1151 = vadd.f32 %v1149, %v1150
      %v1152 = vrot.slane %v1145, 4
      %v1153 = vadd.f32 %v1145, %v1152
      %v1154 = vrot.slane %v1153, 2
      %v1155 = vadd.f32 %v1153, %v1154
      %v1156 = vrot.slane %v1155, 1
      %v1157 = vadd.f32 %v1155, %v1156
      %vm1158 = vcmask 1040384
      %v1159 = vsel %vm1158, %v1097, %v1125
      %v1160 = vsel %vm1158, %v1103, %v1131
      %vm1161 = vcmask 1041408
      %v1162 = vsel %vm1161, %v1159, %v1137
      %v1163 = vsel %vm1161, %v1160, %v1143
      %vm1164 = vcmask 1042432
      %v1165 = vsel %vm1164, %v1162, %v1151
      %v1166 = vsel %vm1164, %v1163, %v1157
      %v1169 = vcombine.low %v1165, %v1166
      %1171 = vst [vmem:[%s419] sm:$0xff] %v1169
      %p1172 = scmp.lt.s32.totalorder %s25, 1
      %s1173 = scalar_select %p1172, %s25, 1
      %p1174 = scmp.lt.s32.totalorder %s26, 3
      %s1175 = scalar_select %p1174, %s26, 3
      %s1176 = smul.addr %s1175, 4
      %s1177 = smul.addr %s1173, 16
      %s1178 = sadd.s32 %s1176, %s1177
      %s1179 = smul.addr %s1178, 8
      %s1180 = scalar_lea.vmem %s7, %s1179
      %p1181 = scmp.lt.s32.totalorder %s25, 1
      %s1182 = scalar_select %p1181, %s25, 1
      %p1183 = scmp.lt.s32.totalorder %s26, 3
      %s1184 = scalar_select %p1183, %s26, 3
      %s1185 = smul.addr %s1184, 2
      %s1186 = smul.addr %s1182, 8
      %s1187 = sadd.s32 %s1185, %s1186
      %s1188 = smul.addr %s1187, 8
      %s1189 = scalar_lea.vmem %s8, %s1188
      %p1190 = scmp.lt.s32.totalorder %s25, 1
      %s1191 = scalar_select %p1190, %s25, 1
      %p1192 = scmp.lt.s32.totalorder %s26, 3
      %s1193 = scalar_select %p1192, %s26, 3
      %s1194 = smul.addr %s1193, 2
      %s1195 = smul.addr %s1191, 8
      %s1196 = sadd.s32 %s1194, %s1195
      %s1197 = smul.addr %s1196, 4
      %s1198 = scalar_lea.vmem %s9, %s1197
      // Predicated region
      $region49: #{upblock_forward.3} parent=47 // pred_check
        %p1199 = pneg %p210
      $region50: #{upblock_forward.3} parent=47 // pred_check_branch
        %1201 = sbr.rel (%p1199) target = $region52
      $region51: #{upblock_forward.3} parent=47 // pred_region
        _
      $region52: #{upblock_forward.3} parent=47 // pred_fallthru
        _
      // Predicated region
      $region53: #{upblock_forward.3} parent=47 // pred_check
        %p1202 = pneg %p238
      $region54: #{upblock_forward.3} parent=47 // pred_check_branch
        %1204 = sbr.rel (%p1202) target = $region56
      $region55: #{upblock_forward.3} parent=47 // pred_region
        _
      $region56: #{upblock_forward.3} parent=47 // pred_fallthru
        _
      // Predicated region
      $region57: #{upblock_forward.3} parent=47 // pred_check
        %p1205 = pneg %p266
      $region58: #{upblock_forward.3} parent=47 // pred_check_branch
        %1207 = sbr.rel (%p1205) target = $region60
      $region59: #{upblock_forward.3} parent=47 // pred_region
        _
      $region60: #{upblock_forward.3} parent=47 // pred_fallthru
        _
    $region48: #{upblock_forward.3} parent=5 // pred_fallthru
      _
    %p1208 = scmp.le.s32.totalorder 2, %s16
    // Predicated region
    $region61: #{upblock_forward.3} parent=5 // pred_check
      %p1209 = pneg %p1208
    $region62: #{upblock_forward.3} parent=5 // pred_check_branch
      %1211 = sbr.rel (%p1209) target = $region64
    $region63: #{upblock_forward.3} parent=5 // pred_region
      %s1212 = ssub.s32 %s16, 2
      // Predicated region
      $region65: #{upblock_forward.3} parent=63 // pred_check
        %p1213 = pneg %p216
      $region66: #{upblock_forward.3} parent=63 // pred_check_branch
        %1215 = sbr.rel (%p1213) target = $region68
      $region67: #{upblock_forward.3} parent=63 // pred_region
        %p1216 = scmp.lt.s32.totalorder %s27, 1
        %s1217 = scalar_select %p1216, %s27, 1
        %p1218 = scmp.lt.s32.totalorder %s28, 3
        %s1219 = scalar_select %p1218, %s28, 3
        %s1220 = smul.addr %s1219, 4
        %s1221 = smul.addr %s1217, 16
        %s1222 = sadd.s32 %s1220, %s1221
        %s1223 = smul.addr %s1222, 8
        %s1224 = scalar_lea.vmem %s7, %s1223
      $region68: #{upblock_forward.3} parent=63 // pred_fallthru
        _
      // Predicated region
      $region69: #{upblock_forward.3} parent=63 // pred_check
        %p1225 = pneg %p244
      $region70: #{upblock_forward.3} parent=63 // pred_check_branch
        %1227 = sbr.rel (%p1225) target = $region72
      $region71: #{upblock_forward.3} parent=63 // pred_region
        %p1228 = scmp.lt.s32.totalorder %s27, 1
        %s1229 = scalar_select %p1228, %s27, 1
        %p1230 = scmp.lt.s32.totalorder %s28, 3
        %s1231 = scalar_select %p1230, %s28, 3
        %s1232 = smul.addr %s1231, 2
        %s1233 = smul.addr %s1229, 8
        %s1234 = sadd.s32 %s1232, %s1233
        %s1235 = smul.addr %s1234, 8
        %s1236 = scalar_lea.vmem %s8, %s1235
      $region72: #{upblock_forward.3} parent=63 // pred_fallthru
        _
      // Predicated region
      $region73: #{upblock_forward.3} parent=63 // pred_check
        %p1237 = pneg %p272
      $region74: #{upblock_forward.3} parent=63 // pred_check_branch
        %1239 = sbr.rel (%p1237) target = $region76
      $region75: #{upblock_forward.3} parent=63 // pred_region
        %p1240 = scmp.lt.s32.totalorder %s27, 1
        %s1241 = scalar_select %p1240, %s27, 1
        %p1242 = scmp.lt.s32.totalorder %s28, 3
        %s1243 = scalar_select %p1242, %s28, 3
        %s1244 = smul.addr %s1243, 2
        %s1245 = smul.addr %s1241, 8
        %s1246 = sadd.s32 %s1244, %s1245
        %s1247 = smul.addr %s1246, 4
        %s1248 = scalar_lea.vmem %s9, %s1247
      $region76: #{upblock_forward.3} parent=63 // pred_fallthru
        _
    $region64: #{upblock_forward.3} parent=5 // pred_fallthru
      _
  $region6: #{upblock_forward.3} parent=0 // loop_footer
    %s20 = sadd.s32 1, %s16
  $region7: #{upblock_forward.3} parent=0 // loop_footer_branch
    %15 = sbr.rel target = $region3
  $region8: #{upblock_forward.3} parent=0 // loop_exit
    _

// kernel: squeeze.42
$region0: #{squeeze.42}
  %s0 = inlined_call_operand.vmem [shape: f32[256], index: 0, kind: input, shape index: {}]
  %s1 = inlined_call_operand.vmem [shape: f32[32,8], index: 1, kind: output, shape index: {}]
  $region1: #{squeeze.42} parent=0
    #allocation0 [shape = 'u8[4096]{0}', space=vmem, size = 0x1000, scoped, tag = 'scoped mem for input reshape']
    %s3 = sshllo.u32 0, 2
    %v4 = vld [vmem:[%s0] sm:%s3]
    %5 = vst [vmem:[#allocation0] sm:%s3] %v4
    %v6 = vld [vmem:[#allocation0] sm:$0x3]
    %vm7 = vcmask 64512
    %8 = vst.msk [vmem:[%s1] ss:$16 sm:$0x3] %vm7, %v6
    %v9 = vld [vmem:[#allocation0] sm:$0x3]
    %10 = vrot.lane.b32.xlu0 %v9, 120
    %v11 = vpop.permute.xlu0 %10
    %vm12 = vcmask 64512
    %s13 = scalar_lea.vmem %s1, 1
    %14 = vst.msk [vmem:[%s13] ss:$16 sm:$0x3] %vm12, %v11
    %v15 = vld [vmem:[#allocation0] sm:$0x3]
    %16 = vrot.lane.b32.xlu0 %v15, 112
    %v17 = vpop.permute.xlu0 %16
    %vm18 = vcmask 64512
    %s19 = scalar_lea.vmem %s1, 2
    %20 = vst.msk [vmem:[%s19] ss:$16 sm:$0x3] %vm18, %v17
    %v21 = vld [vmem:[#allocation0] sm:$0x3]
    %22 = vrot.lane.b32.xlu0 %v21, 104
    %v23 = vpop.permute.xlu0 %22
    %vm24 = vcmask 64512
    %s25 = scalar_lea.vmem %s1, 3
    %26 = vst.msk [vmem:[%s25] ss:$16 sm:$0x3] %vm24, %v23
    %v27 = vld [vmem:[#allocation0] sm:$0x3]
    %28 = vrot.lane.b32.xlu0 %v27, 96
    %v29 = vpop.permute.xlu0 %28
    %vm30 = vcmask 64512
    %s31 = scalar_lea.vmem %s1, 4
    %32 = vst.msk [vmem:[%s31] ss:$16 sm:$0x3] %vm30, %v29
    %v33 = vld [vmem:[#allocation0] sm:$0x3]
    %34 = vrot.lane.b32.xlu0 %v33, 88
    %v35 = vpop.permute.xlu0 %34
    %vm36 = vcmask 64512
    %s37 = scalar_lea.vmem %s1, 5
    %38 = vst.msk [vmem:[%s37] ss:$16 sm:$0x3] %vm36, %v35
    %v39 = vld [vmem:[#allocation0] sm:$0x3]
    %40 = vrot.lane.b32.xlu0 %v39, 80
    %v41 = vpop.permute.xlu0 %40
    %vm42 = vcmask 64512
    %s43 = scalar_lea.vmem %s1, 6
    %44 = vst.msk [vmem:[%s43] ss:$16 sm:$0x3] %vm42, %v41
    %v45 = vld [vmem:[#allocation0] sm:$0x3]
    %46 = vrot.lane.b32.xlu0 %v45, 72
    %v47 = vpop.permute.xlu0 %46
    %vm48 = vcmask 64512
    %s49 = scalar_lea.vmem %s1, 7
    %50 = vst.msk [vmem:[%s49] ss:$16 sm:$0x3] %vm48, %v47
    %v51 = vld [vmem:[#allocation0] sm:$0x3]
    %52 = vrot.lane.b32.xlu0 %v51, 64
    %v53 = vpop.permute.xlu0 %52
    %vm54 = vcmask 64512
    %s55 = scalar_lea.vmem %s1, 8
    %56 = vst.msk [vmem:[%s55] ss:$16 sm:$0x3] %vm54, %v53
    %v57 = vld [vmem:[#allocation0] sm:$0x3]
    %58 = vrot.lane.b32.xlu0 %v57, 56
    %v59 = vpop.permute.xlu0 %58
    %vm60 = vcmask 64512
    %s61 = scalar_lea.vmem %s1, 9
    %62 = vst.msk [vmem:[%s61] ss:$16 sm:$0x3] %vm60, %v59
    %v63 = vld [vmem:[#allocation0] sm:$0x3]
    %64 = vrot.lane.b32.xlu0 %v63, 48
    %v65 = vpop.permute.xlu0 %64
    %vm66 = vcmask 64512
    %s67 = scalar_lea.vmem %s1, 10
    %68 = vst.msk [vmem:[%s67] ss:$16 sm:$0x3] %vm66, %v65
    %v69 = vld [vmem:[#allocation0] sm:$0x3]
    %70 = vrot.lane.b32.xlu0 %v69, 40
    %v71 = vpop.permute.xlu0 %70
    %vm72 = vcmask 64512
    %s73 = scalar_lea.vmem %s1, 11
    %74 = vst.msk [vmem:[%s73] ss:$16 sm:$0x3] %vm72, %v71
    %v75 = vld [vmem:[#allocation0] sm:$0x3]
    %76 = vrot.lane.b32.xlu0 %v75, 32
    %v77 = vpop.permute.xlu0 %76
    %vm78 = vcmask 64512
    %s79 = scalar_lea.vmem %s1, 12
    %80 = vst.msk [vmem:[%s79] ss:$16 sm:$0x3] %vm78, %v77
    %v81 = vld [vmem:[#allocation0] sm:$0x3]
    %82 = vrot.lane.b32.xlu0 %v81, 24
    %v83 = vpop.permute.xlu0 %82
    %vm84 = vcmask 64512
    %s85 = scalar_lea.vmem %s1, 13
    %86 = vst.msk [vmem:[%s85] ss:$16 sm:$0x3] %vm84, %v83
    %v87 = vld [vmem:[#allocation0] sm:$0x3]
    %88 = vrot.lane.b32.xlu0 %v87, 16
    %v89 = vpop.permute.xlu0 %88
    %vm90 = vcmask 64512
    %s91 = scalar_lea.vmem %s1, 14
    %92 = vst.msk [vmem:[%s91] ss:$16 sm:$0x3] %vm90, %v89
    %v93 = vld [vmem:[#allocation0] sm:$0x3]
    %94 = vrot.lane.b32.xlu0 %v93, 8
    %v95 = vpop.permute.xlu0 %94
    %vm96 = vcmask 64512
    %s97 = scalar_lea.vmem %s1, 15
    %98 = vst.msk [vmem:[%s97] ss:$16 sm:$0x3] %vm96, %v95

// kernel: upblock_forward.4
$region0: #{upblock_forward.4}
  #allocation0 [shape = 'u32[]', space=smem, size = 0x4, offset = 0x4, fixed_abs, tag = 'smem constant byte address 0x4 - core index']
  #allocation1 [shape = 'u32[144,128]{1,0:T(1,128)}', space=vmem, size = 0x12000, scoped, tag = 'internal scratch']
  %s0 = inlined_call_operand.vmem [shape: f32[2,4,10,256], index: 0, kind: input, shape index: {}]
  %s1 = inlined_call_operand.vmem [shape: f32[2,256], index: 1, kind: input, shape index: {}]
  %s2 = inlined_call_operand.vmem [shape: f32[3,256,256], index: 2, kind: input, shape index: {}]
  %s3 = inlined_call_operand.vmem [shape: f32[1,256], index: 3, kind: input, shape index: {}]
  %s4 = inlined_call_operand.vmem [shape: f32[2,32,256], index: 4, kind: output, shape index: {0}]
  %s5 = inlined_call_operand.vmem [shape: f32[2,4,2,256], index: 5, kind: output, shape index: {1}]
  %6 = xla_tuple %s4, %s5
  %s7 = sld [smem:[#allocation0]]
  $region57: #{upblock_forward.4} parent=0
    _
  %s9 = ssub.s32 1, %s7
  %s10 = scalar_select 0, %s9, %s7
  loop: start=0, step=1, limit=10
  $region2: #{upblock_forward.4} parent=0 // loop_pre_header
    _
  $region3: #{upblock_forward.4} parent=0 // loop_header
    %s12 = sphi 0, %s16
    %p13 = scmp.ge.s32.totalorder %s12, 10
    %s19 = sphi 0, %s31
    %s20 = sphi 0, %s27
    %s21 = sphi 0, %s19
    %s22 = sphi 0, %s20
    %s23 = sphi 0, %s21
    %s24 = sphi 0, %s22
    %s36 = sphi 0, %s38
    %s39 = sphi 0, %s36
    %s40 = sphi 0, %s39
    %s56 = sphi 0, %s40
    %s60 = sphi 0, %s60
    %s62 = sphi 0, %s60
    %s63 = sphi 0, %s62
    %s77 = sphi 0, %s63
    %s81 = sphi 0, %s81
    %s83 = sphi 0, %s81
    %s84 = sphi 0, %s83
    %s98 = sphi 0, %s84
    %s102 = sphi 0, %s102
    %s104 = sphi 0, %s102
    %s105 = sphi 0, %s104
    %s119 = sphi 0, %s105
    %s127 = sphi 0, %s129
    %s130 = sphi 0, %s127
    %s131 = sphi 0, %s130
    %s147 = sphi 0, %s131
    %s155 = sphi 0, %s157
    %s158 = sphi 0, %s155
    %s159 = sphi 0, %s158
    %s175 = sphi 0, %s159
  $region4: #{upblock_forward.4} parent=0 // loop_header_branch
    %15 = sbr.rel (%p13) target = $region8
  $region5: #{upblock_forward.4} parent=0 // loop_body
    %s17 = ssub.s32 %s12, 1
    %s18 = ssub.s32 %s12, 2
    %s25 = sadd.s32 1, %s20
    %p26 = scmp.ge.s32.totalorder %s25, 4
    %s27 = scalar_select %p26, 0, %s25
    %s28 = sadd.s32 1, %s19
    %s29 = scalar_select %p26, %s28, %s19
    %p30 = scmp.ge.s32.totalorder %s29, 2
    %s31 = scalar_select %p30, 0, %s29
    %s32 = ssub.s32 %s19, %s31
    %s33 = ssub.s32 %s20, %s27
    %s34 = sor.u32 %s32, %s33
    %p35 = scmp.eq.s32.totalorder %s34, 0
    %s37 = sadd.s32 %s36, 1
    %s38 = scalar_select %p35, %s36, %s37
    %p41 = pneg %p35
    %p42 = scmp.eq.s32.totalorder %s12, 7
    %p43 = por %p41, %p42
    %p44 = scmp.ne.s32.totalorder %s36, %s39
    %p45 = scmp.eq.s32.totalorder %s12, 0
    %p46 = por %p44, %p45
    %p47 = scmp.ne.s32.totalorder %s36, %s39
    %p48 = scmp.eq.s32.totalorder %s17, 7
    %p49 = por %p47, %p48
    %p50 = scmp.ne.s32.totalorder %s39, %s40
    %p51 = scmp.eq.s32.totalorder %s17, 0
    %p52 = por %p50, %p51
    %p53 = scmp.ne.s32.totalorder %s39, %s40
    %p54 = scmp.eq.s32.totalorder %s18, 7
    %p55 = por %p53, %p54
    %p57 = scmp.ne.s32.totalorder %s40, %s56
    %p58 = scmp.eq.s32.totalorder %s18, 0
    %p59 = por %p57, %p58
    %s61 = sadd.s32 %s60, 1
    %p64 = scmp.eq.s32.totalorder %s12, 7
    %p65 = scmp.ne.s32.totalorder %s60, %s62
    %p66 = scmp.eq.s32.totalorder %s12, 0
    %p67 = por %p65, %p66
    %p68 = scmp.ne.s32.totalorder %s60, %s62
    %p69 = scmp.eq.s32.totalorder %s17, 7
    %p70 = por %p68, %p69
    %p71 = scmp.ne.s32.totalorder %s62, %s63
    %p72 = scmp.eq.s32.totalorder %s17, 0
    %p73 = por %p71, %p72
    %p74 = scmp.ne.s32.totalorder %s62, %s63
    %p75 = scmp.eq.s32.totalorder %s18, 7
    %p76 = por %p74, %p75
    %p78 = scmp.ne.s32.totalorder %s63, %s77
    %p79 = scmp.eq.s32.totalorder %s18, 0
    %p80 = por %p78, %p79
    %s82 = sadd.s32 %s81, 1
    %p85 = scmp.eq.s32.totalorder %s12, 7
    %p86 = scmp.ne.s32.totalorder %s81, %s83
    %p87 = scmp.eq.s32.totalorder %s12, 0
    %p88 = por %p86, %p87
    %p89 = scmp.ne.s32.totalorder %s81, %s83
    %p90 = scmp.eq.s32.totalorder %s17, 7
    %p91 = por %p89, %p90
    %p92 = scmp.ne.s32.totalorder %s83, %s84
    %p93 = scmp.eq.s32.totalorder %s17, 0
    %p94 = por %p92, %p93
    %p95 = scmp.ne.s32.totalorder %s83, %s84
    %p96 = scmp.eq.s32.totalorder %s18, 7
    %p97 = por %p95, %p96
    %p99 = scmp.ne.s32.totalorder %s84, %s98
    %p100 = scmp.eq.s32.totalorder %s18, 0
    %p101 = por %p99, %p100
    %s103 = sadd.s32 %s102, 1
    %p106 = scmp.eq.s32.totalorder %s12, 7
    %p107 = scmp.ne.s32.totalorder %s102, %s104
    %p108 = scmp.eq.s32.totalorder %s12, 0
    %p109 = por %p107, %p108
    %p110 = scmp.ne.s32.totalorder %s102, %s104
    %p111 = scmp.eq.s32.totalorder %s17, 7
    %p112 = por %p110, %p111
    %p113 = scmp.ne.s32.totalorder %s104, %s105
    %p114 = scmp.eq.s32.totalorder %s17, 0
    %p115 = por %p113, %p114
    %p116 = scmp.ne.s32.totalorder %s104, %s105
    %p117 = scmp.eq.s32.totalorder %s18, 7
    %p118 = por %p116, %p117
    %p120 = scmp.ne.s32.totalorder %s105, %s119
    %p121 = scmp.eq.s32.totalorder %s18, 0
    %p122 = por %p120, %p121
    %s123 = ssub.s32 %s19, %s31
    %s124 = ssub.s32 %s20, %s27
    %s125 = sor.u32 %s123, %s124
    %p126 = scmp.eq.s32.totalorder %s125, 0
    %s128 = sadd.s32 %s127, 1
    %s129 = scalar_select %p126, %s127, %s128
    %p132 = pneg %p126
    %p133 = scmp.eq.s32.totalorder %s12, 7
    %p134 = por %p132, %p133
    %p135 = scmp.ne.s32.totalorder %s127, %s130
    %p136 = scmp.eq.s32.totalorder %s12, 0
    %p137 = por %p135, %p136
    %p138 = scmp.ne.s32.totalorder %s127, %s130
    %p139 = scmp.eq.s32.totalorder %s17, 7
    %p140 = por %p138, %p139
    %p141 = scmp.ne.s32.totalorder %s130, %s131
    %p142 = scmp.eq.s32.totalorder %s17, 0
    %p143 = por %p141, %p142
    %p144 = scmp.ne.s32.totalorder %s130, %s131
    %p145 = scmp.eq.s32.totalorder %s18, 7
    %p146 = por %p144, %p145
    %p148 = scmp.ne.s32.totalorder %s131, %s147
    %p149 = scmp.eq.s32.totalorder %s18, 0
    %p150 = por %p148, %p149
    %s151 = ssub.s32 %s19, %s31
    %s152 = ssub.s32 %s20, %s27
    %s153 = sor.u32 %s151, %s152
    %p154 = scmp.eq.s32.totalorder %s153, 0
    %s156 = sadd.s32 %s155, 1
    %s157 = scalar_select %p154, %s155, %s156
    %p160 = pneg %p154
    %p161 = scmp.eq.s32.totalorder %s12, 7
    %p162 = por %p160, %p161
    %p163 = scmp.ne.s32.totalorder %s155, %s158
    %p164 = scmp.eq.s32.totalorder %s12, 0
    %p165 = por %p163, %p164
    %p166 = scmp.ne.s32.totalorder %s155, %s158
    %p167 = scmp.eq.s32.totalorder %s17, 7
    %p168 = por %p166, %p167
    %p169 = scmp.ne.s32.totalorder %s158, %s159
    %p170 = scmp.eq.s32.totalorder %s17, 0
    %p171 = por %p169, %p170
    %p172 = scmp.ne.s32.totalorder %s158, %s159
    %p173 = scmp.eq.s32.totalorder %s18, 7
    %p174 = por %p172, %p173
    %p176 = scmp.ne.s32.totalorder %s159, %s175
    %p177 = scmp.eq.s32.totalorder %s18, 0
    %p178 = por %p176, %p177
    %p179 = scmp.le.s32.totalorder 1, %s12
    %p180 = scmp.lt.s32.totalorder %s12, 9
    %p181 = pnand %p179, %p180
    %p182 = pneg %p181
    // Predicated region
    $region9: #{upblock_forward.4} parent=5 // pred_check
      _
    $region10: #{upblock_forward.4} parent=5 // pred_check_branch
      %184 = sbr.rel (%p181) target = $region12
    $region11: #{upblock_forward.4} parent=5 // pred_region
      %s185 = ssub.s32 %s12, 1
      // Predicated region
      $region13: #{upblock_forward.4} parent=11 // pred_check
        %p186 = pneg %p73
      $region14: #{upblock_forward.4} parent=11 // pred_check_branch
        %188 = sbr.rel (%p186) target = $region16
      $region15: #{upblock_forward.4} parent=11 // pred_region
        _
      $region16: #{upblock_forward.4} parent=11 // pred_fallthru
        _
      // Predicated region
      $region17: #{upblock_forward.4} parent=11 // pred_check
        %p189 = pneg %p94
      $region18: #{upblock_forward.4} parent=11 // pred_check_branch
        %191 = sbr.rel (%p189) target = $region20
      $region19: #{upblock_forward.4} parent=11 // pred_region
        _
      $region20: #{upblock_forward.4} parent=11 // pred_fallthru
        _
      // Predicated region
      $region21: #{upblock_forward.4} parent=11 // pred_check
        %p192 = pneg %p115
      $region22: #{upblock_forward.4} parent=11 // pred_check_branch
        %194 = sbr.rel (%p192) target = $region24
      $region23: #{upblock_forward.4} parent=11 // pred_region
        _
      $region24: #{upblock_forward.4} parent=11 // pred_fallthru
        _
    $region12: #{upblock_forward.4} parent=5 // pred_fallthru
      _
    %p195 = scmp.lt.s32.totalorder %s12, 8
    // Predicated region
    $region25: #{upblock_forward.4} parent=5 // pred_check
      %p196 = pneg %p195
    $region26: #{upblock_forward.4} parent=5 // pred_check_branch
      %198 = sbr.rel (%p196) target = $region28
    $region27: #{upblock_forward.4} parent=5 // pred_region
      // Predicated region
      $region29: #{upblock_forward.4} parent=27 // pred_check
        %p199 = pneg %p46
      $region30: #{upblock_forward.4} parent=27 // pred_check_branch
        %201 = sbr.rel (%p199) target = $region32
      $region31: #{upblock_forward.4} parent=27 // pred_region
        %p202 = scmp.lt.s32.totalorder %s19, 1
        %s203 = scalar_select %p202, %s19, 1
        %p204 = scmp.lt.s32.totalorder %s20, 3
        %s205 = scalar_select %p204, %s20, 3
        %s206 = smul.addr %s205, 4
        %s207 = smul.addr %s203, 16
        %s208 = sadd.s32 %s206, %s207
        %s209 = smul.addr %s208, 8
        %s210 = scalar_lea.vmem %s0, %s209
      $region32: #{upblock_forward.4} parent=27 // pred_fallthru
        _
    $region28: #{upblock_forward.4} parent=5 // pred_fallthru
      _
    %p211 = scmp.le.s32.totalorder 1, %s12
    %p212 = scmp.lt.s32.totalorder %s12, 9
    %p213 = pnand %p211, %p212
    %p214 = pneg %p213
    // Predicated region
    $region33: #{upblock_forward.4} parent=5 // pred_check
      _
    $region34: #{upblock_forward.4} parent=5 // pred_check_branch
      %216 = sbr.rel (%p213) target = $region36
    $region35: #{upblock_forward.4} parent=5 // pred_region
      %s217 = ssub.s32 %s12, 1
      %p218 = scmp.lt.s32.totalorder %s21, 1
      %s219 = scalar_select %p218, %s21, 1
      %p220 = scmp.lt.s32.totalorder %s22, 3
      %s221 = scalar_select %p220, %s22, 3
      %s222 = smul.addr %s221, 4
      %s223 = smul.addr %s219, 16
      %s224 = sadd.s32 %s222, %s223
      %s225 = smul.addr %s224, 8
      %s226 = scalar_lea.vmem %s0, %s225
      %p227 = pneg %p52
      %p228 = pneg %p49
      %p229 = pneg %p73
      %p230 = pneg %p70
      %p231 = pneg %p94
      %p232 = pneg %p91
      %p233 = pneg %p115
      %p234 = pneg %p112
      %p235 = pneg %p143
      %p236 = pneg %p140
      %p237 = scmp.lt.s32.totalorder %s21, 1
      %s238 = scalar_select %p237, %s21, 1
      %p239 = scmp.lt.s32.totalorder %s22, 3
      %s240 = scalar_select %p239, %s22, 3
      %s241 = smul.addr %s240, 2
      %s242 = smul.addr %s238, 8
      %s243 = sadd.s32 %s241, %s242
      %s244 = smul.addr %s243, 8
      %s245 = scalar_lea.vmem %s4, %s244
      %p246 = pneg %p171
      %p247 = pneg %p168
      %p248 = scmp.lt.s32.totalorder %s21, 1
      %s249 = scalar_select %p248, %s21, 1
      %p250 = scmp.lt.s32.totalorder %s22, 3
      %s251 = scalar_select %p250, %s22, 3
      %s252 = smul.addr %s251, 2
      %s253 = smul.addr %s249, 8
      %s254 = sadd.s32 %s252, %s253
      %s255 = smul.addr %s254, 2
      %s256 = scalar_lea.vmem %s5, %s255
      %p257 = scmp.lt.s32.totalorder %s21, 1
      %s258 = scalar_select %p257, %s21, 1
      %p259 = scmp.lt.s32.totalorder %s22, 3
      %s260 = scalar_select %p259, %s22, 3
      %s261 = smul.addr %s260, 4
      %s262 = smul.addr %s258, 16
      %s263 = sadd.s32 %s261, %s262
      %s264 = smul.addr %s263, 8
      %s265 = scalar_lea.vmem %s0, %s264
      %p266 = scmp.lt.s32.totalorder %s21, 1
      %s267 = scalar_select %p266, %s21, 1
      %p268 = scmp.lt.s32.totalorder %s22, 3
      %s269 = scalar_select %p268, %s22, 3
      %s270 = smul.addr %s269, 2
      %s271 = smul.addr %s267, 8
      %s272 = sadd.s32 %s270, %s271
      %s273 = smul.addr %s272, 8
      %s274 = scalar_lea.vmem %s4, %s273
      %p275 = scmp.lt.s32.totalorder %s21, 1
      %s276 = scalar_select %p275, %s21, 1
      %p277 = scmp.lt.s32.totalorder %s22, 3
      %s278 = scalar_select %p277, %s22, 3
      %s279 = smul.addr %s278, 2
      %s280 = smul.addr %s276, 8
      %s281 = sadd.s32 %s279, %s280
      %s282 = smul.addr %s281, 2
      %s283 = scalar_lea.vmem %s5, %s282
      %v284 = vld [vmem:[%s1] sm:$0xf]
      %v285 = vld [vmem:[%s265] sm:$0xff]
      %v286 = vld [vmem:[%s265 + $0x8] sm:$0xff]
      %v287 = vld [vmem:[%s265 + $0x10] sm:$0x3]
      %v288 = vld [vmem:[%s265 + $0x18] sm:$0x3]
      %v290 = vlaneseq
      %v291 = vshrl.u32 %v290, 7
      %v292 = vsub.s32 0, %v291
      %v293 = vrot.slane %v284, %v292
      %v294 = vlaneseq
      %v295 = vshrl.u32 %v294, 7
      %v296 = vsub.s32 2, %v295
      %v297 = vrot.slane %v284, %v296
      %v300 = vlaneseq
      %v301 = vshrl.u32 %v300, 7
      %v302 = vsub.s32 0, %v301
      %v303 = vrot.slane %v293, %v302
      %v304 = vlaneseq
      %v305 = vshrl.u32 %v304, 7
      %v306 = vsub.s32 0, %v305
      %v307 = vrot.slane %v297, %v306
      %v308 = vmul.f32 %v285, %v303
      %v309 = vmul.f32 %v286, %v307
      %v310 = vmul.f32 %v287, %v303
      %v311 = vmul.f32 %v288, %v307
      %v312 = vlaneseq
      %v313 = vshrl.u32 %v312, 7
      %v314 = vsub.s32 1, %v313
      %v315 = vrot.slane %v284, %v314
      %v316 = vlaneseq
      %v317 = vshrl.u32 %v316, 7
      %v318 = vsub.s32 3, %v317
      %v319 = vrot.slane %v284, %v318
      %v322 = vlaneseq
      %v323 = vshrl.u32 %v322, 7
      %v324 = vsub.s32 1, %v323
      %v325 = vrot.slane %v315, %v324
      %v326 = vlaneseq
      %v327 = vshrl.u32 %v326, 7
      %v328 = vsub.s32 1, %v327
      %v329 = vrot.slane %v319, %v328
      %v330 = vadd.f32 %v308, %v325
      %v331 = vadd.f32 %v309, %v329
      %v332 = vadd.f32 %v310, %v325
      %v333 = vadd.f32 %v311, %v329
      %v334 = vmax.f32 %v330, 0.0
      %v335 = vmax.f32 %v331, 0.0
      %v336 = vmax.f32 %v332, 0.0
      %v337 = vmax.f32 %v333, 0.0
      %v338 = vlaneseq
      %v339 = vshrl.u32 %v338, 7
      %v340 = vadd.s32 %v339, 8
      %vm341 = vcmp.eq.s32.totalorder %v339, 0
      %vm342 = vcmp.eq.s32.totalorder %v340, 0
      %p343 = scmp.eq.s32.totalorder %s22, 0
      %s344 = scalar_select %p343, 1, 0
      %v345 = vstv %s344
      %vm346 = vcmp.eq.s32.totalorder %v345, 1
      %vm347 = vmand %vm341, %vm346
      %vm348 = vmand %vm342, %vm346
      %vm349 = vcmp.eq.s32.totalorder %v339, 9
      %vm350 = vcmp.eq.s32.totalorder %v340, 9
      %p351 = scmp.eq.s32.totalorder %s22, 3
      %s352 = scalar_select %p351, 1, 0
      %v353 = vstv %s352
      %vm354 = vcmp.eq.s32.totalorder %v353, 1
      %vm355 = vmand %vm349, %vm354
      %vm356 = vmand %vm350, %vm354
      %vm357 = vmor %vm347, %vm355
      %vm358 = vmor %vm348, %vm356
      %v359 = vsel %vm357, 0.0, %v334
      %v360 = vsel %vm357, 0.0, %v335
      %v361 = vsel %vm358, 0.0, %v336
      %v362 = vsel %vm358, 0.0, %v337
      %v363 = vld [vmem:[%s2] sm:$0xff]
      %v364 = vld [vmem:[%s2 + $0x8] sm:$0xff]
      %v365 = vld [vmem:[%s2 + $0x10] sm:$0xff]
      %v366 = vld [vmem:[%s2 + $0x18] sm:$0xff]
      %v367 = vld [vmem:[%s2 + $0x20] sm:$0xff]
      %v368 = vld [vmem:[%s2 + $0x28] sm:$0xff]
      %v369 = vld [vmem:[%s2 + $0x30] sm:$0xff]
      %v370 = vld [vmem:[%s2 + $0x38] sm:$0xff]
      %v371 = vld [vmem:[%s2 + $0x40] sm:$0xff]
      %v372 = vld [vmem:[%s2 + $0x48] sm:$0xff]
      %v373 = vld [vmem:[%s2 + $0x50] sm:$0xff]
      %v374 = vld [vmem:[%s2 + $0x58] sm:$0xff]
      %v375 = vld [vmem:[%s2 + $0x60] sm:$0xff]
      %v376 = vld [vmem:[%s2 + $0x68] sm:$0xff]
      %v377 = vld [vmem:[%s2 + $0x70] sm:$0xff]
      %v378 = vld [vmem:[%s2 + $0x78] sm:$0xff]
      %v379 = vld [vmem:[%s2 + $0x80] sm:$0xff]
      %v380 = vld [vmem:[%s2 + $0x88] sm:$0xff]
      %v381 = vld [vmem:[%s2 + $0x90] sm:$0xff]
      %v382 = vld [vmem:[%s2 + $0x98] sm:$0xff]
      %v383 = vld [vmem:[%s2 + $0xa0] sm:$0xff]
      %v384 = vld [vmem:[%s2 + $0xa8] sm:$0xff]
      %v385 = vld [vmem:[%s2 + $0xb0] sm:$0xff]
      %v386 = vld [vmem:[%s2 + $0xb8] sm:$0xff]
      %v387 = vld [vmem:[%s2 + $0xc0] sm:$0xff]
      %v388 = vld [vmem:[%s2 + $0xc8] sm:$0xff]
      %v389 = vld [vmem:[%s2 + $0xd0] sm:$0xff]
      %v390 = vld [vmem:[%s2 + $0xd8] sm:$0xff]
      %v391 = vld [vmem:[%s2 + $0xe0] sm:$0xff]
      %v392 = vld [vmem:[%s2 + $0xe8] sm:$0xff]
      %v393 = vld [vmem:[%s2 + $0xf0] sm:$0xff]
      %v394 = vld [vmem:[%s2 + $0xf8] sm:$0xff]
      %v395 = vld [vmem:[%s2 + $0x100] sm:$0xff]
      %v396 = vld [vmem:[%s2 + $0x108] sm:$0xff]
      %v397 = vld [vmem:[%s2 + $0x110] sm:$0xff]
      %v398 = vld [vmem:[%s2 + $0x118] sm:$0xff]
      %v399 = vld [vmem:[%s2 + $0x120] sm:$0xff]
      %v400 = vld [vmem:[%s2 + $0x128] sm:$0xff]
      %v401 = vld [vmem:[%s2 + $0x130] sm:$0xff]
      %v402 = vld [vmem:[%s2 + $0x138] sm:$0xff]
      %v403 = vld [vmem:[%s2 + $0x140] sm:$0xff]
      %v404 = vld [vmem:[%s2 + $0x148] sm:$0xff]
      %v405 = vld [vmem:[%s2 + $0x150] sm:$0xff]
      %v406 = vld [vmem:[%s2 + $0x158] sm:$0xff]
      %v407 = vld [vmem:[%s2 + $0x160] sm:$0xff]
      %v408 = vld [vmem:[%s2 + $0x168] sm:$0xff]
      %v409 = vld [vmem:[%s2 + $0x170] sm:$0xff]
      %v410 = vld [vmem:[%s2 + $0x178] sm:$0xff]
      %v411 = vld [vmem:[%s2 + $0x180] sm:$0xff]
      %v412 = vld [vmem:[%s2 + $0x188] sm:$0xff]
      %v413 = vld [vmem:[%s2 + $0x190] sm:$0xff]
      %v414 = vld [vmem:[%s2 + $0x198] sm:$0xff]
      %v415 = vld [vmem:[%s2 + $0x1a0] sm:$0xff]
      %v416 = vld [vmem:[%s2 + $0x1a8] sm:$0xff]
      %v417 = vld [vmem:[%s2 + $0x1b0] sm:$0xff]
      %v418 = vld [vmem:[%s2 + $0x1b8] sm:$0xff]
      %v419 = vld [vmem:[%s2 + $0x1c0] sm:$0xff]
      %v420 = vld [vmem:[%s2 + $0x1c8] sm:$0xff]
      %v421 = vld [vmem:[%s2 + $0x1d0] sm:$0xff]
      %v422 = vld [vmem:[%s2 + $0x1d8] sm:$0xff]
      %v423 = vld [vmem:[%s2 + $0x1e0] sm:$0xff]
      %v424 = vld [vmem:[%s2 + $0x1e8] sm:$0xff]
      %v425 = vld [vmem:[%s2 + $0x1f0] sm:$0xff]
      %v426 = vld [vmem:[%s2 + $0x1f8] sm:$0xff]
      %s427 = scalar_lea.vmem %s2, 512
      %v428 = vld [vmem:[%s427] sm:$0xff]
      %v429 = vld [vmem:[%s427 + $0x8] sm:$0xff]
      %v430 = vld [vmem:[%s427 + $0x10] sm:$0xff]
      %v431 = vld [vmem:[%s427 + $0x18] sm:$0xff]
      %v432 = vld [vmem:[%s427 + $0x20] sm:$0xff]
      %v433 = vld [vmem:[%s427 + $0x28] sm:$0xff]
      %v434 = vld [vmem:[%s427 + $0x30] sm:$0xff]
      %v435 = vld [vmem:[%s427 + $0x38] sm:$0xff]
      %v436 = vld [vmem:[%s427 + $0x40] sm:$0xff]
      %v437 = vld [vmem:[%s427 + $0x48] sm:$0xff]
      %v438 = vld [vmem:[%s427 + $0x50] sm:$0xff]
      %v439 = vld [vmem:[%s427 + $0x58] sm:$0xff]
      %v440 = vld [vmem:[%s427 + $0x60] sm:$0xff]
      %v441 = vld [vmem:[%s427 + $0x68] sm:$0xff]
      %v442 = vld [vmem:[%s427 + $0x70] sm:$0xff]
      %v443 = vld [vmem:[%s427 + $0x78] sm:$0xff]
      %v444 = vld [vmem:[%s427 + $0x80] sm:$0xff]
      %v445 = vld [vmem:[%s427 + $0x88] sm:$0xff]
      %v446 = vld [vmem:[%s427 + $0x90] sm:$0xff]
      %v447 = vld [vmem:[%s427 + $0x98] sm:$0xff]
      %v448 = vld [vmem:[%s427 + $0xa0] sm:$0xff]
      %v449 = vld [vmem:[%s427 + $0xa8] sm:$0xff]
      %v450 = vld [vmem:[%s427 + $0xb0] sm:$0xff]
      %v451 = vld [vmem:[%s427 + $0xb8] sm:$0xff]
      %v452 = vld [vmem:[%s427 + $0xc0] sm:$0xff]
      %v453 = vld [vmem:[%s427 + $0xc8] sm:$0xff]
      %v454 = vld [vmem:[%s427 + $0xd0] sm:$0xff]
      %v455 = vld [vmem:[%s427 + $0xd8] sm:$0xff]
      %v456 = vld [vmem:[%s427 + $0xe0] sm:$0xff]
      %v457 = vld [vmem:[%s427 + $0xe8] sm:$0xff]
      %v458 = vld [vmem:[%s427 + $0xf0] sm:$0xff]
      %v459 = vld [vmem:[%s427 + $0xf8] sm:$0xff]
      %v460 = vld [vmem:[%s427 + $0x100] sm:$0xff]
      %v461 = vld [vmem:[%s427 + $0x108] sm:$0xff]
      %v462 = vld [vmem:[%s427 + $0x110] sm:$0xff]
      %v463 = vld [vmem:[%s427 + $0x118] sm:$0xff]
      %v464 = vld [vmem:[%s427 + $0x120] sm:$0xff]
      %v465 = vld [vmem:[%s427 + $0x128] sm:$0xff]
      %v466 = vld [vmem:[%s427 + $0x130] sm:$0xff]
      %v467 = vld [vmem:[%s427 + $0x138] sm:$0xff]
      %v468 = vld [vmem:[%s427 + $0x140] sm:$0xff]
      %v469 = vld [vmem:[%s427 + $0x148] sm:$0xff]
      %v470 = vld [vmem:[%s427 + $0x150] sm:$0xff]
      %v471 = vld [vmem:[%s427 + $0x158] sm:$0xff]
      %v472 = vld [vmem:[%s427 + $0x160] sm:$0xff]
      %v473 = vld [vmem:[%s427 + $0x168] sm:$0xff]
      %v474 = vld [vmem:[%s427 + $0x170] sm:$0xff]
      %v475 = vld [vmem:[%s427 + $0x178] sm:$0xff]
      %v476 = vld [vmem:[%s427 + $0x180] sm:$0xff]
      %v477 = vld [vmem:[%s427 + $0x188] sm:$0xff]
      %v478 = vld [vmem:[%s427 + $0x190] sm:$0xff]
      %v479 = vld [vmem:[%s427 + $0x198] sm:$0xff]
      %v480 = vld [vmem:[%s427 + $0x1a0] sm:$0xff]
      %v481 = vld [vmem:[%s427 + $0x1a8] sm:$0xff]
      %v482 = vld [vmem:[%s427 + $0x1b0] sm:$0xff]
      %v483 = vld [vmem:[%s427 + $0x1b8] sm:$0xff]
      %v484 = vld [vmem:[%s427 + $0x1c0] sm:$0xff]
      %v485 = vld [vmem:[%s427 + $0x1c8] sm:$0xff]
      %v486 = vld [vmem:[%s427 + $0x1d0] sm:$0xff]
      %v487 = vld [vmem:[%s427 + $0x1d8] sm:$0xff]
      %v488 = vld [vmem:[%s427 + $0x1e0] sm:$0xff]
      %v489 = vld [vmem:[%s427 + $0x1e8] sm:$0xff]
      %v490 = vld [vmem:[%s427 + $0x1f0] sm:$0xff]
      %v491 = vld [vmem:[%s427 + $0x1f8] sm:$0xff]
      %vm496 = vcmask 1046528
      %v497 = vrot.slane %v359, 1
      %v498 = vrot.slane %v361, 1
      %v499 = vsel %vm496, %v497, %v498
      %v500 = vrot.slane %v360, 1
      %v501 = vrot.slane %v362, 1
      %v502 = vsel %vm496, %v500, %v501
      %505 = vmatprep.subr.mxu0 %v429
      %506 = vmatpush1.msra.mxu0 %v428
      %507 = vmatprep.subr.mxu0 %v431
      %508 = vmatpush1.msra.mxu0 %v430
      %509 = vmatprep.subr.mxu0 %v433
      %510 = vmatpush1.msra.mxu0 %v432
      %511 = vmatprep.subr.mxu0 %v435
      %512 = vmatpush1.msra.mxu0 %v434
      %513 = vmatprep.subr.mxu0 %v437
      %514 = vmatpush1.msra.mxu0 %v436
      %515 = vmatprep.subr.mxu0 %v439
      %516 = vmatpush1.msra.mxu0 %v438
      %517 = vmatprep.subr.mxu0 %v441
      %518 = vmatpush1.msra.mxu0 %v440
      %519 = vmatprep.subr.mxu0 %v443
      %520 = vmatpush1.msra.mxu0 %v442
      %521 = vmatprep.subr.mxu0 %v445
      %522 = vmatpush1.msra.mxu0 %v444
      %523 = vmatprep.subr.mxu0 %v447
      %524 = vmatpush1.msra.mxu0 %v446
      %525 = vmatprep.subr.mxu0 %v449
      %526 = vmatpush1.msra.mxu0 %v448
      %527 = vmatprep.subr.mxu0 %v451
      %528 = vmatpush1.msra.mxu0 %v450
      %529 = vmatprep.subr.mxu0 %v453
      %530 = vmatpush1.msra.mxu0 %v452
      %531 = vmatprep.subr.mxu0 %v455
      %532 = vmatpush1.msra.mxu0 %v454
      %533 = vmatprep.subr.mxu0 %v457
      %534 = vmatpush1.msra.mxu0 %v456
      %535 = vmatprep.subr.mxu0 %v459
      %536 = vmatpush1.msra.mxu0 %v458
      %537 = vmatprep.subr.mxu0 %v461
      %538 = vmatpush1.msra.mxu0 %v460
      %539 = vmatprep.subr.mxu0 %v463
      %540 = vmatpush1.msra.mxu0 %v462
      %541 = vmatprep.subr.mxu0 %v465
      %542 = vmatpush1.msra.mxu0 %v464
      %543 = vmatprep.subr.mxu0 %v467
      %544 = vmatpush1.msra.mxu0 %v466
      %545 = vmatprep.subr.mxu0 %v469
      %546 = vmatpush1.msra.mxu0 %v468
      %547 = vmatprep.subr.mxu0 %v471
      %548 = vmatpush1.msra.mxu0 %v470
      %549 = vmatprep.subr.mxu0 %v473
      %550 = vmatpush1.msra.mxu0 %v472
      %551 = vmatprep.subr.mxu0 %v475
      %552 = vmatpush1.msra.mxu0 %v474
      %553 = vmatprep.subr.mxu0 %v477
      %554 = vmatpush1.msra.mxu0 %v476
      %555 = vmatprep.subr.mxu0 %v479
      %556 = vmatpush1.msra.mxu0 %v478
      %557 = vmatprep.subr.mxu0 %v481
      %558 = vmatpush1.msra.mxu0 %v480
      %559 = vmatprep.subr.mxu0 %v483
      %560 = vmatpush1.msra.mxu0 %v482
      %561 = vmatprep.subr.mxu0 %v485
      %562 = vmatpush1.msra.mxu0 %v484
      %563 = vmatprep.subr.mxu0 %v487
      %564 = vmatpush1.msra.mxu0 %v486
      %565 = vmatprep.subr.mxu0 %v489
      %566 = vmatpush1.msra.mxu0 %v488
      %567 = vmatprep.subr.mxu0 %v491
      %568 = vmatpush1.msra.mxu0 %v490
      %569 = vmatprep.mubr.f32.mxu0 %v502
      %570 = vmatmul.mubr.f32.gmra.mrb[0].mxu0 %v499
      %v571 = vpop.f32.mrb[0].mxu0
      %v572 = vadd.f32 0.0, %v571
      %v573 = vpop.f32.mrb[0].mxu0
      %v574 = vadd.f32 0.0, %v573
      %575 = vdwg.mxu0
      %576 = vmatprep.subr.mxu0 %v364
      %577 = vmatpush1.msra.mxu0 %v363
      %578 = vmatprep.subr.mxu0 %v366
      %579 = vmatpush1.msra.mxu0 %v365
      %580 = vmatprep.subr.mxu0 %v368
      %581 = vmatpush1.msra.mxu0 %v367
      %582 = vmatprep.subr.mxu0 %v370
      %583 = vmatpush1.msra.mxu0 %v369
      %584 = vmatprep.subr.mxu0 %v372
      %585 = vmatpush1.msra.mxu0 %v371
      %586 = vmatprep.subr.mxu0 %v374
      %587 = vmatpush1.msra.mxu0 %v373
      %588 = vmatprep.subr.mxu0 %v376
      %589 = vmatpush1.msra.mxu0 %v375
      %590 = vmatprep.subr.mxu0 %v378
      %591 = vmatpush1.msra.mxu0 %v377
      %592 = vmatprep.subr.mxu0 %v380
      %593 = vmatpush1.msra.mxu0 %v379
      %594 = vmatprep.subr.mxu0 %v382
      %595 = vmatpush1.msra.mxu0 %v381
      %596 = vmatprep.subr.mxu0 %v384
      %597 = vmatpush1.msra.mxu0 %v383
      %598 = vmatprep.subr.mxu0 %v386
      %599 = vmatpush1.msra.mxu0 %v385
      %600 = vmatprep.subr.mxu0 %v388
      %601 = vmatpush1.msra.mxu0 %v387
      %602 = vmatprep.subr.mxu0 %v390
      %603 = vmatpush1.msra.mxu0 %v389
      %604 = vmatprep.subr.mxu0 %v392
      %605 = vmatpush1.msra.mxu0 %v391
      %606 = vmatprep.subr.mxu0 %v394
      %607 = vmatpush1.msra.mxu0 %v393
      %608 = vmatprep.subr.mxu0 %v396
      %609 = vmatpush1.msra.mxu0 %v395
      %610 = vmatprep.subr.mxu0 %v398
      %611 = vmatpush1.msra.mxu0 %v397
      %612 = vmatprep.subr.mxu0 %v400
      %613 = vmatpush1.msra.mxu0 %v399
      %614 = vmatprep.subr.mxu0 %v402
      %615 = vmatpush1.msra.mxu0 %v401
      %616 = vmatprep.subr.mxu0 %v404
      %617 = vmatpush1.msra.mxu0 %v403
      %618 = vmatprep.subr.mxu0 %v406
      %619 = vmatpush1.msra.mxu0 %v405
      %620 = vmatprep.subr.mxu0 %v408
      %621 = vmatpush1.msra.mxu0 %v407
      %622 = vmatprep.subr.mxu0 %v410
      %623 = vmatpush1.msra.mxu0 %v409
      %624 = vmatprep.subr.mxu0 %v412
      %625 = vmatpush1.msra.mxu0 %v411
      %626 = vmatprep.subr.mxu0 %v414
      %627 = vmatpush1.msra.mxu0 %v413
      %628 = vmatprep.subr.mxu0 %v416
      %629 = vmatpush1.msra.mxu0 %v415
      %630 = vmatprep.subr.mxu0 %v418
      %631 = vmatpush1.msra.mxu0 %v417
      %632 = vmatprep.subr.mxu0 %v420
      %633 = vmatpush1.msra.mxu0 %v419
      %634 = vmatprep.subr.mxu0 %v422
      %635 = vmatpush1.msra.mxu0 %v421
      %636 = vmatprep.subr.mxu0 %v424
      %637 = vmatpush1.msra.mxu0 %v423
      %638 = vmatprep.subr.mxu0 %v426
      %639 = vmatpush1.msra.mxu0 %v425
      %640 = vmatprep.mubr.f32.mxu0 %v360
      %641 = vmatmul.mubr.f32.gmra.mrb[0].mxu0 %v359
      %v642 = vpop.f32.mrb[0].mxu0
      %v643 = vadd.f32 %v572, %v642
      %v644 = vpop.f32.mrb[0].mxu0
      %v645 = vadd.f32 %v574, %v644
      %646 = vdwg.mxu0
      %s647 = scalar_lea.vmem %s2, 1024
      %v648 = vld [vmem:[%s647] sm:$0xff]
      %v649 = vld [vmem:[%s647 + $0x8] sm:$0xff]
      %v650 = vld [vmem:[%s647 + $0x10] sm:$0xff]
      %v651 = vld [vmem:[%s647 + $0x18] sm:$0xff]
      %v652 = vld [vmem:[%s647 + $0x20] sm:$0xff]
      %v653 = vld [vmem:[%s647 + $0x28] sm:$0xff]
      %v654 = vld [vmem:[%s647 + $0x30] sm:$0xff]
      %v655 = vld [vmem:[%s647 + $0x38] sm:$0xff]
      %v656 = vld [vmem:[%s647 + $0x40] sm:$0xff]
      %v657 = vld [vmem:[%s647 + $0x48] sm:$0xff]
      %v658 = vld [vmem:[%s647 + $0x50] sm:$0xff]
      %v659 = vld [vmem:[%s647 + $0x58] sm:$0xff]
      %v660 = vld [vmem:[%s647 + $0x60] sm:$0xff]
      %v661 = vld [vmem:[%s647 + $0x68] sm:$0xff]
      %v662 = vld [vmem:[%s647 + $0x70] sm:$0xff]
      %v663 = vld [vmem:[%s647 + $0x78] sm:$0xff]
      %v664 = vld [vmem:[%s647 + $0x80] sm:$0xff]
      %v665 = vld [vmem:[%s647 + $0x88] sm:$0xff]
      %v666 = vld [vmem:[%s647 + $0x90] sm:$0xff]
      %v667 = vld [vmem:[%s647 + $0x98] sm:$0xff]
      %v668 = vld [vmem:[%s647 + $0xa0] sm:$0xff]
      %v669 = vld [vmem:[%s647 + $0xa8] sm:$0xff]
      %v670 = vld [vmem:[%s647 + $0xb0] sm:$0xff]
      %v671 = vld [vmem:[%s647 + $0xb8] sm:$0xff]
      %v672 = vld [vmem:[%s647 + $0xc0] sm:$0xff]
      %v673 = vld [vmem:[%s647 + $0xc8] sm:$0xff]
      %v674 = vld [vmem:[%s647 + $0xd0] sm:$0xff]
      %v675 = vld [vmem:[%s647 + $0xd8] sm:$0xff]
      %v676 = vld [vmem:[%s647 + $0xe0] sm:$0xff]
      %v677 = vld [vmem:[%s647 + $0xe8] sm:$0xff]
      %v678 = vld [vmem:[%s647 + $0xf0] sm:$0xff]
      %v679 = vld [vmem:[%s647 + $0xf8] sm:$0xff]
      %v680 = vld [vmem:[%s647 + $0x100] sm:$0xff]
      %v681 = vld [vmem:[%s647 + $0x108] sm:$0xff]
      %v682 = vld [vmem:[%s647 + $0x110] sm:$0xff]
      %v683 = vld [vmem:[%s647 + $0x118] sm:$0xff]
      %v684 = vld [vmem:[%s647 + $0x120] sm:$0xff]
      %v685 = vld [vmem:[%s647 + $0x128] sm:$0xff]
      %v686 = vld [vmem:[%s647 + $0x130] sm:$0xff]
      %v687 = vld [vmem:[%s647 + $0x138] sm:$0xff]
      %v688 = vld [vmem:[%s647 + $0x140] sm:$0xff]
      %v689 = vld [vmem:[%s647 + $0x148] sm:$0xff]
      %v690 = vld [vmem:[%s647 + $0x150] sm:$0xff]
      %v691 = vld [vmem:[%s647 + $0x158] sm:$0xff]
      %v692 = vld [vmem:[%s647 + $0x160] sm:$0xff]
      %v693 = vld [vmem:[%s647 + $0x168] sm:$0xff]
      %v694 = vld [vmem:[%s647 + $0x170] sm:$0xff]
      %v695 = vld [vmem:[%s647 + $0x178] sm:$0xff]
      %v696 = vld [vmem:[%s647 + $0x180] sm:$0xff]
      %v697 = vld [vmem:[%s647 + $0x188] sm:$0xff]
      %v698 = vld [vmem:[%s647 + $0x190] sm:$0xff]
      %v699 = vld [vmem:[%s647 + $0x198] sm:$0xff]
      %v700 = vld [vmem:[%s647 + $0x1a0] sm:$0xff]
      %v701 = vld [vmem:[%s647 + $0x1a8] sm:$0xff]
      %v702 = vld [vmem:[%s647 + $0x1b0] sm:$0xff]
      %v703 = vld [vmem:[%s647 + $0x1b8] sm:$0xff]
      %v704 = vld [vmem:[%s647 + $0x1c0] sm:$0xff]
      %v705 = vld [vmem:[%s647 + $0x1c8] sm:$0xff]
      %v706 = vld [vmem:[%s647 + $0x1d0] sm:$0xff]
      %v707 = vld [vmem:[%s647 + $0x1d8] sm:$0xff]
      %v708 = vld [vmem:[%s647 + $0x1e0] sm:$0xff]
      %v709 = vld [vmem:[%s647 + $0x1e8] sm:$0xff]
      %v710 = vld [vmem:[%s647 + $0x1f0] sm:$0xff]
      %v711 = vld [vmem:[%s647 + $0x1f8] sm:$0xff]
      %vm712 = vcmask 1045504
      %v713 = vrot.slane %v359, 2
      %v714 = vrot.slane %v361, 2
      %v715 = vsel %vm712, %v713, %v714
      %v716 = vrot.slane %v360, 2
      %v717 = vrot.slane %v362, 2
      %v718 = vsel %vm712, %v716, %v717
      %721 = vmatprep.subr.mxu0 %v649
      %722 = vmatpush1.msra.mxu0 %v648
      %723 = vmatprep.subr.mxu0 %v651
      %724 = vmatpush1.msra.mxu0 %v650
      %725 = vmatprep.subr.mxu0 %v653
      %726 = vmatpush1.msra.mxu0 %v652
      %727 = vmatprep.subr.mxu0 %v655
      %728 = vmatpush1.msra.mxu0 %v654
      %729 = vmatprep.subr.mxu0 %v657
      %730 = vmatpush1.msra.mxu0 %v656
      %731 = vmatprep.subr.mxu0 %v659
      %732 = vmatpush1.msra.mxu0 %v658
      %733 = vmatprep.subr.mxu0 %v661
      %734 = vmatpush1.msra.mxu0 %v660
      %735 = vmatprep.subr.mxu0 %v663
      %736 = vmatpush1.msra.mxu0 %v662
      %737 = vmatprep.subr.mxu0 %v665
      %738 = vmatpush1.msra.mxu0 %v664
      %739 = vmatprep.subr.mxu0 %v667
      %740 = vmatpush1.msra.mxu0 %v666
      %741 = vmatprep.subr.mxu0 %v669
      %742 = vmatpush1.msra.mxu0 %v668
      %743 = vmatprep.subr.mxu0 %v671
      %744 = vmatpush1.msra.mxu0 %v670
      %745 = vmatprep.subr.mxu0 %v673
      %746 = vmatpush1.msra.mxu0 %v672
      %747 = vmatprep.subr.mxu0 %v675
      %748 = vmatpush1.msra.mxu0 %v674
      %749 = vmatprep.subr.mxu0 %v677
      %750 = vmatpush1.msra.mxu0 %v676
      %751 = vmatprep.subr.mxu0 %v679
      %752 = vmatpush1.msra.mxu0 %v678
      %753 = vmatprep.subr.mxu0 %v681
      %754 = vmatpush1.msra.mxu0 %v680
      %755 = vmatprep.subr.mxu0 %v683
      %756 = vmatpush1.msra.mxu0 %v682
      %757 = vmatprep.subr.mxu0 %v685
      %758 = vmatpush1.msra.mxu0 %v684
      %759 = vmatprep.subr.mxu0 %v687
      %760 = vmatpush1.msra.mxu0 %v686
      %761 = vmatprep.subr.mxu0 %v689
      %762 = vmatpush1.msra.mxu0 %v688
      %763 = vmatprep.subr.mxu0 %v691
      %764 = vmatpush1.msra.mxu0 %v690
      %765 = vmatprep.subr.mxu0 %v693
      %766 = vmatpush1.msra.mxu0 %v692
      %767 = vmatprep.subr.mxu0 %v695
      %768 = vmatpush1.msra.mxu0 %v694
      %769 = vmatprep.subr.mxu0 %v697
      %770 = vmatpush1.msra.mxu0 %v696
      %771 = vmatprep.subr.mxu0 %v699
      %772 = vmatpush1.msra.mxu0 %v698
      %773 = vmatprep.subr.mxu0 %v701
      %774 = vmatpush1.msra.mxu0 %v700
      %775 = vmatprep.subr.mxu0 %v703
      %776 = vmatpush1.msra.mxu0 %v702
      %777 = vmatprep.subr.mxu0 %v705
      %778 = vmatpush1.msra.mxu0 %v704
      %779 = vmatprep.subr.mxu0 %v707
      %780 = vmatpush1.msra.mxu0 %v706
      %781 = vmatprep.subr.mxu0 %v709
      %782 = vmatpush1.msra.mxu0 %v708
      %783 = vmatprep.subr.mxu0 %v711
      %784 = vmatpush1.msra.mxu0 %v710
      %785 = vmatprep.mubr.f32.mxu0 %v718
      %786 = vmatmul.mubr.f32.gmra.mrb[0].mxu0 %v715
      %v787 = vpop.f32.mrb[0].mxu0
      %v788 = vadd.f32 0.0, %v787
      %v789 = vpop.f32.mrb[0].mxu0
      %v790 = vadd.f32 0.0, %v789
      %791 = vdwg.mxu0
      %v792 = vadd.f32 %v643, %v788
      %v793 = vadd.f32 %v645, %v790
      %v794 = vld [vmem:[%s3] sm:$0x3]
      %v796 = vlaneseq
      %v797 = vshrl.u32 %v796, 7
      %v798 = vsub.s32 0, %v797
      %v799 = vrot.slane %v794, %v798
      %v800 = vlaneseq
      %v801 = vshrl.u32 %v800, 7
      %v802 = vsub.s32 1, %v801
      %v803 = vrot.slane %v794, %v802
      %v806 = vadd.f32 %v792, %v799
      %v807 = vadd.f32 %v793, %v803
      %808 = vst [vmem:[%s274] sm:$0xff] %v806
      %809 = vst [vmem:[%s274 + $0x8] sm:$0xff] %v807
      %v810 = vrot.slane %v806, 4
      %v811 = vadd.f32 %v806, %v810
      %v812 = vrot.slane %v811, 2
      %v813 = vadd.f32 %v811, %v812
      %v814 = vrot.slane %v813, 1
      %v815 = vadd.f32 %v813, %v814
      %v816 = vrot.slane %v807, 4
      %v817 = vadd.f32 %v807, %v816
      %v818 = vrot.slane %v817, 2
      %v819 = vadd.f32 %v817, %v818
      %v820 = vrot.slane %v819, 1
      %v821 = vadd.f32 %v819, %v820
      %v822 = vmul.f32 %v806, %v806
      %v823 = vmul.f32 %v807, %v807
      %v824 = vrot.slane %v822, 4
      %v825 = vadd.f32 %v822, %v824
      %v826 = vrot.slane %v825, 2
      %v827 = vadd.f32 %v825, %v826
      %v828 = vrot.slane %v827, 1
      %v829 = vadd.f32 %v827, %v828
      %v830 = vrot.slane %v823, 4
      %v831 = vadd.f32 %v823, %v830
      %v832 = vrot.slane %v831, 2
      %v833 = vadd.f32 %v831, %v832
      %v834 = vrot.slane %v833, 1
      %v835 = vadd.f32 %v833, %v834
      %vm836 = vcmask 1040384
      %v837 = vsel %vm836, %v815, %v829
      %v838 = vsel %vm836, %v821, %v835
      %v841 = vcombine.low %v837, %v838
      %v843 = vunpack.c.l.s4 1983009808
      %v844 = vunpack.c.0.s8 %v843
      %v845 = vlaneseq
      %v846 = vshrl.u32 %v845, 7
      %v847 = vsub.s32 %v844, %v846
      %v848 = vrot.slane %v841, %v847
      %850 = vst [vmem:[%s283] sm:$0xf] %v848
      %p851 = scmp.lt.s32.totalorder %s21, 1
      %s852 = scalar_select %p851, %s21, 1
      %p853 = scmp.lt.s32.totalorder %s22, 3
      %s854 = scalar_select %p853, %s22, 3
      %s855 = smul.addr %s854, 2
      %s856 = smul.addr %s852, 8
      %s857 = sadd.s32 %s855, %s856
      %s858 = smul.addr %s857, 8
      %s859 = scalar_lea.vmem %s4, %s858
      %p860 = scmp.lt.s32.totalorder %s21, 1
      %s861 = scalar_select %p860, %s21, 1
      %p862 = scmp.lt.s32.totalorder %s22, 3
      %s863 = scalar_select %p862, %s22, 3
      %s864 = smul.addr %s863, 2
      %s865 = smul.addr %s861, 8
      %s866 = sadd.s32 %s864, %s865
      %s867 = smul.addr %s866, 2
      %s868 = scalar_lea.vmem %s5, %s867
      // Predicated region
      $region37: #{upblock_forward.4} parent=35 // pred_check
        %p869 = pneg %p140
      $region38: #{upblock_forward.4} parent=35 // pred_check_branch
        %871 = sbr.rel (%p869) target = $region40
      $region39: #{upblock_forward.4} parent=35 // pred_region
        _
      $region40: #{upblock_forward.4} parent=35 // pred_fallthru
        _
      // Predicated region
      $region41: #{upblock_forward.4} parent=35 // pred_check
        %p872 = pneg %p168
      $region42: #{upblock_forward.4} parent=35 // pred_check_branch
        %874 = sbr.rel (%p872) target = $region44
      $region43: #{upblock_forward.4} parent=35 // pred_region
        _
      $region44: #{upblock_forward.4} parent=35 // pred_fallthru
        _
    $region36: #{upblock_forward.4} parent=5 // pred_fallthru
      _
    %p875 = scmp.le.s32.totalorder 2, %s12
    // Predicated region
    $region45: #{upblock_forward.4} parent=5 // pred_check
      %p876 = pneg %p875
    $region46: #{upblock_forward.4} parent=5 // pred_check_branch
      %878 = sbr.rel (%p876) target = $region48
    $region47: #{upblock_forward.4} parent=5 // pred_region
      %s879 = ssub.s32 %s12, 2
      // Predicated region
      $region49: #{upblock_forward.4} parent=47 // pred_check
        %p880 = pneg %p146
      $region50: #{upblock_forward.4} parent=47 // pred_check_branch
        %882 = sbr.rel (%p880) target = $region52
      $region51: #{upblock_forward.4} parent=47 // pred_region
        %p883 = scmp.lt.s32.totalorder %s23, 1
        %s884 = scalar_select %p883, %s23, 1
        %p885 = scmp.lt.s32.totalorder %s24, 3
        %s886 = scalar_select %p885, %s24, 3
        %s887 = smul.addr %s886, 2
        %s888 = smul.addr %s884, 8
        %s889 = sadd.s32 %s887, %s888
        %s890 = smul.addr %s889, 8
        %s891 = scalar_lea.vmem %s4, %s890
      $region52: #{upblock_forward.4} parent=47 // pred_fallthru
        _
      // Predicated region
      $region53: #{upblock_forward.4} parent=47 // pred_check
        %p892 = pneg %p174
      $region54: #{upblock_forward.4} parent=47 // pred_check_branch
        %894 = sbr.rel (%p892) target = $region56
      $region55: #{upblock_forward.4} parent=47 // pred_region
        %p895 = scmp.lt.s32.totalorder %s23, 1
        %s896 = scalar_select %p895, %s23, 1
        %p897 = scmp.lt.s32.totalorder %s24, 3
        %s898 = scalar_select %p897, %s24, 3
        %s899 = smul.addr %s898, 2
        %s900 = smul.addr %s896, 8
        %s901 = sadd.s32 %s899, %s900
        %s902 = smul.addr %s901, 2
        %s903 = scalar_lea.vmem %s5, %s902
      $region56: #{upblock_forward.4} parent=47 // pred_fallthru
        _
    $region48: #{upblock_forward.4} parent=5 // pred_fallthru
      _
  $region6: #{upblock_forward.4} parent=0 // loop_footer
    %s16 = sadd.s32 1, %s12
  $region7: #{upblock_forward.4} parent=0 // loop_footer_branch
    %11 = sbr.rel target = $region3
  $region8: #{upblock_forward.4} parent=0 // loop_exit
    _

// kernel: upblock_forward.5
$region0: #{upblock_forward.5}
  #allocation0 [shape = 'u32[]', space=smem, size = 0x4, offset = 0x4, fixed_abs, tag = 'smem constant byte address 0x4 - core index']
  #allocation1 [shape = 'u32[144,128]{1,0:T(1,128)}', space=vmem, size = 0x12000, scoped, tag = 'internal scratch']
  %s0 = inlined_call_operand.vmem [shape: f32[2,32,256], index: 0, kind: input, shape index: {}]
  %s1 = inlined_call_operand.vmem [shape: f32[2,32,256], index: 1, kind: input, shape index: {}]
  %s2 = inlined_call_operand.vmem [shape: f32[4,256], index: 2, kind: input, shape index: {}]
  %s3 = inlined_call_operand.vmem [shape: f32[2,32,256], index: 3, kind: output, shape index: {}]
  %s4 = sld [smem:[#allocation0]]
  $region45: #{upblock_forward.5} parent=0
    _
  %s6 = ssub.s32 1, %s4
  %s7 = scalar_select 0, %s6, %s4
  loop: start=0, step=1, limit=10
  $region2: #{upblock_forward.5} parent=0 // loop_pre_header
    _
  $region3: #{upblock_forward.5} parent=0 // loop_header
    %s9 = sphi 0, %s13
    %p10 = scmp.ge.s32.totalorder %s9, 10
    %s16 = sphi 0, %s28
    %s17 = sphi 0, %s24
    %s18 = sphi 0, %s16
    %s19 = sphi 0, %s17
    %s20 = sphi 0, %s18
    %s21 = sphi 0, %s19
    %s33 = sphi 0, %s35
    %s36 = sphi 0, %s33
    %s37 = sphi 0, %s36
    %s53 = sphi 0, %s37
    %s61 = sphi 0, %s63
    %s64 = sphi 0, %s61
    %s65 = sphi 0, %s64
    %s81 = sphi 0, %s65
    %s85 = sphi 0, %s85
    %s87 = sphi 0, %s85
    %s88 = sphi 0, %s87
    %s102 = sphi 0, %s88
    %s110 = sphi 0, %s112
    %s113 = sphi 0, %s110
    %s114 = sphi 0, %s113
    %s130 = sphi 0, %s114
  $region4: #{upblock_forward.5} parent=0 // loop_header_branch
    %12 = sbr.rel (%p10) target = $region8
  $region5: #{upblock_forward.5} parent=0 // loop_body
    %s14 = ssub.s32 %s9, 1
    %s15 = ssub.s32 %s9, 2
    %s22 = sadd.s32 1, %s17
    %p23 = scmp.ge.s32.totalorder %s22, 4
    %s24 = scalar_select %p23, 0, %s22
    %s25 = sadd.s32 1, %s16
    %s26 = scalar_select %p23, %s25, %s16
    %p27 = scmp.ge.s32.totalorder %s26, 2
    %s28 = scalar_select %p27, 0, %s26
    %s29 = ssub.s32 %s16, %s28
    %s30 = ssub.s32 %s17, %s24
    %s31 = sor.u32 %s29, %s30
    %p32 = scmp.eq.s32.totalorder %s31, 0
    %s34 = sadd.s32 %s33, 1
    %s35 = scalar_select %p32, %s33, %s34
    %p38 = pneg %p32
    %p39 = scmp.eq.s32.totalorder %s9, 7
    %p40 = por %p38, %p39
    %p41 = scmp.ne.s32.totalorder %s33, %s36
    %p42 = scmp.eq.s32.totalorder %s9, 0
    %p43 = por %p41, %p42
    %p44 = scmp.ne.s32.totalorder %s33, %s36
    %p45 = scmp.eq.s32.totalorder %s14, 7
    %p46 = por %p44, %p45
    %p47 = scmp.ne.s32.totalorder %s36, %s37
    %p48 = scmp.eq.s32.totalorder %s14, 0
    %p49 = por %p47, %p48
    %p50 = scmp.ne.s32.totalorder %s36, %s37
    %p51 = scmp.eq.s32.totalorder %s15, 7
    %p52 = por %p50, %p51
    %p54 = scmp.ne.s32.totalorder %s37, %s53
    %p55 = scmp.eq.s32.totalorder %s15, 0
    %p56 = por %p54, %p55
    %s57 = ssub.s32 %s16, %s28
    %s58 = ssub.s32 %s17, %s24
    %s59 = sor.u32 %s57, %s58
    %p60 = scmp.eq.s32.totalorder %s59, 0
    %s62 = sadd.s32 %s61, 1
    %s63 = scalar_select %p60, %s61, %s62
    %p66 = pneg %p60
    %p67 = scmp.eq.s32.totalorder %s9, 7
    %p68 = por %p66, %p67
    %p69 = scmp.ne.s32.totalorder %s61, %s64
    %p70 = scmp.eq.s32.totalorder %s9, 0
    %p71 = por %p69, %p70
    %p72 = scmp.ne.s32.totalorder %s61, %s64
    %p73 = scmp.eq.s32.totalorder %s14, 7
    %p74 = por %p72, %p73
    %p75 = scmp.ne.s32.totalorder %s64, %s65
    %p76 = scmp.eq.s32.totalorder %s14, 0
    %p77 = por %p75, %p76
    %p78 = scmp.ne.s32.totalorder %s64, %s65
    %p79 = scmp.eq.s32.totalorder %s15, 7
    %p80 = por %p78, %p79
    %p82 = scmp.ne.s32.totalorder %s65, %s81
    %p83 = scmp.eq.s32.totalorder %s15, 0
    %p84 = por %p82, %p83
    %s86 = sadd.s32 %s85, 1
    %p89 = scmp.eq.s32.totalorder %s9, 7
    %p90 = scmp.ne.s32.totalorder %s85, %s87
    %p91 = scmp.eq.s32.totalorder %s9, 0
    %p92 = por %p90, %p91
    %p93 = scmp.ne.s32.totalorder %s85, %s87
    %p94 = scmp.eq.s32.totalorder %s14, 7
    %p95 = por %p93, %p94
    %p96 = scmp.ne.s32.totalorder %s87, %s88
    %p97 = scmp.eq.s32.totalorder %s14, 0
    %p98 = por %p96, %p97
    %p99 = scmp.ne.s32.totalorder %s87, %s88
    %p100 = scmp.eq.s32.totalorder %s15, 7
    %p101 = por %p99, %p100
    %p103 = scmp.ne.s32.totalorder %s88, %s102
    %p104 = scmp.eq.s32.totalorder %s15, 0
    %p105 = por %p103, %p104
    %s106 = ssub.s32 %s16, %s28
    %s107 = ssub.s32 %s17, %s24
    %s108 = sor.u32 %s106, %s107
    %p109 = scmp.eq.s32.totalorder %s108, 0
    %s111 = sadd.s32 %s110, 1
    %s112 = scalar_select %p109, %s110, %s111
    %p115 = pneg %p109
    %p116 = scmp.eq.s32.totalorder %s9, 7
    %p117 = por %p115, %p116
    %p118 = scmp.ne.s32.totalorder %s110, %s113
    %p119 = scmp.eq.s32.totalorder %s9, 0
    %p120 = por %p118, %p119
    %p121 = scmp.ne.s32.totalorder %s110, %s113
    %p122 = scmp.eq.s32.totalorder %s14, 7
    %p123 = por %p121, %p122
    %p124 = scmp.ne.s32.totalorder %s113, %s114
    %p125 = scmp.eq.s32.totalorder %s14, 0
    %p126 = por %p124, %p125
    %p127 = scmp.ne.s32.totalorder %s113, %s114
    %p128 = scmp.eq.s32.totalorder %s15, 7
    %p129 = por %p127, %p128
    %p131 = scmp.ne.s32.totalorder %s114, %s130
    %p132 = scmp.eq.s32.totalorder %s15, 0
    %p133 = por %p131, %p132
    %p134 = scmp.le.s32.totalorder 1, %s9
    %p135 = scmp.lt.s32.totalorder %s9, 9
    %p136 = pnand %p134, %p135
    %p137 = pneg %p136
    // Predicated region
    $region9: #{upblock_forward.5} parent=5 // pred_check
      _
    $region10: #{upblock_forward.5} parent=5 // pred_check_branch
      %139 = sbr.rel (%p136) target = $region12
    $region11: #{upblock_forward.5} parent=5 // pred_region
      %s140 = ssub.s32 %s9, 1
      // Predicated region
      $region13: #{upblock_forward.5} parent=11 // pred_check
        %p141 = pneg %p98
      $region14: #{upblock_forward.5} parent=11 // pred_check_branch
        %143 = sbr.rel (%p141) target = $region16
      $region15: #{upblock_forward.5} parent=11 // pred_region
        _
      $region16: #{upblock_forward.5} parent=11 // pred_fallthru
        _
    $region12: #{upblock_forward.5} parent=5 // pred_fallthru
      _
    %p144 = scmp.lt.s32.totalorder %s9, 8
    // Predicated region
    $region17: #{upblock_forward.5} parent=5 // pred_check
      %p145 = pneg %p144
    $region18: #{upblock_forward.5} parent=5 // pred_check_branch
      %147 = sbr.rel (%p145) target = $region20
    $region19: #{upblock_forward.5} parent=5 // pred_region
      // Predicated region
      $region21: #{upblock_forward.5} parent=19 // pred_check
        %p148 = pneg %p43
      $region22: #{upblock_forward.5} parent=19 // pred_check_branch
        %150 = sbr.rel (%p148) target = $region24
      $region23: #{upblock_forward.5} parent=19 // pred_region
        %p151 = scmp.lt.s32.totalorder %s16, 1
        %s152 = scalar_select %p151, %s16, 1
        %p153 = scmp.lt.s32.totalorder %s17, 3
        %s154 = scalar_select %p153, %s17, 3
        %s155 = smul.addr %s154, 2
        %s156 = smul.addr %s152, 8
        %s157 = sadd.s32 %s155, %s156
        %s158 = smul.addr %s157, 8
        %s159 = scalar_lea.vmem %s0, %s158
      $region24: #{upblock_forward.5} parent=19 // pred_fallthru
        _
      // Predicated region
      $region25: #{upblock_forward.5} parent=19 // pred_check
        %p160 = pneg %p71
      $region26: #{upblock_forward.5} parent=19 // pred_check_branch
        %162 = sbr.rel (%p160) target = $region28
      $region27: #{upblock_forward.5} parent=19 // pred_region
        %p163 = scmp.lt.s32.totalorder %s16, 1
        %s164 = scalar_select %p163, %s16, 1
        %p165 = scmp.lt.s32.totalorder %s17, 3
        %s166 = scalar_select %p165, %s17, 3
        %s167 = smul.addr %s166, 2
        %s168 = smul.addr %s164, 8
        %s169 = sadd.s32 %s167, %s168
        %s170 = smul.addr %s169, 8
        %s171 = scalar_lea.vmem %s1, %s170
      $region28: #{upblock_forward.5} parent=19 // pred_fallthru
        _
    $region20: #{upblock_forward.5} parent=5 // pred_fallthru
      _
    %p172 = scmp.le.s32.totalorder 1, %s9
    %p173 = scmp.lt.s32.totalorder %s9, 9
    %p174 = pnand %p172, %p173
    %p175 = pneg %p174
    // Predicated region
    $region29: #{upblock_forward.5} parent=5 // pred_check
      _
    $region30: #{upblock_forward.5} parent=5 // pred_check_branch
      %177 = sbr.rel (%p174) target = $region32
    $region31: #{upblock_forward.5} parent=5 // pred_region
      %s178 = ssub.s32 %s9, 1
      %p179 = scmp.lt.s32.totalorder %s18, 1
      %s180 = scalar_select %p179, %s18, 1
      %p181 = scmp.lt.s32.totalorder %s19, 3
      %s182 = scalar_select %p181, %s19, 3
      %s183 = smul.addr %s182, 2
      %s184 = smul.addr %s180, 8
      %s185 = sadd.s32 %s183, %s184
      %s186 = smul.addr %s185, 8
      %s187 = scalar_lea.vmem %s0, %s186
      %p188 = pneg %p49
      %p189 = pneg %p46
      %p190 = scmp.lt.s32.totalorder %s18, 1
      %s191 = scalar_select %p190, %s18, 1
      %p192 = scmp.lt.s32.totalorder %s19, 3
      %s193 = scalar_select %p192, %s19, 3
      %s194 = smul.addr %s193, 2
      %s195 = smul.addr %s191, 8
      %s196 = sadd.s32 %s194, %s195
      %s197 = smul.addr %s196, 8
      %s198 = scalar_lea.vmem %s1, %s197
      %p199 = pneg %p77
      %p200 = pneg %p74
      %p201 = pneg %p98
      %p202 = pneg %p95
      %p203 = pneg %p126
      %p204 = pneg %p123
      %p205 = scmp.lt.s32.totalorder %s18, 1
      %s206 = scalar_select %p205, %s18, 1
      %p207 = scmp.lt.s32.totalorder %s19, 3
      %s208 = scalar_select %p207, %s19, 3
      %s209 = smul.addr %s208, 2
      %s210 = smul.addr %s206, 8
      %s211 = sadd.s32 %s209, %s210
      %s212 = smul.addr %s211, 8
      %s213 = scalar_lea.vmem %s3, %s212
      %p214 = scmp.lt.s32.totalorder %s18, 1
      %s215 = scalar_select %p214, %s18, 1
      %p216 = scmp.lt.s32.totalorder %s19, 3
      %s217 = scalar_select %p216, %s19, 3
      %s218 = smul.addr %s217, 2
      %s219 = smul.addr %s215, 8
      %s220 = sadd.s32 %s218, %s219
      %s221 = smul.addr %s220, 8
      %s222 = scalar_lea.vmem %s0, %s221
      %p223 = scmp.lt.s32.totalorder %s18, 1
      %s224 = scalar_select %p223, %s18, 1
      %p225 = scmp.lt.s32.totalorder %s19, 3
      %s226 = scalar_select %p225, %s19, 3
      %s227 = smul.addr %s226, 2
      %s228 = smul.addr %s224, 8
      %s229 = sadd.s32 %s227, %s228
      %s230 = smul.addr %s229, 8
      %s231 = scalar_lea.vmem %s1, %s230
      %p232 = scmp.lt.s32.totalorder %s18, 1
      %s233 = scalar_select %p232, %s18, 1
      %p234 = scmp.lt.s32.totalorder %s19, 3
      %s235 = scalar_select %p234, %s19, 3
      %s236 = smul.addr %s235, 2
      %s237 = smul.addr %s233, 8
      %s238 = sadd.s32 %s236, %s237
      %s239 = smul.addr %s238, 8
      %s240 = scalar_lea.vmem %s3, %s239
      %v241 = vld [vmem:[%s2] sm:$0xff]
      %v242 = vld [vmem:[%s222] sm:$0xff]
      %v243 = vld [vmem:[%s222 + $0x8] sm:$0xff]
      %v245 = vlaneseq
      %v246 = vshrl.u32 %v245, 7
      %v247 = vsub.s32 0, %v246
      %v248 = vrot.slane %v241, %v247
      %v249 = vlaneseq
      %v250 = vshrl.u32 %v249, 7
      %v251 = vsub.s32 4, %v250
      %v252 = vrot.slane %v241, %v251
      %v255 = vlaneseq
      %v256 = vshrl.u32 %v255, 7
      %v257 = vsub.s32 0, %v256
      %v258 = vrot.slane %v248, %v257
      %v259 = vlaneseq
      %v260 = vshrl.u32 %v259, 7
      %v261 = vsub.s32 0, %v260
      %v262 = vrot.slane %v252, %v261
      %v263 = vmul.f32 %v242, %v258
      %v264 = vmul.f32 %v243, %v262
      %v265 = vlaneseq
      %v266 = vshrl.u32 %v265, 7
      %v267 = vsub.s32 1, %v266
      %v268 = vrot.slane %v241, %v267
      %v269 = vlaneseq
      %v270 = vshrl.u32 %v269, 7
      %v271 = vsub.s32 5, %v270
      %v272 = vrot.slane %v241, %v271
      %v275 = vlaneseq
      %v276 = vshrl.u32 %v275, 7
      %v277 = vsub.s32 1, %v276
      %v278 = vrot.slane %v268, %v277
      %v279 = vlaneseq
      %v280 = vshrl.u32 %v279, 7
      %v281 = vsub.s32 1, %v280
      %v282 = vrot.slane %v272, %v281
      %v283 = vadd.f32 %v263, %v278
      %v284 = vadd.f32 %v264, %v282
      %v285 = vld [vmem:[%s231] sm:$0xff]
      %v286 = vld [vmem:[%s231 + $0x8] sm:$0xff]
      %v287 = vlaneseq
      %v288 = vshrl.u32 %v287, 7
      %v289 = vsub.s32 2, %v288
      %v290 = vrot.slane %v241, %v289
      %v291 = vlaneseq
      %v292 = vshrl.u32 %v291, 7
      %v293 = vsub.s32 6, %v292
      %v294 = vrot.slane %v241, %v293
      %v297 = vlaneseq
      %v298 = vshrl.u32 %v297, 7
      %v299 = vsub.s32 2, %v298
      %v300 = vrot.slane %v290, %v299
      %v301 = vlaneseq
      %v302 = vshrl.u32 %v301, 7
      %v303 = vsub.s32 2, %v302
      %v304 = vrot.slane %v294, %v303
      %v305 = vmul.f32 %v285, %v300
      %v306 = vmul.f32 %v286, %v304
      %v307 = vadd.f32 %v283, %v305
      %v308 = vadd.f32 %v284, %v306
      %v309 = vlaneseq
      %v310 = vshrl.u32 %v309, 7
      %v311 = vsub.s32 3, %v310
      %v312 = vrot.slane %v241, %v311
      %v313 = vlaneseq
      %v314 = vshrl.u32 %v313, 7
      %v315 = vsub.s32 7, %v314
      %v316 = vrot.slane %v241, %v315
      %v319 = vlaneseq
      %v320 = vshrl.u32 %v319, 7
      %v321 = vsub.s32 3, %v320
      %v322 = vrot.slane %v312, %v321
      %v323 = vlaneseq
      %v324 = vshrl.u32 %v323, 7
      %v325 = vsub.s32 3, %v324
      %v326 = vrot.slane %v316, %v325
      %v327 = vadd.f32 %v307, %v322
      %v328 = vadd.f32 %v308, %v326
      %v329 = vmax.f32 %v327, 0.0
      %v330 = vmax.f32 %v328, 0.0
      %331 = vst [vmem:[%s240] sm:$0xff] %v329
      %332 = vst [vmem:[%s240 + $0x8] sm:$0xff] %v330
      %p333 = scmp.lt.s32.totalorder %s18, 1
      %s334 = scalar_select %p333, %s18, 1
      %p335 = scmp.lt.s32.totalorder %s19, 3
      %s336 = scalar_select %p335, %s19, 3
      %s337 = smul.addr %s336, 2
      %s338 = smul.addr %s334, 8
      %s339 = sadd.s32 %s337, %s338
      %s340 = smul.addr %s339, 8
      %s341 = scalar_lea.vmem %s3, %s340
      // Predicated region
      $region33: #{upblock_forward.5} parent=31 // pred_check
        %p342 = pneg %p123
      $region34: #{upblock_forward.5} parent=31 // pred_check_branch
        %344 = sbr.rel (%p342) target = $region36
      $region35: #{upblock_forward.5} parent=31 // pred_region
        _
      $region36: #{upblock_forward.5} parent=31 // pred_fallthru
        _
    $region32: #{upblock_forward.5} parent=5 // pred_fallthru
      _
    %p345 = scmp.le.s32.totalorder 2, %s9
    // Predicated region
    $region37: #{upblock_forward.5} parent=5 // pred_check
      %p346 = pneg %p345
    $region38: #{upblock_forward.5} parent=5 // pred_check_branch
      %348 = sbr.rel (%p346) target = $region40
    $region39: #{upblock_forward.5} parent=5 // pred_region
      %s349 = ssub.s32 %s9, 2
      // Predicated region
      $region41: #{upblock_forward.5} parent=39 // pred_check
        %p350 = pneg %p129
      $region42: #{upblock_forward.5} parent=39 // pred_check_branch
        %352 = sbr.rel (%p350) target = $region44
      $region43: #{upblock_forward.5} parent=39 // pred_region
        %p353 = scmp.lt.s32.totalorder %s20, 1
        %s354 = scalar_select %p353, %s20, 1
        %p355 = scmp.lt.s32.totalorder %s21, 3
        %s356 = scalar_select %p355, %s21, 3
        %s357 = smul.addr %s356, 2
        %s358 = smul.addr %s354, 8
        %s359 = sadd.s32 %s357, %s358
        %s360 = smul.addr %s359, 8
        %s361 = scalar_lea.vmem %s3, %s360
      $region44: #{upblock_forward.5} parent=39 // pred_fallthru
        _
    $region40: #{upblock_forward.5} parent=5 // pred_fallthru
      _
  $region6: #{upblock_forward.5} parent=0 // loop_footer
    %s13 = sadd.s32 1, %s9
  $region7: #{upblock_forward.5} parent=0 // loop_footer_branch
    %8 = sbr.rel target = $region3
  $region8: #{upblock_forward.5} parent=0 // loop_exit
    _

</llo_original>
